<compile_context>
chip_gen: v6e
topology: v6e:2x2x1
jax: 0.10.0
libtpu: 0.0.40
codegen_flags: <defaults>
</compile_context>

<pallas_src>
import math
import numpy as np

import jax
import jax.numpy as jnp
from jax.experimental import pallas as pl
from jax.experimental.pallas import tpu as pltpu

# ----------------------------- configuration -------------------------------
SEQ_LEN = 15          # opt.seq_len
PRED_LEN = 4          # opt.pred_len
ENC_IN = 4            # opt.enc_in
MARK_IN = 4           # TimeFeatureEmbedding d_inp
D_MODEL = 32          # opt.d_model
D_FF = 64             # opt.d_inner_hid
N_HEADS = 4           # opt.n_heads
D_K = 8               # opt.d_k
D_V = 8               # opt.d_v
E_LAYERS = 2          # opt.e_layers
D_BOTTLENECK = 16     # opt.d_bottleneck
WINDOW = [2, 2, 2]    # opt.window_size
INNER = 3             # opt.inner_size

L_ENC = SEQ_LEN + 1                 # 16 (predict token appended for the FC decoder)
PRED_OUT = PRED_LEN * ENC_IN        # 16
EMB_IN = 3 * ENC_IN + MARK_IN       # 16 (three circular-conv taps + time marks)

# ---------------- packed weight buffer layout (rows x 128 lanes, f32) --------
R_MHA = 0                                   # E_LAYERS x (32,128): [wq|wk|wv|fcw]
R_FFN1 = R_MHA + E_LAYERS * D_MODEL         # 64 : (32,128) = [w1_l0 | w1_l1]
R_FFN2T = R_FFN1 + D_MODEL                  # 96 : (32,128) = [w2_l0^T | w2_l1^T]
R_PREDT = R_FFN2T + D_MODEL                 # 128: (16,128) = pred_w^T
R_EMB = R_PREDT + PRED_OUT                  # 144: (16, 96) = [W_emb | add_emb | up_w]
R_CSCM = R_EMB + L_ENC                      # 160: (32, 64) = [down_w | convW0..2]
R_MASK = R_CSCM + D_MODEL                   # 192: (30, 30) additive attention mask
R_BIAS = 224                                # one bias vector per row
B_DOWN, B_CONV0, B_UP, B_CLN_G, B_CLN_B, B_LAYER0 = 0, 1, 4, 5, 6, 7
TOTAL_R = 248                               # padded to a multiple of 8 rows


# ------------------------- Pyraformer mask helpers -------------------------
def get_mask(input_size, window_size, inner_size):
    all_size = [input_size]
    for w in window_size:
        all_size.append(all_size[-1] // w)
    seq_length = sum(all_size)
    mask = np.zeros((seq_length, seq_length), dtype=np.float32)

    inner_window = inner_size // 2
    for layer_idx in range(len(all_size)):
        start = sum(all_size[:layer_idx])
        for i in range(start, start + all_size[layer_idx]):
            left = max(i - inner_window, start)
            right = min(i + inner_window + 1, start + all_size[layer_idx])
            mask[i, left:right] = 1

    for layer_idx in range(1, len(all_size)):
        start = sum(all_size[:layer_idx])
        for i in range(start, start + all_size[layer_idx]):
            left = (start - all_size[layer_idx - 1]) + (i - start) * window_size[layer_idx - 1]
            if i == start + all_size[layer_idx] - 1:
                right = start
            else:
                right = (start - all_size[layer_idx - 1]) + (i - start + 1) * window_size[layer_idx - 1]
            mask[i, left:right] = 1
            mask[left:right, i] = 1

    mask = (1 - mask)            # 1.0 == masked (like the torch bool mask)
    return mask.astype(np.float32), all_size


def refer_points(all_sizes, window_size):
    input_size = all_sizes[0]
    indexes = np.zeros((input_size, len(all_sizes)), dtype=np.int32)
    for i in range(input_size):
        indexes[i, 0] = i
        former = i
        for j in range(1, len(all_sizes)):
            start = sum(all_sizes[:j])
            inner_layer_idx = former - (start - all_sizes[j - 1])
            former = start + min(inner_layer_idx // window_size[j - 1], all_sizes[j] - 1)
            indexes[i, j] = former
    return indexes


def positional_embedding(L, d_model):
    pe = np.zeros((L, d_model), dtype=np.float32)
    position = np.arange(0, L, dtype=np.float32)[:, None]
    div_term = np.exp(np.arange(0, d_model, 2, dtype=np.float32) * -(math.log(10000.0) / d_model))
    pe[:, 0::2] = np.sin(position * div_term)
    pe[:, 1::2] = np.cos(position * div_term)
    return pe


# ------------------------------ kernel helpers ------------------------------
def _ln(x, g, b, eps):
    m = jnp.mean(x, axis=-1, keepdims=True)
    v = jnp.mean((x - m) ** 2, axis=-1, keepdims=True)
    return (x - m) * jax.lax.rsqrt(v + eps) * g + b


def _gelu(x):
    # TODO(synk): PyTorch F.gelu is erf-exact; tanh approximation used (erf lowering not guaranteed in Mosaic).
    return 0.5 * x * (1.0 + jnp.tanh(0.7978845608028654 * (x + 0.044715 * x * x * x)))


def _single_tensorcore_chip():
    """True on v5e / v6e (1 TensorCore per chip) -> fold the batch into one grid step."""
    try:
        kind = jax.devices()[0].device_kind
    except Exception:
        return False
    k = kind.lower().replace(" ", "").replace("-", "").replace("_", "")
    return any(t in k for t in ("v5lite", "v5e", "v6lite", "v6e"))


# ------------------------- single fused forward kernel ----------------------
def make_fused_kernel(nb, lens, window, gather_rows):
    """nb = batch elements handled per grid step (unrolled Python loop)."""
    n_levels = len(window)
    f32 = jnp.float32
    inv_temp = 1.0 / math.sqrt(D_K)
    n_total = sum(lens)
    n_conv = n_total - L_ENC
    bases = [0]
    for v in lens:
        bases.append(bases[-1] + v)          # [0, 16, 24, 28, 30]

    def kernel(xm_ref, wpk_ref, out_ref, csc_sc, seq_sc):
        def bias(i, w):
            return wpk_ref[R_BIAS + i:R_BIAS + i + 1, 0:w]

        # ------------- hoisted weight loads (shared across batch elements) ----------
        w_emb = wpk_ref[R_EMB:R_EMB + L_ENC, 0:D_MODEL]                     # (16,32)
        add_emb = wpk_ref[R_EMB:R_EMB + L_ENC, D_MODEL:2 * D_MODEL]         # (16,32) pos+biases
        up_w = wpk_ref[R_EMB:R_EMB + L_ENC, 2 * D_MODEL:3 * D_MODEL]        # (16,32)
        down_w = wpk_ref[R_CSCM:R_CSCM + D_MODEL, 0:D_BOTTLENECK]           # (32,16)
        conv_w = [wpk_ref[R_CSCM:R_CSCM + D_MODEL,
                          D_BOTTLENECK * (li + 1):D_BOTTLENECK * (li + 2)]
                  for li in range(n_levels)]                                # (32,16) each (taps stacked)
        conv_b = [bias(B_CONV0 + li, D_BOTTLENECK) for li in range(n_levels)]
        down_b = bias(B_DOWN, D_BOTTLENECK)
        up_b = bias(B_UP, D_MODEL)
        cln_g = bias(B_CLN_G, D_MODEL)
        cln_b = bias(B_CLN_B, D_MODEL)
        madd = wpk_ref[R_MASK:R_MASK + n_total, 0:n_total]                  # (30,30) 0 / -1e9
        predT = wpk_ref[R_PREDT:R_PREDT + PRED_OUT, :]                      # (16,128) = pred_w^T

        lay = []
        for l in range(E_LAYERS):
            r = R_BIAS + B_LAYER0 + 7 * l
            lay.append(dict(
                blk=wpk_ref[R_MHA + l * D_MODEL:R_MHA + (l + 1) * D_MODEL, :],   # (32,128)
                w1=wpk_ref[R_FFN1:R_FFN1 + D_MODEL, l * D_FF:(l + 1) * D_FF],    # (32,64)
                w2T=wpk_ref[R_FFN2T:R_FFN2T + D_MODEL, l * D_FF:(l + 1) * D_FF], # (32,64)
                fcb=wpk_ref[r + 0:r + 1, 0:D_MODEL],
                ln1g=wpk_ref[r + 1:r + 2, 0:D_MODEL],
                ln1b=wpk_ref[r + 2:r + 3, 0:D_MODEL],
                b1=wpk_ref[r + 3:r + 4, 0:D_FF],
                b2=wpk_ref[r + 4:r + 5, 0:D_MODEL],
                ln2g=wpk_ref[r + 5:r + 6, 0:D_MODEL],
                ln2b=wpk_ref[r + 6:r + 7, 0:D_MODEL]))

        for b in range(nb):
            # -------- DataEmbedding: one (16,16)x(16,32) matmul (taps + marks fused) -----
            xm = xm_ref[b]                                                   # (16,16)
            emb = jnp.dot(xm, w_emb, preferred_element_type=f32) + add_emb   # (16,32)

            # -------- Bottleneck_Construct (CSCM) ---------------------------------------
            c = jnp.dot(emb, down_w, preferred_element_type=f32) + down_b    # (16,16)
            csc_sc[pl.ds(0, L_ENC), :] = c
            for li in range(n_levels):
                Lo, w = lens[li + 1], window[li]
                base_in, base_out = bases[li], bases[li + 1]
                acc = conv_b[li]
                for k in range(w):                                           # Conv1d(kernel=w, stride=w)
                    rows = csc_sc[pl.ds(base_in + k, Lo, stride=w), :]
                    acc = acc + jnp.dot(rows,
                                        conv_w[li][k * D_BOTTLENECK:(k + 1) * D_BOTTLENECK, :],
                                        preferred_element_type=f32)
                # eval-mode BatchNorm1d folded into conv weights/bias; ELU:
                y = jnp.where(acc > 0, acc, jnp.exp(jnp.minimum(acc, 0.0)) - 1.0)
                csc_sc[pl.ds(base_out, Lo), :] = y

            conv_all = csc_sc[pl.ds(bases[1], n_conv), :]                    # (14,16)
            up = jnp.dot(conv_all, up_w, preferred_element_type=f32) + up_b  # (14,32)
            seq_sc[pl.ds(0, L_ENC), :] = _ln(emb, cln_g, cln_b, 1e-5)
            seq_sc[pl.ds(L_ENC, n_conv), :] = _ln(up, cln_g, cln_b, 1e-5)
            seq = seq_sc[...]                                                # (30,32)

            # -------- Encoder layers (post-norm MHA + FFN) -------------------------------
            for l in range(E_LAYERS):
                ly = lay[l]
                x = seq
                # fused Q|K|V (fc columns computed for free, unused)
                full = jnp.dot(x, ly['blk'], preferred_element_type=f32)     # (30,128)

                s_list = []
                for h in range(N_HEADS):
                    qh = full[:, h * D_K:(h + 1) * D_K] * inv_temp
                    kh = full[:, D_MODEL + h * D_K:D_MODEL + (h + 1) * D_K]
                    s_list.append(jax.lax.dot_general(
                        qh, kh, (((1,), (1,)), ((), ())),
                        preferred_element_type=f32) + madd)                  # (30,30)
                # batched softmax across heads
                s3 = jnp.stack(s_list, axis=0)                               # (4,30,30)
                s3 = s3 - jnp.max(s3, axis=-1, keepdims=True)
                p3 = jnp.exp(s3)
                attn3 = p3 / jnp.sum(p3, axis=-1, keepdims=True)

                # per-head context, lane-concatenated -> single output projection
                ctx = jnp.concatenate(
                    [jnp.dot(attn3[h],
                             full[:, 2 * D_MODEL + h * D_V:2 * D_MODEL + (h + 1) * D_V],
                             preferred_element_type=f32)
                     for h in range(N_HEADS)], axis=1)                       # (30,32)
                o = jnp.dot(ctx, ly['blk'][:, 3 * D_MODEL:4 * D_MODEL],
                            preferred_element_type=f32) + ly['fcb']
                o = _ln(o + x, ly['ln1g'], ly['ln1b'], 1e-6)                 # normalize_before=False

                h1 = _gelu(jnp.dot(o, ly['w1'], preferred_element_type=f32) + ly['b1'])
                h2 = jax.lax.dot_general(h1, ly['w2T'], (((1,), (1,)), ((), ())),
                                         preferred_element_type=f32) + ly['b2']
                seq = _ln(h2 + o, ly['ln2g'], ly['ln2b'], 1e-6)

            # -------- FC decoder: lane-concat 4 pyramid rows + single predictor matmul ---
            xg = jnp.concatenate([seq[r:r + 1, :] for r in gather_rows], axis=1)   # (1,128)
            out_ref[b] = jax.lax.dot_general(xg, predT, (((1,), (1,)), ((), ())),
                                             preferred_element_type=f32)           # (1,16)

    return kernel


# ------------------------------ full forward --------------------------------
def pyraformer_fc_forward(x_enc, x_mark_enc, x_dec, x_mark_dec, wpk, *,
                          all_size, gather_rows, fold_batch=False):
    del x_dec  # unused in FC path (matches PyTorch reference)
    B = x_enc.shape[0]
    lens = tuple(all_size)
    n_total = sum(lens)

    # predict token (zeros) appended; circular conv taps assembled host-side:
    ztok = jnp.zeros((B, 1, ENC_IN), dtype=x_enc.dtype)
    x_ext = jnp.concatenate([x_enc, ztok], axis=1)                         # (B, 16, enc_in)
    mark = jnp.concatenate([x_mark_enc, x_mark_dec[:, :1, :]], axis=1)     # (B, 16, mark_in)
    xm = jnp.concatenate([jnp.roll(x_ext, 1, axis=1),                      # tap k=0 (circular pad)
                          x_ext,                                           # tap k=1
                          jnp.roll(x_ext, -1, axis=1),                     # tap k=2
                          mark], axis=-1).astype(jnp.float32)              # (B, 16, 16)

    nb = B if fold_batch else 1
    grid = (1,) if fold_batch else (B,)
    bmap = (lambda i: (0, 0, 0)) if fold_batch else (lambda i: (i, 0, 0))
    sem = ("arbitrary",) if fold_batch else ("parallel",)

    kernel = make_fused_kernel(nb, lens, tuple(WINDOW), tuple(gather_rows))

    out = pl.pallas_call(
        kernel,
        out_shape=jax.ShapeDtypeStruct((B, 1, PRED_OUT), jnp.float32),
        grid=grid,
        in_specs=[
            pl.BlockSpec((nb, L_ENC, EMB_IN), bmap),
            pl.BlockSpec((TOTAL_R, 128), lambda i: (0, 0)),
        ],
        out_specs=pl.BlockSpec((nb, 1, PRED_OUT), bmap),
        scratch_shapes=[
            pltpu.VMEM((n_total, D_BOTTLENECK), jnp.float32),   # CSCM working buffer
            pltpu.VMEM((n_total, D_MODEL), jnp.float32),        # concatenated pyramid sequence
        ],
        compiler_params=pltpu.CompilerParams(dimension_semantics=sem),
    )(xm, wpk)

    return out.reshape(B, PRED_LEN, ENC_IN)


# ----------------------------- parameter setup -------------------------------
def build_params(key, L_enc):
    keys = iter(jax.random.split(key, 64))

    def nrm(shape, scale=0.1):
        return scale * jax.random.normal(next(keys), shape, dtype=jnp.float32)

    n_levels = len(WINDOW)
    w = WINDOW[0]

    # eval-mode BatchNorm1d -> scale / shift (per CSCM conv level)
    gamma = 1.0 + nrm((n_levels, 1, D_BOTTLENECK), 0.1)
    beta = nrm((n_levels, 1, D_BOTTLENECK), 0.1)
    rmean = nrm((n_levels, 1, D_BOTTLENECK), 0.1)
    rvar = 1.0 + jnp.abs(nrm((n_levels, 1, D_BOTTLENECK), 0.1))
    scale = gamma / jnp.sqrt(rvar + 1e-5)
    shift = beta - rmean * scale

    return dict(
        # DataEmbedding
        w_tok=nrm((3, ENC_IN, D_MODEL), 0.3),
        b_tok=nrm((1, D_MODEL), 0.1),
        w_time=nrm((MARK_IN, D_MODEL), 0.3),
        b_time=nrm((1, D_MODEL), 0.1),
        pos=positional_embedding(L_enc, D_MODEL),
        # Bottleneck_Construct (CSCM)
        down_w=nrm((D_MODEL, D_BOTTLENECK), 0.2),
        down_b=nrm((1, D_BOTTLENECK), 0.1),
        conv_w=nrm((n_levels, w, D_BOTTLENECK, D_BOTTLENECK), 0.3),
        conv_b=nrm((n_levels, 1, D_BOTTLENECK), 0.1),
        conv_scale=scale,
        conv_shift=shift,
        up_w=nrm((D_BOTTLENECK, D_MODEL), 0.2),
        up_b=nrm((1, D_MODEL), 0.1),
        ln_g=1.0 + nrm((1, D_MODEL), 0.1),
        ln_b=nrm((1, D_MODEL), 0.1),
        # Encoder layers
        wq=nrm((E_LAYERS, D_MODEL, N_HEADS * D_K), 0.2),
        wk=nrm((E_LAYERS, D_MODEL, N_HEADS * D_K), 0.2),
        wv=nrm((E_LAYERS, D_MODEL, N_HEADS * D_V), 0.2),
        fcw=nrm((E_LAYERS, N_HEADS * D_V, D_MODEL), 0.2),
        fcb=nrm((E_LAYERS, 1, D_MODEL), 0.1),
        ln1_g=1.0 + nrm((E_LAYERS, 1, D_MODEL), 0.1),
        ln1_b=nrm((E_LAYERS, 1, D_MODEL), 0.1),
        w1=nrm((E_LAYERS, D_MODEL, D_FF), 0.2),
        b1=nrm((E_LAYERS, 1, D_FF), 0.1),
        w2=nrm((E_LAYERS, D_FF, D_MODEL), 0.2),
        b2=nrm((E_LAYERS, 1, D_MODEL), 0.1),
        ln2_g=1.0 + nrm((E_LAYERS, 1, D_MODEL), 0.1),
        ln2_b=nrm((E_LAYERS, 1, D_MODEL), 0.1),
        # Predictor: Linear(4*d_model, pred_len*enc_in, bias=False)
        pred_w=nrm((4 * D_MODEL, PRED_OUT), 0.1),
    )


def pack_weights(p, mask_np):
    """Pack every weight / constant into one (TOTAL_R, 128) f32 buffer (single DMA)."""
    buf = np.zeros((TOTAL_R, 128), np.float32)

    def put(r, c, a):
        a = np.asarray(a, np.float32)
        if a.ndim == 1:
            a = a[None, :]
        buf[r:r + a.shape[0], c:c + a.shape[1]] = a

    n_levels = len(WINDOW)

    # per-layer MHA / FFN blocks
    for l in range(E_LAYERS):
        r = R_MHA + l * D_MODEL
        put(r, 0, p['wq'][l])
        put(r, D_MODEL, p['wk'][l])
        put(r, 2 * D_MODEL, p['wv'][l])
        put(r, 3 * D_MODEL, p['fcw'][l])
        put(R_FFN1, l * D_FF, p['w1'][l])
        put(R_FFN2T, l * D_FF, np.asarray(p['w2'][l]).T)
    put(R_PREDT, 0, np.asarray(p['pred_w']).T)                      # (16,128)

    # embedding: circular-conv taps + time linear fused; pos + biases folded
    w_emb = np.concatenate([np.asarray(p['w_tok'][k]) for k in range(3)]
                           + [np.asarray(p['w_time'])], axis=0)      # (16,32)
    add_emb = np.asarray(p['pos']) + np.asarray(p['b_tok']) + np.asarray(p['b_time'])
    put(R_EMB, 0, w_emb)
    put(R_EMB, D_MODEL, add_emb)
    put(R_EMB, 2 * D_MODEL, p['up_w'])

    # CSCM: down proj + per-level conv (taps stacked, eval-mode BN folded in)
    put(R_CSCM, 0, p['down_w'])
    for li in range(n_levels):
        sc = np.asarray(p['conv_scale'][li])
        sh = np.asarray(p['conv_shift'][li])
        w_stk = np.concatenate([np.asarray(p['conv_w'][li, k]) for k in range(WINDOW[li])], axis=0)
        put(R_CSCM, D_BOTTLENECK * (li + 1), w_stk * sc)
        put(R_BIAS + B_CONV0 + li, 0, np.asarray(p['conv_b'][li]) * sc + sh)

    # additive attention mask (0 / -1e9)
    put(R_MASK, 0, mask_np * (-1e9))

    # remaining biases / LN params
    put(R_BIAS + B_DOWN, 0, p['down_b'])
    put(R_BIAS + B_UP, 0, p['up_b'])
    put(R_BIAS + B_CLN_G, 0, p['ln_g'])
    put(R_BIAS + B_CLN_B, 0, p['ln_b'])
    for l in range(E_LAYERS):
        r = R_BIAS + B_LAYER0 + 7 * l
        put(r + 0, 0, p['fcb'][l])
        put(r + 1, 0, p['ln1_g'][l])
        put(r + 2, 0, p['ln1_b'][l])
        put(r + 3, 0, p['b1'][l])
        put(r + 4, 0, p['b2'][l])
        put(r + 5, 0, p['ln2_g'][l])
        put(r + 6, 0, p['ln2_b'][l])
    return jnp.asarray(buf)


# ---------------------------------- main -------------------------------------
if __name__ == "__main__":
    key = jax.random.PRNGKey(0)
    k1, k2, k3, kparam = jax.random.split(key, 4)

    B = 2
    x_enc = jax.random.normal(k1, (B, SEQ_LEN, ENC_IN), dtype=jnp.float32)
    x_mark_enc = jax.random.normal(k2, (B, SEQ_LEN, MARK_IN), dtype=jnp.float32)
    x_dec = jnp.zeros((B, PRED_LEN, ENC_IN), dtype=jnp.float32)      # unused in FC path
    x_mark_dec = jax.random.normal(k3, (B, PRED_LEN, MARK_IN), dtype=jnp.float32)

    # FC decoder uses seq_len + 1 (predict token appended)
    mask_np, all_size = get_mask(L_ENC, WINDOW, INNER)               # all_size = [16, 8, 4, 2]
    idx = refer_points(all_size, WINDOW)
    gather_rows = tuple(int(v) for v in idx[-1])                     # pyramid nodes of the last position

    params = build_params(kparam, L_ENC)
    wpk = pack_weights(params, mask_np)

    # generation split: fold batch into one grid step on single-TensorCore chips (v5e/v6e),
    # keep a 2-way "parallel" grid on v7x (2 TCs per chip).
    fold = _single_tensorcore_chip()

    fwd = jax.jit(pyraformer_fc_forward,
                  static_argnames=("all_size", "gather_rows", "fold_batch"))
    out = fwd(x_enc, x_mark_enc, x_dec, x_mark_dec, wpk,
              all_size=tuple(all_size), gather_rows=gather_rows, fold_batch=fold)
    out = jax.block_until_ready(out)
    assert out.shape == (B, PRED_LEN, ENC_IN)
    assert bool(jnp.all(jnp.isfinite(out)))
    print("KERNEL_OK")
</pallas_src>

<mosaic_0001>
module attributes {stable_mosaic.version = 11 : i64} {
  func.func @kernel(%arg0: i32, %arg1: memref<1x16x16xf32, #tpu.memory_space<vmem>>, %arg2: memref<248x128xf32, #tpu.memory_space<vmem>>, %arg3: memref<1x1x16xf32, #tpu.memory_space<vmem>>, %arg4: memref<30x16xf32, #tpu.memory_space<vmem>>, %arg5: memref<30x32xf32, #tpu.memory_space<vmem>>) attributes {dimension_semantics = [#tpu.dimension_semantics<parallel>], iteration_bounds = array<i64: 2>, scalar_prefetch = 0 : i64, scratch_operands = 2 : i64, tpu.core_type = #tpu.core_type<tc>, window_params = [{transform_indices = @transform_0, window_bounds = array<i64: 1, 16, 16>}, {pipeline_mode = #tpu.pipeline_mode<synchronous>, transform_indices = @transform_1, window_bounds = array<i64: 248, 128>}, {transform_indices = @transform_2, window_bounds = array<i64: 1, 1, 16>}]} {
    %c144 = arith.constant 144 : index
    %c0 = arith.constant 0 : index
    %0 = vector.load %arg2[%c144, %c0] : memref<248x128xf32, #tpu.memory_space<vmem>>, vector<16x32xf32>
    %c144_0 = arith.constant 144 : index
    %c32 = arith.constant 32 : index
    %1 = vector.load %arg2[%c144_0, %c32] : memref<248x128xf32, #tpu.memory_space<vmem>>, vector<16x32xf32>
    %c144_1 = arith.constant 144 : index
    %c64 = arith.constant 64 : index
    %2 = vector.load %arg2[%c144_1, %c64] : memref<248x128xf32, #tpu.memory_space<vmem>>, vector<16x32xf32>
    %c160 = arith.constant 160 : index
    %c0_2 = arith.constant 0 : index
    %3 = vector.load %arg2[%c160, %c0_2] : memref<248x128xf32, #tpu.memory_space<vmem>>, vector<32x16xf32>
    %c160_3 = arith.constant 160 : index
    %c16 = arith.constant 16 : index
    %4 = vector.load %arg2[%c160_3, %c16] : memref<248x128xf32, #tpu.memory_space<vmem>>, vector<32x16xf32>
    %c160_4 = arith.constant 160 : index
    %c32_5 = arith.constant 32 : index
    %5 = vector.load %arg2[%c160_4, %c32_5] : memref<248x128xf32, #tpu.memory_space<vmem>>, vector<32x16xf32>
    %c160_6 = arith.constant 160 : index
    %c48 = arith.constant 48 : index
    %6 = vector.load %arg2[%c160_6, %c48] : memref<248x128xf32, #tpu.memory_space<vmem>>, vector<32x16xf32>
    %c225 = arith.constant 225 : index
    %c0_7 = arith.constant 0 : index
    %7 = vector.load %arg2[%c225, %c0_7] : memref<248x128xf32, #tpu.memory_space<vmem>>, vector<1x16xf32>
    %c226 = arith.constant 226 : index
    %c0_8 = arith.constant 0 : index
    %8 = vector.load %arg2[%c226, %c0_8] : memref<248x128xf32, #tpu.memory_space<vmem>>, vector<1x16xf32>
    %c227 = arith.constant 227 : index
    %c0_9 = arith.constant 0 : index
    %9 = vector.load %arg2[%c227, %c0_9] : memref<248x128xf32, #tpu.memory_space<vmem>>, vector<1x16xf32>
    %c224 = arith.constant 224 : index
    %c0_10 = arith.constant 0 : index
    %10 = vector.load %arg2[%c224, %c0_10] : memref<248x128xf32, #tpu.memory_space<vmem>>, vector<1x16xf32>
    %c228 = arith.constant 228 : index
    %c0_11 = arith.constant 0 : index
    %11 = vector.load %arg2[%c228, %c0_11] : memref<248x128xf32, #tpu.memory_space<vmem>>, vector<1x32xf32>
    %c229 = arith.constant 229 : index
    %c0_12 = arith.constant 0 : index
    %12 = vector.load %arg2[%c229, %c0_12] : memref<248x128xf32, #tpu.memory_space<vmem>>, vector<1x32xf32>
    %c230 = arith.constant 230 : index
    %c0_13 = arith.constant 0 : index
    %13 = vector.load %arg2[%c230, %c0_13] : memref<248x128xf32, #tpu.memory_space<vmem>>, vector<1x32xf32>
    %c192 = arith.constant 192 : index
    %c0_14 = arith.constant 0 : index
    %14 = vector.load %arg2[%c192, %c0_14] : memref<248x128xf32, #tpu.memory_space<vmem>>, vector<30x30xf32>
    %c128 = arith.constant 128 : index
    %c0_15 = arith.constant 0 : index
    %15 = vector.load %arg2[%c128, %c0_15] : memref<248x128xf32, #tpu.memory_space<vmem>>, vector<16x128xf32>
    %c0_16 = arith.constant 0 : index
    %c0_17 = arith.constant 0 : index
    %16 = vector.load %arg2[%c0_16, %c0_17] : memref<248x128xf32, #tpu.memory_space<vmem>>, vector<32x128xf32>
    %c64_18 = arith.constant 64 : index
    %c0_19 = arith.constant 0 : index
    %17 = vector.load %arg2[%c64_18, %c0_19] : memref<248x128xf32, #tpu.memory_space<vmem>>, vector<32x64xf32>
    %c96 = arith.constant 96 : index
    %c0_20 = arith.constant 0 : index
    %18 = vector.load %arg2[%c96, %c0_20] : memref<248x128xf32, #tpu.memory_space<vmem>>, vector<32x64xf32>
    %c231 = arith.constant 231 : index
    %c0_21 = arith.constant 0 : index
    %19 = vector.load %arg2[%c231, %c0_21] : memref<248x128xf32, #tpu.memory_space<vmem>>, vector<1x32xf32>
    %c232 = arith.constant 232 : index
    %c0_22 = arith.constant 0 : index
    %20 = vector.load %arg2[%c232, %c0_22] : memref<248x128xf32, #tpu.memory_space<vmem>>, vector<1x32xf32>
    %c233 = arith.constant 233 : index
    %c0_23 = arith.constant 0 : index
    %21 = vector.load %arg2[%c233, %c0_23] : memref<248x128xf32, #tpu.memory_space<vmem>>, vector<1x32xf32>
    %c234 = arith.constant 234 : index
    %c0_24 = arith.constant 0 : index
    %22 = vector.load %arg2[%c234, %c0_24] : memref<248x128xf32, #tpu.memory_space<vmem>>, vector<1x64xf32>
    %c235 = arith.constant 235 : index
    %c0_25 = arith.constant 0 : index
    %23 = vector.load %arg2[%c235, %c0_25] : memref<248x128xf32, #tpu.memory_space<vmem>>, vector<1x32xf32>
    %c236 = arith.constant 236 : index
    %c0_26 = arith.constant 0 : index
    %24 = vector.load %arg2[%c236, %c0_26] : memref<248x128xf32, #tpu.memory_space<vmem>>, vector<1x32xf32>
    %c237 = arith.constant 237 : index
    %c0_27 = arith.constant 0 : index
    %25 = vector.load %arg2[%c237, %c0_27] : memref<248x128xf32, #tpu.memory_space<vmem>>, vector<1x32xf32>
    %c32_28 = arith.constant 32 : index
    %c0_29 = arith.constant 0 : index
    %26 = vector.load %arg2[%c32_28, %c0_29] : memref<248x128xf32, #tpu.memory_space<vmem>>, vector<32x128xf32>
    %c64_30 = arith.constant 64 : index
    %c64_31 = arith.constant 64 : index
    %27 = vector.load %arg2[%c64_30, %c64_31] : memref<248x128xf32, #tpu.memory_space<vmem>>, vector<32x64xf32>
    %c96_32 = arith.constant 96 : index
    %c64_33 = arith.constant 64 : index
    %28 = vector.load %arg2[%c96_32, %c64_33] : memref<248x128xf32, #tpu.memory_space<vmem>>, vector<32x64xf32>
    %c238 = arith.constant 238 : index
    %c0_34 = arith.constant 0 : index
    %29 = vector.load %arg2[%c238, %c0_34] : memref<248x128xf32, #tpu.memory_space<vmem>>, vector<1x32xf32>
    %c239 = arith.constant 239 : index
    %c0_35 = arith.constant 0 : index
    %30 = vector.load %arg2[%c239, %c0_35] : memref<248x128xf32, #tpu.memory_space<vmem>>, vector<1x32xf32>
    %c240 = arith.constant 240 : index
    %c0_36 = arith.constant 0 : index
    %31 = vector.load %arg2[%c240, %c0_36] : memref<248x128xf32, #tpu.memory_space<vmem>>, vector<1x32xf32>
    %c241 = arith.constant 241 : index
    %c0_37 = arith.constant 0 : index
    %32 = vector.load %arg2[%c241, %c0_37] : memref<248x128xf32, #tpu.memory_space<vmem>>, vector<1x64xf32>
    %c242 = arith.constant 242 : index
    %c0_38 = arith.constant 0 : index
    %33 = vector.load %arg2[%c242, %c0_38] : memref<248x128xf32, #tpu.memory_space<vmem>>, vector<1x32xf32>
    %c243 = arith.constant 243 : index
    %c0_39 = arith.constant 0 : index
    %34 = vector.load %arg2[%c243, %c0_39] : memref<248x128xf32, #tpu.memory_space<vmem>>, vector<1x32xf32>
    %c244 = arith.constant 244 : index
    %c0_40 = arith.constant 0 : index
    %35 = vector.load %arg2[%c244, %c0_40] : memref<248x128xf32, #tpu.memory_space<vmem>>, vector<1x32xf32>
    %c0_41 = arith.constant 0 : index
    %c0_42 = arith.constant 0 : index
    %c0_43 = arith.constant 0 : index
    %36 = vector.load %arg1[%c0_41, %c0_42, %c0_43] : memref<1x16x16xf32, #tpu.memory_space<vmem>>, vector<1x16x16xf32>
    %37 = vector.shape_cast %36 : vector<1x16x16xf32> to vector<16x16xf32>
    %cst = arith.constant dense<0.000000e+00> : vector<16x32xf32>
    %38 = tpu.matmul %37, %0, %cst {dimension_numbers = #tpu.dot_dimension_numbers<[1], [0], [0], [1], [0, 0, 1, 1], [], []>} : vector<16x16xf32>, vector<16x32xf32>, vector<16x32xf32> -> vector<16x32xf32>
    %39 = arith.addf %38, %1 : vector<16x32xf32>
    %cst_44 = arith.constant dense<0.000000e+00> : vector<16x16xf32>
    %40 = tpu.matmul %39, %3, %cst_44 {dimension_numbers = #tpu.dot_dimension_numbers<[1], [0], [0], [1], [0, 0, 1, 1], [], []>} : vector<16x32xf32>, vector<32x16xf32>, vector<16x16xf32> -> vector<16x16xf32>
    %41 = vector.broadcast %10 : vector<1x16xf32> to vector<16x16xf32>
    %42 = arith.addf %40, %41 : vector<16x16xf32>
    %c0_45 = arith.constant 0 : index
    %c0_46 = arith.constant 0 : index
    %43 = vector.load %arg4[%c0_45, %c0_46] : memref<30x16xf32, #tpu.memory_space<vmem>>, vector<16x16xf32>
    tpu.vector_store %arg4[%c0_45, %c0_46], %42 {strides = array<i32>} : memref<30x16xf32, #tpu.memory_space<vmem>>, vector<16x16xf32>,
    %c0_47 = arith.constant 0 : index
    %c0_48 = arith.constant 0 : index
    %44 = tpu.strided_load %arg4[%c0_47, %c0_48] {strides = array<i32: 2, 1>} : memref<30x16xf32, #tpu.memory_space<vmem>>, vector<8x16xf32>
    %45 = vector.extract_strided_slice %4 {offsets = [0, 0], sizes = [16, 16], strides = [1, 1]} : vector<32x16xf32> to vector<16x16xf32>
    %cst_49 = arith.constant dense<0.000000e+00> : vector<8x16xf32>
    %46 = tpu.matmul %44, %45, %cst_49 {dimension_numbers = #tpu.dot_dimension_numbers<[1], [0], [0], [1], [0, 0, 1, 1], [], []>} : vector<8x16xf32>, vector<16x16xf32>, vector<8x16xf32> -> vector<8x16xf32>
    %47 = vector.broadcast %7 : vector<1x16xf32> to vector<8x16xf32>
    %48 = arith.addf %47, %46 : vector<8x16xf32>
    %c1 = arith.constant 1 : index
    %c0_50 = arith.constant 0 : index
    %49 = tpu.strided_load %arg4[%c1, %c0_50] {strides = array<i32: 2, 1>} : memref<30x16xf32, #tpu.memory_space<vmem>>, vector<8x16xf32>
    %50 = vector.extract_strided_slice %4 {offsets = [16, 0], sizes = [16, 16], strides = [1, 1]} : vector<32x16xf32> to vector<16x16xf32>
    %cst_51 = arith.constant dense<0.000000e+00> : vector<8x16xf32>
    %51 = tpu.matmul %49, %50, %cst_51 {dimension_numbers = #tpu.dot_dimension_numbers<[1], [0], [0], [1], [0, 0, 1, 1], [], []>} : vector<8x16xf32>, vector<16x16xf32>, vector<8x16xf32> -> vector<8x16xf32>
    %52 = arith.addf %48, %51 : vector<8x16xf32>
    %cst_52 = arith.constant 0.000000e+00 : f32
    %53 = vector.broadcast %cst_52 : f32 to vector<8x16xf32>
    %54 = arith.cmpf ogt, %52, %53 : vector<8x16xf32>
    %cst_53 = arith.constant 0.000000e+00 : f32
    %55 = vector.broadcast %cst_53 : f32 to vector<8x16xf32>
    %56 = arith.minimumf %52, %55 : vector<8x16xf32>
    %57 = math.exp %56 : vector<8x16xf32>
    %cst_54 = arith.constant 1.000000e+00 : f32
    %58 = vector.broadcast %cst_54 : f32 to vector<8x16xf32>
    %59 = arith.subf %57, %58 : vector<8x16xf32>
    %60 = arith.select %54, %52, %59 : vector<8x16xi1>, vector<8x16xf32>
    %c16_55 = arith.constant 16 : index
    %c0_56 = arith.constant 0 : index
    %61 = vector.load %arg4[%c16_55, %c0_56] : memref<30x16xf32, #tpu.memory_space<vmem>>, vector<8x16xf32>
    tpu.vector_store %arg4[%c16_55, %c0_56], %60 {strides = array<i32>} : memref<30x16xf32, #tpu.memory_space<vmem>>, vector<8x16xf32>,
    %c16_57 = arith.constant 16 : index
    %c0_58 = arith.constant 0 : index
    %62 = tpu.strided_load %arg4[%c16_57, %c0_58] {strides = array<i32: 2, 1>} : memref<30x16xf32, #tpu.memory_space<vmem>>, vector<4x16xf32>
    %63 = vector.extract_strided_slice %5 {offsets = [0, 0], sizes = [16, 16], strides = [1, 1]} : vector<32x16xf32> to vector<16x16xf32>
    %cst_59 = arith.constant dense<0.000000e+00> : vector<4x16xf32>
    %64 = tpu.matmul %62, %63, %cst_59 {dimension_numbers = #tpu.dot_dimension_numbers<[1], [0], [0], [1], [0, 0, 1, 1], [], []>} : vector<4x16xf32>, vector<16x16xf32>, vector<4x16xf32> -> vector<4x16xf32>
    %65 = vector.broadcast %8 : vector<1x16xf32> to vector<4x16xf32>
    %66 = arith.addf %65, %64 : vector<4x16xf32>
    %c17 = arith.constant 17 : index
    %c0_60 = arith.constant 0 : index
    %67 = tpu.strided_load %arg4[%c17, %c0_60] {strides = array<i32: 2, 1>} : memref<30x16xf32, #tpu.memory_space<vmem>>, vector<4x16xf32>
    %68 = vector.extract_strided_slice %5 {offsets = [16, 0], sizes = [16, 16], strides = [1, 1]} : vector<32x16xf32> to vector<16x16xf32>
    %cst_61 = arith.constant dense<0.000000e+00> : vector<4x16xf32>
    %69 = tpu.matmul %67, %68, %cst_61 {dimension_numbers = #tpu.dot_dimension_numbers<[1], [0], [0], [1], [0, 0, 1, 1], [], []>} : vector<4x16xf32>, vector<16x16xf32>, vector<4x16xf32> -> vector<4x16xf32>
    %70 = arith.addf %66, %69 : vector<4x16xf32>
    %cst_62 = arith.constant 0.000000e+00 : f32
    %71 = vector.broadcast %cst_62 : f32 to vector<4x16xf32>
    %72 = arith.cmpf ogt, %70, %71 : vector<4x16xf32>
    %cst_63 = arith.constant 0.000000e+00 : f32
    %73 = vector.broadcast %cst_63 : f32 to vector<4x16xf32>
    %74 = arith.minimumf %70, %73 : vector<4x16xf32>
    %75 = math.exp %74 : vector<4x16xf32>
    %cst_64 = arith.constant 1.000000e+00 : f32
    %76 = vector.broadcast %cst_64 : f32 to vector<4x16xf32>
    %77 = arith.subf %75, %76 : vector<4x16xf32>
    %78 = arith.select %72, %70, %77 : vector<4x16xi1>, vector<4x16xf32>
    %c24 = arith.constant 24 : index
    %c0_65 = arith.constant 0 : index
    %79 = vector.load %arg4[%c24, %c0_65] : memref<30x16xf32, #tpu.memory_space<vmem>>, vector<4x16xf32>
    tpu.vector_store %arg4[%c24, %c0_65], %78 {strides = array<i32>} : memref<30x16xf32, #tpu.memory_space<vmem>>, vector<4x16xf32>,
    %c24_66 = arith.constant 24 : index
    %c0_67 = arith.constant 0 : index
    %80 = tpu.strided_load %arg4[%c24_66, %c0_67] {strides = array<i32: 2, 1>} : memref<30x16xf32, #tpu.memory_space<vmem>>, vector<2x16xf32>
    %81 = vector.extract_strided_slice %6 {offsets = [0, 0], sizes = [16, 16], strides = [1, 1]} : vector<32x16xf32> to vector<16x16xf32>
    %cst_68 = arith.constant dense<0.000000e+00> : vector<2x16xf32>
    %82 = tpu.matmul %80, %81, %cst_68 {dimension_numbers = #tpu.dot_dimension_numbers<[1], [0], [0], [1], [0, 0, 1, 1], [], []>} : vector<2x16xf32>, vector<16x16xf32>, vector<2x16xf32> -> vector<2x16xf32>
    %83 = vector.broadcast %9 : vector<1x16xf32> to vector<2x16xf32>
    %84 = arith.addf %83, %82 : vector<2x16xf32>
    %c25 = arith.constant 25 : index
    %c0_69 = arith.constant 0 : index
    %85 = tpu.strided_load %arg4[%c25, %c0_69] {strides = array<i32: 2, 1>} : memref<30x16xf32, #tpu.memory_space<vmem>>, vector<2x16xf32>
    %86 = vector.extract_strided_slice %6 {offsets = [16, 0], sizes = [16, 16], strides = [1, 1]} : vector<32x16xf32> to vector<16x16xf32>
    %cst_70 = arith.constant dense<0.000000e+00> : vector<2x16xf32>
    %87 = tpu.matmul %85, %86, %cst_70 {dimension_numbers = #tpu.dot_dimension_numbers<[1], [0], [0], [1], [0, 0, 1, 1], [], []>} : vector<2x16xf32>, vector<16x16xf32>, vector<2x16xf32> -> vector<2x16xf32>
    %88 = arith.addf %84, %87 : vector<2x16xf32>
    %cst_71 = arith.constant 0.000000e+00 : f32
    %89 = vector.broadcast %cst_71 : f32 to vector<2x16xf32>
    %90 = arith.cmpf ogt, %88, %89 : vector<2x16xf32>
    %cst_72 = arith.constant 0.000000e+00 : f32
    %91 = vector.broadcast %cst_72 : f32 to vector<2x16xf32>
    %92 = arith.minimumf %88, %91 : vector<2x16xf32>
    %93 = math.exp %92 : vector<2x16xf32>
    %cst_73 = arith.constant 1.000000e+00 : f32
    %94 = vector.broadcast %cst_73 : f32 to vector<2x16xf32>
    %95 = arith.subf %93, %94 : vector<2x16xf32>
    %96 = arith.select %90, %88, %95 : vector<2x16xi1>, vector<2x16xf32>
    %c28 = arith.constant 28 : index
    %c0_74 = arith.constant 0 : index
    %97 = vector.load %arg4[%c28, %c0_74] : memref<30x16xf32, #tpu.memory_space<vmem>>, vector<2x16xf32>
    tpu.vector_store %arg4[%c28, %c0_74], %96 {strides = array<i32>} : memref<30x16xf32, #tpu.memory_space<vmem>>, vector<2x16xf32>,
    %c16_75 = arith.constant 16 : index
    %c0_76 = arith.constant 0 : index
    %98 = vector.load %arg4[%c16_75, %c0_76] : memref<30x16xf32, #tpu.memory_space<vmem>>, vector<14x16xf32>
    %cst_77 = arith.constant dense<0.000000e+00> : vector<14x32xf32>
    %99 = tpu.matmul %98, %2, %cst_77 {dimension_numbers = #tpu.dot_dimension_numbers<[1], [0], [0], [1], [0, 0, 1, 1], [], []>} : vector<14x16xf32>, vector<16x32xf32>, vector<14x32xf32> -> vector<14x32xf32>
    %100 = vector.broadcast %11 : vector<1x32xf32> to vector<14x32xf32>
    %101 = arith.addf %99, %100 : vector<14x32xf32>
    %cst_78 = arith.constant dense<0.000000e+00> : vector<16xf32>
    %102 = vector.multi_reduction <add>, %39, %cst_78 [1] : vector<16x32xf32> to vector<16xf32>
    %103 = vector.shape_cast %102 : vector<16xf32> to vector<16x1xf32>
    %cst_79 = arith.constant 3.200000e+01 : f32
    %104 = vector.broadcast %cst_79 : f32 to vector<16x1xf32>
    %105 = arith.divf %103, %104 : vector<16x1xf32>
    %106 = vector.broadcast %105 : vector<16x1xf32> to vector<16x32xf32>
    %107 = arith.subf %39, %106 : vector<16x32xf32>
    %108 = arith.mulf %107, %107 : vector<16x32xf32>
    %cst_80 = arith.constant dense<0.000000e+00> : vector<16xf32>
    %109 = vector.multi_reduction <add>, %108, %cst_80 [1] : vector<16x32xf32> to vector<16xf32>
    %110 = vector.shape_cast %109 : vector<16xf32> to vector<16x1xf32>
    %cst_81 = arith.constant 3.200000e+01 : f32
    %111 = vector.broadcast %cst_81 : f32 to vector<16x1xf32>
    %112 = arith.divf %110, %111 : vector<16x1xf32>
    %113 = vector.broadcast %105 : vector<16x1xf32> to vector<16x32xf32>
    %114 = arith.subf %39, %113 : vector<16x32xf32>
    %cst_82 = arith.constant 9.99999974E-6 : f32
    %115 = vector.broadcast %cst_82 : f32 to vector<16x1xf32>
    %116 = arith.addf %112, %115 : vector<16x1xf32>
    %117 = math.rsqrt %116 : vector<16x1xf32>
    %118 = vector.broadcast %117 : vector<16x1xf32> to vector<16x32xf32>
    %119 = arith.mulf %114, %118 : vector<16x32xf32>
    %120 = vector.broadcast %12 : vector<1x32xf32> to vector<16x32xf32>
    %121 = arith.mulf %119, %120 : vector<16x32xf32>
    %122 = vector.broadcast %13 : vector<1x32xf32> to vector<16x32xf32>
    %123 = arith.addf %121, %122 : vector<16x32xf32>
    %c0_83 = arith.constant 0 : index
    %c0_84 = arith.constant 0 : index
    %124 = vector.load %arg5[%c0_83, %c0_84] : memref<30x32xf32, #tpu.memory_space<vmem>>, vector<16x32xf32>
    tpu.vector_store %arg5[%c0_83, %c0_84], %123 {strides = array<i32>} : memref<30x32xf32, #tpu.memory_space<vmem>>, vector<16x32xf32>,
    %cst_85 = arith.constant dense<0.000000e+00> : vector<14xf32>
    %125 = vector.multi_reduction <add>, %101, %cst_85 [1] : vector<14x32xf32> to vector<14xf32>
    %126 = vector.shape_cast %125 : vector<14xf32> to vector<14x1xf32>
    %cst_86 = arith.constant 3.200000e+01 : f32
    %127 = vector.broadcast %cst_86 : f32 to vector<14x1xf32>
    %128 = arith.divf %126, %127 : vector<14x1xf32>
    %129 = vector.broadcast %128 : vector<14x1xf32> to vector<14x32xf32>
    %130 = arith.subf %101, %129 : vector<14x32xf32>
    %131 = arith.mulf %130, %130 : vector<14x32xf32>
    %cst_87 = arith.constant dense<0.000000e+00> : vector<14xf32>
    %132 = vector.multi_reduction <add>, %131, %cst_87 [1] : vector<14x32xf32> to vector<14xf32>
    %133 = vector.shape_cast %132 : vector<14xf32> to vector<14x1xf32>
    %cst_88 = arith.constant 3.200000e+01 : f32
    %134 = vector.broadcast %cst_88 : f32 to vector<14x1xf32>
    %135 = arith.divf %133, %134 : vector<14x1xf32>
    %136 = vector.broadcast %128 : vector<14x1xf32> to vector<14x32xf32>
    %137 = arith.subf %101, %136 : vector<14x32xf32>
    %cst_89 = arith.constant 9.99999974E-6 : f32
    %138 = vector.broadcast %cst_89 : f32 to vector<14x1xf32>
    %139 = arith.addf %135, %138 : vector<14x1xf32>
    %140 = math.rsqrt %139 : vector<14x1xf32>
    %141 = vector.broadcast %140 : vector<14x1xf32> to vector<14x32xf32>
    %142 = arith.mulf %137, %141 : vector<14x32xf32>
    %143 = vector.broadcast %12 : vector<1x32xf32> to vector<14x32xf32>
    %144 = arith.mulf %142, %143 : vector<14x32xf32>
    %145 = vector.broadcast %13 : vector<1x32xf32> to vector<14x32xf32>
    %146 = arith.addf %144, %145 : vector<14x32xf32>
    %c16_90 = arith.constant 16 : index
    %c0_91 = arith.constant 0 : index
    %147 = vector.load %arg5[%c16_90, %c0_91] : memref<30x32xf32, #tpu.memory_space<vmem>>, vector<14x32xf32>
    tpu.vector_store %arg5[%c16_90, %c0_91], %146 {strides = array<i32>} : memref<30x32xf32, #tpu.memory_space<vmem>>, vector<14x32xf32>,
    %c0_92 = arith.constant 0 : index
    %c0_93 = arith.constant 0 : index
    %148 = vector.load %arg5[%c0_92, %c0_93] : memref<30x32xf32, #tpu.memory_space<vmem>>, vector<30x32xf32>
    %cst_94 = arith.constant dense<0.000000e+00> : vector<30x128xf32>
    %149 = tpu.matmul %148, %16, %cst_94 {dimension_numbers = #tpu.dot_dimension_numbers<[1], [0], [0], [1], [0, 0, 1, 1], [], []>} : vector<30x32xf32>, vector<32x128xf32>, vector<30x128xf32> -> vector<30x128xf32>
    %150 = vector.extract_strided_slice %149 {offsets = [0, 0], sizes = [30, 8], strides = [1, 1]} : vector<30x128xf32> to vector<30x8xf32>
    %cst_95 = arith.constant 0.353553385 : f32
    %151 = vector.broadcast %cst_95 : f32 to vector<30x8xf32>
    %152 = arith.mulf %150, %151 : vector<30x8xf32>
    %153 = vector.extract_strided_slice %149 {offsets = [0, 32], sizes = [30, 8], strides = [1, 1]} : vector<30x128xf32> to vector<30x8xf32>
    %cst_96 = arith.constant dense<0.000000e+00> : vector<30x30xf32>
    %154 = tpu.matmul %152, %153, %cst_96 {dimension_numbers = #tpu.dot_dimension_numbers<[1], [1], [0], [0], [0, 0, 1, 0], [], []>} : vector<30x8xf32>, vector<30x8xf32>, vector<30x30xf32> -> vector<30x30xf32>
    %155 = arith.addf %154, %14 : vector<30x30xf32>
    %156 = vector.extract_strided_slice %149 {offsets = [0, 8], sizes = [30, 8], strides = [1, 1]} : vector<30x128xf32> to vector<30x8xf32>
    %cst_97 = arith.constant 0.353553385 : f32
    %157 = vector.broadcast %cst_97 : f32 to vector<30x8xf32>
    %158 = arith.mulf %156, %157 : vector<30x8xf32>
    %159 = vector.extract_strided_slice %149 {offsets = [0, 40], sizes = [30, 8], strides = [1, 1]} : vector<30x128xf32> to vector<30x8xf32>
    %cst_98 = arith.constant dense<0.000000e+00> : vector<30x30xf32>
    %160 = tpu.matmul %158, %159, %cst_98 {dimension_numbers = #tpu.dot_dimension_numbers<[1], [1], [0], [0], [0, 0, 1, 0], [], []>} : vector<30x8xf32>, vector<30x8xf32>, vector<30x30xf32> -> vector<30x30xf32>
    %161 = arith.addf %160, %14 : vector<30x30xf32>
    %162 = vector.extract_strided_slice %149 {offsets = [0, 16], sizes = [30, 8], strides = [1, 1]} : vector<30x128xf32> to vector<30x8xf32>
    %cst_99 = arith.constant 0.353553385 : f32
    %163 = vector.broadcast %cst_99 : f32 to vector<30x8xf32>
    %164 = arith.mulf %162, %163 : vector<30x8xf32>
    %165 = vector.extract_strided_slice %149 {offsets = [0, 48], sizes = [30, 8], strides = [1, 1]} : vector<30x128xf32> to vector<30x8xf32>
    %cst_100 = arith.constant dense<0.000000e+00> : vector<30x30xf32>
    %166 = tpu.matmul %164, %165, %cst_100 {dimension_numbers = #tpu.dot_dimension_numbers<[1], [1], [0], [0], [0, 0, 1, 0], [], []>} : vector<30x8xf32>, vector<30x8xf32>, vector<30x30xf32> -> vector<30x30xf32>
    %167 = arith.addf %166, %14 : vector<30x30xf32>
    %168 = vector.extract_strided_slice %149 {offsets = [0, 24], sizes = [30, 8], strides = [1, 1]} : vector<30x128xf32> to vector<30x8xf32>
    %cst_101 = arith.constant 0.353553385 : f32
    %169 = vector.broadcast %cst_101 : f32 to vector<30x8xf32>
    %170 = arith.mulf %168, %169 : vector<30x8xf32>
    %171 = vector.extract_strided_slice %149 {offsets = [0, 56], sizes = [30, 8], strides = [1, 1]} : vector<30x128xf32> to vector<30x8xf32>
    %cst_102 = arith.constant dense<0.000000e+00> : vector<30x30xf32>
    %172 = tpu.matmul %170, %171, %cst_102 {dimension_numbers = #tpu.dot_dimension_numbers<[1], [1], [0], [0], [0, 0, 1, 0], [], []>} : vector<30x8xf32>, vector<30x8xf32>, vector<30x30xf32> -> vector<30x30xf32>
    %173 = arith.addf %172, %14 : vector<30x30xf32>
    %174 = vector.shape_cast %155 : vector<30x30xf32> to vector<1x30x30xf32>
    %175 = vector.shape_cast %161 : vector<30x30xf32> to vector<1x30x30xf32>
    %176 = vector.shape_cast %167 : vector<30x30xf32> to vector<1x30x30xf32>
    %177 = vector.shape_cast %173 : vector<30x30xf32> to vector<1x30x30xf32>
    %178 = tpu.concatenate %174, %175, %176, %177 in 0 : vector<1x30x30xf32>, vector<1x30x30xf32>, vector<1x30x30xf32>, vector<1x30x30xf32> -> vector<4x30x30xf32>
    %cst_103 = arith.constant dense<0xFF800000> : vector<4x30xf32>
    %179 = vector.multi_reduction <maximumf>, %178, %cst_103 [2] : vector<4x30x30xf32> to vector<4x30xf32>
    %180 = vector.shape_cast %179 : vector<4x30xf32> to vector<4x30x1xf32>
    %181 = vector.broadcast %180 : vector<4x30x1xf32> to vector<4x30x30xf32>
    %182 = arith.subf %178, %181 : vector<4x30x30xf32>
    %183 = math.exp %182 : vector<4x30x30xf32>
    %cst_104 = arith.constant dense<0.000000e+00> : vector<4x30xf32>
    %184 = vector.multi_reduction <add>, %183, %cst_104 [2] : vector<4x30x30xf32> to vector<4x30xf32>
    %185 = vector.shape_cast %184 : vector<4x30xf32> to vector<4x30x1xf32>
    %186 = vector.broadcast %185 : vector<4x30x1xf32> to vector<4x30x30xf32>
    %187 = arith.divf %183, %186 : vector<4x30x30xf32>
    %188 = vector.extract_strided_slice %187 {offsets = [0, 0, 0], sizes = [1, 30, 30], strides = [1, 1, 1]} : vector<4x30x30xf32> to vector<1x30x30xf32>
    %189 = vector.shape_cast %188 : vector<1x30x30xf32> to vector<30x30xf32>
    %190 = vector.extract_strided_slice %149 {offsets = [0, 64], sizes = [30, 8], strides = [1, 1]} : vector<30x128xf32> to vector<30x8xf32>
    %cst_105 = arith.constant dense<0.000000e+00> : vector<30x8xf32>
    %191 = tpu.matmul %189, %190, %cst_105 {dimension_numbers = #tpu.dot_dimension_numbers<[1], [0], [0], [1], [0, 0, 1, 1], [], []>} : vector<30x30xf32>, vector<30x8xf32>, vector<30x8xf32> -> vector<30x8xf32>
    %192 = vector.extract_strided_slice %187 {offsets = [1, 0, 0], sizes = [1, 30, 30], strides = [1, 1, 1]} : vector<4x30x30xf32> to vector<1x30x30xf32>
    %193 = vector.shape_cast %192 : vector<1x30x30xf32> to vector<30x30xf32>
    %194 = vector.extract_strided_slice %149 {offsets = [0, 72], sizes = [30, 8], strides = [1, 1]} : vector<30x128xf32> to vector<30x8xf32>
    %cst_106 = arith.constant dense<0.000000e+00> : vector<30x8xf32>
    %195 = tpu.matmul %193, %194, %cst_106 {dimension_numbers = #tpu.dot_dimension_numbers<[1], [0], [0], [1], [0, 0, 1, 1], [], []>} : vector<30x30xf32>, vector<30x8xf32>, vector<30x8xf32> -> vector<30x8xf32>
    %196 = vector.extract_strided_slice %187 {offsets = [2, 0, 0], sizes = [1, 30, 30], strides = [1, 1, 1]} : vector<4x30x30xf32> to vector<1x30x30xf32>
    %197 = vector.shape_cast %196 : vector<1x30x30xf32> to vector<30x30xf32>
    %198 = vector.extract_strided_slice %149 {offsets = [0, 80], sizes = [30, 8], strides = [1, 1]} : vector<30x128xf32> to vector<30x8xf32>
    %cst_107 = arith.constant dense<0.000000e+00> : vector<30x8xf32>
    %199 = tpu.matmul %197, %198, %cst_107 {dimension_numbers = #tpu.dot_dimension_numbers<[1], [0], [0], [1], [0, 0, 1, 1], [], []>} : vector<30x30xf32>, vector<30x8xf32>, vector<30x8xf32> -> vector<30x8xf32>
    %200 = vector.extract_strided_slice %187 {offsets = [3, 0, 0], sizes = [1, 30, 30], strides = [1, 1, 1]} : vector<4x30x30xf32> to vector<1x30x30xf32>
    %201 = vector.shape_cast %200 : vector<1x30x30xf32> to vector<30x30xf32>
    %202 = vector.extract_strided_slice %149 {offsets = [0, 88], sizes = [30, 8], strides = [1, 1]} : vector<30x128xf32> to vector<30x8xf32>
    %cst_108 = arith.constant dense<0.000000e+00> : vector<30x8xf32>
    %203 = tpu.matmul %201, %202, %cst_108 {dimension_numbers = #tpu.dot_dimension_numbers<[1], [0], [0], [1], [0, 0, 1, 1], [], []>} : vector<30x30xf32>, vector<30x8xf32>, vector<30x8xf32> -> vector<30x8xf32>
    %204 = tpu.concatenate %191, %195, %199, %203 in 1 : vector<30x8xf32>, vector<30x8xf32>, vector<30x8xf32>, vector<30x8xf32> -> vector<30x32xf32>
    %205 = vector.extract_strided_slice %16 {offsets = [0, 96], sizes = [32, 32], strides = [1, 1]} : vector<32x128xf32> to vector<32x32xf32>
    %cst_109 = arith.constant dense<0.000000e+00> : vector<30x32xf32>
    %206 = tpu.matmul %204, %205, %cst_109 {dimension_numbers = #tpu.dot_dimension_numbers<[1], [0], [0], [1], [0, 0, 1, 1], [], []>} : vector<30x32xf32>, vector<32x32xf32>, vector<30x32xf32> -> vector<30x32xf32>
    %207 = vector.broadcast %19 : vector<1x32xf32> to vector<30x32xf32>
    %208 = arith.addf %206, %207 : vector<30x32xf32>
    %209 = arith.addf %208, %148 : vector<30x32xf32>
    %cst_110 = arith.constant dense<0.000000e+00> : vector<30xf32>
    %210 = vector.multi_reduction <add>, %209, %cst_110 [1] : vector<30x32xf32> to vector<30xf32>
    %211 = vector.shape_cast %210 : vector<30xf32> to vector<30x1xf32>
    %cst_111 = arith.constant 3.200000e+01 : f32
    %212 = vector.broadcast %cst_111 : f32 to vector<30x1xf32>
    %213 = arith.divf %211, %212 : vector<30x1xf32>
    %214 = vector.broadcast %213 : vector<30x1xf32> to vector<30x32xf32>
    %215 = arith.subf %209, %214 : vector<30x32xf32>
    %216 = arith.mulf %215, %215 : vector<30x32xf32>
    %cst_112 = arith.constant dense<0.000000e+00> : vector<30xf32>
    %217 = vector.multi_reduction <add>, %216, %cst_112 [1] : vector<30x32xf32> to vector<30xf32>
    %218 = vector.shape_cast %217 : vector<30xf32> to vector<30x1xf32>
    %cst_113 = arith.constant 3.200000e+01 : f32
    %219 = vector.broadcast %cst_113 : f32 to vector<30x1xf32>
    %220 = arith.divf %218, %219 : vector<30x1xf32>
    %221 = vector.broadcast %213 : vector<30x1xf32> to vector<30x32xf32>
    %222 = arith.subf %209, %221 : vector<30x32xf32>
    %cst_114 = arith.constant 9.99999997E-7 : f32
    %223 = vector.broadcast %cst_114 : f32 to vector<30x1xf32>
    %224 = arith.addf %220, %223 : vector<30x1xf32>
    %225 = math.rsqrt %224 : vector<30x1xf32>
    %226 = vector.broadcast %225 : vector<30x1xf32> to vector<30x32xf32>
    %227 = arith.mulf %222, %226 : vector<30x32xf32>
    %228 = vector.broadcast %20 : vector<1x32xf32> to vector<30x32xf32>
    %229 = arith.mulf %227, %228 : vector<30x32xf32>
    %230 = vector.broadcast %21 : vector<1x32xf32> to vector<30x32xf32>
    %231 = arith.addf %229, %230 : vector<30x32xf32>
    %cst_115 = arith.constant dense<0.000000e+00> : vector<30x64xf32>
    %232 = tpu.matmul %231, %17, %cst_115 {dimension_numbers = #tpu.dot_dimension_numbers<[1], [0], [0], [1], [0, 0, 1, 1], [], []>} : vector<30x32xf32>, vector<32x64xf32>, vector<30x64xf32> -> vector<30x64xf32>
    %233 = vector.broadcast %22 : vector<1x64xf32> to vector<30x64xf32>
    %234 = arith.addf %232, %233 : vector<30x64xf32>
    %cst_116 = arith.constant 5.000000e-01 : f32
    %235 = vector.broadcast %cst_116 : f32 to vector<30x64xf32>
    %236 = arith.mulf %235, %234 : vector<30x64xf32>
    %cst_117 = arith.constant 4.471500e-02 : f32
    %237 = vector.broadcast %cst_117 : f32 to vector<30x64xf32>
    %238 = arith.mulf %237, %234 : vector<30x64xf32>
    %239 = arith.mulf %238, %234 : vector<30x64xf32>
    %240 = arith.mulf %239, %234 : vector<30x64xf32>
    %241 = arith.addf %234, %240 : vector<30x64xf32>
    %cst_118 = arith.constant 0.797884583 : f32
    %242 = vector.broadcast %cst_118 : f32 to vector<30x64xf32>
    %243 = arith.mulf %242, %241 : vector<30x64xf32>
    %244 = math.tanh %243 : vector<30x64xf32>
    %cst_119 = arith.constant 1.000000e+00 : f32
    %245 = vector.broadcast %cst_119 : f32 to vector<30x64xf32>
    %246 = arith.addf %245, %244 : vector<30x64xf32>
    %247 = arith.mulf %236, %246 : vector<30x64xf32>
    %cst_120 = arith.constant dense<0.000000e+00> : vector<30x32xf32>
    %248 = tpu.matmul %247, %18, %cst_120 {dimension_numbers = #tpu.dot_dimension_numbers<[1], [1], [0], [0], [0, 0, 1, 0], [], []>} : vector<30x64xf32>, vector<32x64xf32>, vector<30x32xf32> -> vector<30x32xf32>
    %249 = vector.broadcast %23 : vector<1x32xf32> to vector<30x32xf32>
    %250 = arith.addf %248, %249 : vector<30x32xf32>
    %251 = arith.addf %250, %231 : vector<30x32xf32>
    %cst_121 = arith.constant dense<0.000000e+00> : vector<30xf32>
    %252 = vector.multi_reduction <add>, %251, %cst_121 [1] : vector<30x32xf32> to vector<30xf32>
    %253 = vector.shape_cast %252 : vector<30xf32> to vector<30x1xf32>
    %cst_122 = arith.constant 3.200000e+01 : f32
    %254 = vector.broadcast %cst_122 : f32 to vector<30x1xf32>
    %255 = arith.divf %253, %254 : vector<30x1xf32>
    %256 = vector.broadcast %255 : vector<30x1xf32> to vector<30x32xf32>
    %257 = arith.subf %251, %256 : vector<30x32xf32>
    %258 = arith.mulf %257, %257 : vector<30x32xf32>
    %cst_123 = arith.constant dense<0.000000e+00> : vector<30xf32>
    %259 = vector.multi_reduction <add>, %258, %cst_123 [1] : vector<30x32xf32> to vector<30xf32>
    %260 = vector.shape_cast %259 : vector<30xf32> to vector<30x1xf32>
    %cst_124 = arith.constant 3.200000e+01 : f32
    %261 = vector.broadcast %cst_124 : f32 to vector<30x1xf32>
    %262 = arith.divf %260, %261 : vector<30x1xf32>
    %263 = vector.broadcast %255 : vector<30x1xf32> to vector<30x32xf32>
    %264 = arith.subf %251, %263 : vector<30x32xf32>
    %cst_125 = arith.constant 9.99999997E-7 : f32
    %265 = vector.broadcast %cst_125 : f32 to vector<30x1xf32>
    %266 = arith.addf %262, %265 : vector<30x1xf32>
    %267 = math.rsqrt %266 : vector<30x1xf32>
    %268 = vector.broadcast %267 : vector<30x1xf32> to vector<30x32xf32>
    %269 = arith.mulf %264, %268 : vector<30x32xf32>
    %270 = vector.broadcast %24 : vector<1x32xf32> to vector<30x32xf32>
    %271 = arith.mulf %269, %270 : vector<30x32xf32>
    %272 = vector.broadcast %25 : vector<1x32xf32> to vector<30x32xf32>
    %273 = arith.addf %271, %272 : vector<30x32xf32>
    %cst_126 = arith.constant dense<0.000000e+00> : vector<30x128xf32>
    %274 = tpu.matmul %273, %26, %cst_126 {dimension_numbers = #tpu.dot_dimension_numbers<[1], [0], [0], [1], [0, 0, 1, 1], [], []>} : vector<30x32xf32>, vector<32x128xf32>, vector<30x128xf32> -> vector<30x128xf32>
    %275 = vector.extract_strided_slice %274 {offsets = [0, 0], sizes = [30, 8], strides = [1, 1]} : vector<30x128xf32> to vector<30x8xf32>
    %cst_127 = arith.constant 0.353553385 : f32
    %276 = vector.broadcast %cst_127 : f32 to vector<30x8xf32>
    %277 = arith.mulf %275, %276 : vector<30x8xf32>
    %278 = vector.extract_strided_slice %274 {offsets = [0, 32], sizes = [30, 8], strides = [1, 1]} : vector<30x128xf32> to vector<30x8xf32>
    %cst_128 = arith.constant dense<0.000000e+00> : vector<30x30xf32>
    %279 = tpu.matmul %277, %278, %cst_128 {dimension_numbers = #tpu.dot_dimension_numbers<[1], [1], [0], [0], [0, 0, 1, 0], [], []>} : vector<30x8xf32>, vector<30x8xf32>, vector<30x30xf32> -> vector<30x30xf32>
    %280 = arith.addf %279, %14 : vector<30x30xf32>
    %281 = vector.extract_strided_slice %274 {offsets = [0, 8], sizes = [30, 8], strides = [1, 1]} : vector<30x128xf32> to vector<30x8xf32>
    %cst_129 = arith.constant 0.353553385 : f32
    %282 = vector.broadcast %cst_129 : f32 to vector<30x8xf32>
    %283 = arith.mulf %281, %282 : vector<30x8xf32>
    %284 = vector.extract_strided_slice %274 {offsets = [0, 40], sizes = [30, 8], strides = [1, 1]} : vector<30x128xf32> to vector<30x8xf32>
    %cst_130 = arith.constant dense<0.000000e+00> : vector<30x30xf32>
    %285 = tpu.matmul %283, %284, %cst_130 {dimension_numbers = #tpu.dot_dimension_numbers<[1], [1], [0], [0], [0, 0, 1, 0], [], []>} : vector<30x8xf32>, vector<30x8xf32>, vector<30x30xf32> -> vector<30x30xf32>
    %286 = arith.addf %285, %14 : vector<30x30xf32>
    %287 = vector.extract_strided_slice %274 {offsets = [0, 16], sizes = [30, 8], strides = [1, 1]} : vector<30x128xf32> to vector<30x8xf32>
    %cst_131 = arith.constant 0.353553385 : f32
    %288 = vector.broadcast %cst_131 : f32 to vector<30x8xf32>
    %289 = arith.mulf %287, %288 : vector<30x8xf32>
    %290 = vector.extract_strided_slice %274 {offsets = [0, 48], sizes = [30, 8], strides = [1, 1]} : vector<30x128xf32> to vector<30x8xf32>
    %cst_132 = arith.constant dense<0.000000e+00> : vector<30x30xf32>
    %291 = tpu.matmul %289, %290, %cst_132 {dimension_numbers = #tpu.dot_dimension_numbers<[1], [1], [0], [0], [0, 0, 1, 0], [], []>} : vector<30x8xf32>, vector<30x8xf32>, vector<30x30xf32> -> vector<30x30xf32>
    %292 = arith.addf %291, %14 : vector<30x30xf32>
    %293 = vector.extract_strided_slice %274 {offsets = [0, 24], sizes = [30, 8], strides = [1, 1]} : vector<30x128xf32> to vector<30x8xf32>
    %cst_133 = arith.constant 0.353553385 : f32
    %294 = vector.broadcast %cst_133 : f32 to vector<30x8xf32>
    %295 = arith.mulf %293, %294 : vector<30x8xf32>
    %296 = vector.extract_strided_slice %274 {offsets = [0, 56], sizes = [30, 8], strides = [1, 1]} : vector<30x128xf32> to vector<30x8xf32>
    %cst_134 = arith.constant dense<0.000000e+00> : vector<30x30xf32>
    %297 = tpu.matmul %295, %296, %cst_134 {dimension_numbers = #tpu.dot_dimension_numbers<[1], [1], [0], [0], [0, 0, 1, 0], [], []>} : vector<30x8xf32>, vector<30x8xf32>, vector<30x30xf32> -> vector<30x30xf32>
    %298 = arith.addf %297, %14 : vector<30x30xf32>
    %299 = vector.shape_cast %280 : vector<30x30xf32> to vector<1x30x30xf32>
    %300 = vector.shape_cast %286 : vector<30x30xf32> to vector<1x30x30xf32>
    %301 = vector.shape_cast %292 : vector<30x30xf32> to vector<1x30x30xf32>
    %302 = vector.shape_cast %298 : vector<30x30xf32> to vector<1x30x30xf32>
    %303 = tpu.concatenate %299, %300, %301, %302 in 0 : vector<1x30x30xf32>, vector<1x30x30xf32>, vector<1x30x30xf32>, vector<1x30x30xf32> -> vector<4x30x30xf32>
    %cst_135 = arith.constant dense<0xFF800000> : vector<4x30xf32>
    %304 = vector.multi_reduction <maximumf>, %303, %cst_135 [2] : vector<4x30x30xf32> to vector<4x30xf32>
    %305 = vector.shape_cast %304 : vector<4x30xf32> to vector<4x30x1xf32>
    %306 = vector.broadcast %305 : vector<4x30x1xf32> to vector<4x30x30xf32>
    %307 = arith.subf %303, %306 : vector<4x30x30xf32>
    %308 = math.exp %307 : vector<4x30x30xf32>
    %cst_136 = arith.constant dense<0.000000e+00> : vector<4x30xf32>
    %309 = vector.multi_reduction <add>, %308, %cst_136 [2] : vector<4x30x30xf32> to vector<4x30xf32>
    %310 = vector.shape_cast %309 : vector<4x30xf32> to vector<4x30x1xf32>
    %311 = vector.broadcast %310 : vector<4x30x1xf32> to vector<4x30x30xf32>
    %312 = arith.divf %308, %311 : vector<4x30x30xf32>
    %313 = vector.extract_strided_slice %312 {offsets = [0, 0, 0], sizes = [1, 30, 30], strides = [1, 1, 1]} : vector<4x30x30xf32> to vector<1x30x30xf32>
    %314 = vector.shape_cast %313 : vector<1x30x30xf32> to vector<30x30xf32>
    %315 = vector.extract_strided_slice %274 {offsets = [0, 64], sizes = [30, 8], strides = [1, 1]} : vector<30x128xf32> to vector<30x8xf32>
    %cst_137 = arith.constant dense<0.000000e+00> : vector<30x8xf32>
    %316 = tpu.matmul %314, %315, %cst_137 {dimension_numbers = #tpu.dot_dimension_numbers<[1], [0], [0], [1], [0, 0, 1, 1], [], []>} : vector<30x30xf32>, vector<30x8xf32>, vector<30x8xf32> -> vector<30x8xf32>
    %317 = vector.extract_strided_slice %312 {offsets = [1, 0, 0], sizes = [1, 30, 30], strides = [1, 1, 1]} : vector<4x30x30xf32> to vector<1x30x30xf32>
    %318 = vector.shape_cast %317 : vector<1x30x30xf32> to vector<30x30xf32>
    %319 = vector.extract_strided_slice %274 {offsets = [0, 72], sizes = [30, 8], strides = [1, 1]} : vector<30x128xf32> to vector<30x8xf32>
    %cst_138 = arith.constant dense<0.000000e+00> : vector<30x8xf32>
    %320 = tpu.matmul %318, %319, %cst_138 {dimension_numbers = #tpu.dot_dimension_numbers<[1], [0], [0], [1], [0, 0, 1, 1], [], []>} : vector<30x30xf32>, vector<30x8xf32>, vector<30x8xf32> -> vector<30x8xf32>
    %321 = vector.extract_strided_slice %312 {offsets = [2, 0, 0], sizes = [1, 30, 30], strides = [1, 1, 1]} : vector<4x30x30xf32> to vector<1x30x30xf32>
    %322 = vector.shape_cast %321 : vector<1x30x30xf32> to vector<30x30xf32>
    %323 = vector.extract_strided_slice %274 {offsets = [0, 80], sizes = [30, 8], strides = [1, 1]} : vector<30x128xf32> to vector<30x8xf32>
    %cst_139 = arith.constant dense<0.000000e+00> : vector<30x8xf32>
    %324 = tpu.matmul %322, %323, %cst_139 {dimension_numbers = #tpu.dot_dimension_numbers<[1], [0], [0], [1], [0, 0, 1, 1], [], []>} : vector<30x30xf32>, vector<30x8xf32>, vector<30x8xf32> -> vector<30x8xf32>
    %325 = vector.extract_strided_slice %312 {offsets = [3, 0, 0], sizes = [1, 30, 30], strides = [1, 1, 1]} : vector<4x30x30xf32> to vector<1x30x30xf32>
    %326 = vector.shape_cast %325 : vector<1x30x30xf32> to vector<30x30xf32>
    %327 = vector.extract_strided_slice %274 {offsets = [0, 88], sizes = [30, 8], strides = [1, 1]} : vector<30x128xf32> to vector<30x8xf32>
    %cst_140 = arith.constant dense<0.000000e+00> : vector<30x8xf32>
    %328 = tpu.matmul %326, %327, %cst_140 {dimension_numbers = #tpu.dot_dimension_numbers<[1], [0], [0], [1], [0, 0, 1, 1], [], []>} : vector<30x30xf32>, vector<30x8xf32>, vector<30x8xf32> -> vector<30x8xf32>
    %329 = tpu.concatenate %316, %320, %324, %328 in 1 : vector<30x8xf32>, vector<30x8xf32>, vector<30x8xf32>, vector<30x8xf32> -> vector<30x32xf32>
    %330 = vector.extract_strided_slice %26 {offsets = [0, 96], sizes = [32, 32], strides = [1, 1]} : vector<32x128xf32> to vector<32x32xf32>
    %cst_141 = arith.constant dense<0.000000e+00> : vector<30x32xf32>
    %331 = tpu.matmul %329, %330, %cst_141 {dimension_numbers = #tpu.dot_dimension_numbers<[1], [0], [0], [1], [0, 0, 1, 1], [], []>} : vector<30x32xf32>, vector<32x32xf32>, vector<30x32xf32> -> vector<30x32xf32>
    %332 = vector.broadcast %29 : vector<1x32xf32> to vector<30x32xf32>
    %333 = arith.addf %331, %332 : vector<30x32xf32>
    %334 = arith.addf %333, %273 : vector<30x32xf32>
    %cst_142 = arith.constant dense<0.000000e+00> : vector<30xf32>
    %335 = vector.multi_reduction <add>, %334, %cst_142 [1] : vector<30x32xf32> to vector<30xf32>
    %336 = vector.shape_cast %335 : vector<30xf32> to vector<30x1xf32>
    %cst_143 = arith.constant 3.200000e+01 : f32
    %337 = vector.broadcast %cst_143 : f32 to vector<30x1xf32>
    %338 = arith.divf %336, %337 : vector<30x1xf32>
    %339 = vector.broadcast %338 : vector<30x1xf32> to vector<30x32xf32>
    %340 = arith.subf %334, %339 : vector<30x32xf32>
    %341 = arith.mulf %340, %340 : vector<30x32xf32>
    %cst_144 = arith.constant dense<0.000000e+00> : vector<30xf32>
    %342 = vector.multi_reduction <add>, %341, %cst_144 [1] : vector<30x32xf32> to vector<30xf32>
    %343 = vector.shape_cast %342 : vector<30xf32> to vector<30x1xf32>
    %cst_145 = arith.constant 3.200000e+01 : f32
    %344 = vector.broadcast %cst_145 : f32 to vector<30x1xf32>
    %345 = arith.divf %343, %344 : vector<30x1xf32>
    %346 = vector.broadcast %338 : vector<30x1xf32> to vector<30x32xf32>
    %347 = arith.subf %334, %346 : vector<30x32xf32>
    %cst_146 = arith.constant 9.99999997E-7 : f32
    %348 = vector.broadcast %cst_146 : f32 to vector<30x1xf32>
    %349 = arith.addf %345, %348 : vector<30x1xf32>
    %350 = math.rsqrt %349 : vector<30x1xf32>
    %351 = vector.broadcast %350 : vector<30x1xf32> to vector<30x32xf32>
    %352 = arith.mulf %347, %351 : vector<30x32xf32>
    %353 = vector.broadcast %30 : vector<1x32xf32> to vector<30x32xf32>
    %354 = arith.mulf %352, %353 : vector<30x32xf32>
    %355 = vector.broadcast %31 : vector<1x32xf32> to vector<30x32xf32>
    %356 = arith.addf %354, %355 : vector<30x32xf32>
    %cst_147 = arith.constant dense<0.000000e+00> : vector<30x64xf32>
    %357 = tpu.matmul %356, %27, %cst_147 {dimension_numbers = #tpu.dot_dimension_numbers<[1], [0], [0], [1], [0, 0, 1, 1], [], []>} : vector<30x32xf32>, vector<32x64xf32>, vector<30x64xf32> -> vector<30x64xf32>
    %358 = vector.broadcast %32 : vector<1x64xf32> to vector<30x64xf32>
    %359 = arith.addf %357, %358 : vector<30x64xf32>
    %cst_148 = arith.constant 5.000000e-01 : f32
    %360 = vector.broadcast %cst_148 : f32 to vector<30x64xf32>
    %361 = arith.mulf %360, %359 : vector<30x64xf32>
    %cst_149 = arith.constant 4.471500e-02 : f32
    %362 = vector.broadcast %cst_149 : f32 to vector<30x64xf32>
    %363 = arith.mulf %362, %359 : vector<30x64xf32>
    %364 = arith.mulf %363, %359 : vector<30x64xf32>
    %365 = arith.mulf %364, %359 : vector<30x64xf32>
    %366 = arith.addf %359, %365 : vector<30x64xf32>
    %cst_150 = arith.constant 0.797884583 : f32
    %367 = vector.broadcast %cst_150 : f32 to vector<30x64xf32>
    %368 = arith.mulf %367, %366 : vector<30x64xf32>
    %369 = math.tanh %368 : vector<30x64xf32>
    %cst_151 = arith.constant 1.000000e+00 : f32
    %370 = vector.broadcast %cst_151 : f32 to vector<30x64xf32>
    %371 = arith.addf %370, %369 : vector<30x64xf32>
    %372 = arith.mulf %361, %371 : vector<30x64xf32>
    %cst_152 = arith.constant dense<0.000000e+00> : vector<30x32xf32>
    %373 = tpu.matmul %372, %28, %cst_152 {dimension_numbers = #tpu.dot_dimension_numbers<[1], [1], [0], [0], [0, 0, 1, 0], [], []>} : vector<30x64xf32>, vector<32x64xf32>, vector<30x32xf32> -> vector<30x32xf32>
    %374 = vector.broadcast %33 : vector<1x32xf32> to vector<30x32xf32>
    %375 = arith.addf %373, %374 : vector<30x32xf32>
    %376 = arith.addf %375, %356 : vector<30x32xf32>
    %cst_153 = arith.constant dense<0.000000e+00> : vector<30xf32>
    %377 = vector.multi_reduction <add>, %376, %cst_153 [1] : vector<30x32xf32> to vector<30xf32>
    %378 = vector.shape_cast %377 : vector<30xf32> to vector<30x1xf32>
    %cst_154 = arith.constant 3.200000e+01 : f32
    %379 = vector.broadcast %cst_154 : f32 to vector<30x1xf32>
    %380 = arith.divf %378, %379 : vector<30x1xf32>
    %381 = vector.broadcast %380 : vector<30x1xf32> to vector<30x32xf32>
    %382 = arith.subf %376, %381 : vector<30x32xf32>
    %383 = arith.mulf %382, %382 : vector<30x32xf32>
    %cst_155 = arith.constant dense<0.000000e+00> : vector<30xf32>
    %384 = vector.multi_reduction <add>, %383, %cst_155 [1] : vector<30x32xf32> to vector<30xf32>
    %385 = vector.shape_cast %384 : vector<30xf32> to vector<30x1xf32>
    %cst_156 = arith.constant 3.200000e+01 : f32
    %386 = vector.broadcast %cst_156 : f32 to vector<30x1xf32>
    %387 = arith.divf %385, %386 : vector<30x1xf32>
    %388 = vector.broadcast %380 : vector<30x1xf32> to vector<30x32xf32>
    %389 = arith.subf %376, %388 : vector<30x32xf32>
    %cst_157 = arith.constant 9.99999997E-7 : f32
    %390 = vector.broadcast %cst_157 : f32 to vector<30x1xf32>
    %391 = arith.addf %387, %390 : vector<30x1xf32>
    %392 = math.rsqrt %391 : vector<30x1xf32>
    %393 = vector.broadcast %392 : vector<30x1xf32> to vector<30x32xf32>
    %394 = arith.mulf %389, %393 : vector<30x32xf32>
    %395 = vector.broadcast %34 : vector<1x32xf32> to vector<30x32xf32>
    %396 = arith.mulf %394, %395 : vector<30x32xf32>
    %397 = vector.broadcast %35 : vector<1x32xf32> to vector<30x32xf32>
    %398 = arith.addf %396, %397 : vector<30x32xf32>
    %399 = vector.extract_strided_slice %398 {offsets = [15, 0], sizes = [1, 32], strides = [1, 1]} : vector<30x32xf32> to vector<1x32xf32>
    %400 = vector.extract_strided_slice %398 {offsets = [23, 0], sizes = [1, 32], strides = [1, 1]} : vector<30x32xf32> to vector<1x32xf32>
    %401 = vector.extract_strided_slice %398 {offsets = [27, 0], sizes = [1, 32], strides = [1, 1]} : vector<30x32xf32> to vector<1x32xf32>
    %402 = vector.extract_strided_slice %398 {offsets = [29, 0], sizes = [1, 32], strides = [1, 1]} : vector<30x32xf32> to vector<1x32xf32>
    %403 = tpu.concatenate %399, %400, %401, %402 in 1 : vector<1x32xf32>, vector<1x32xf32>, vector<1x32xf32>, vector<1x32xf32> -> vector<1x128xf32>
    %cst_158 = arith.constant dense<0.000000e+00> : vector<1x16xf32>
    %404 = tpu.matmul %403, %15, %cst_158 {dimension_numbers = #tpu.dot_dimension_numbers<[1], [1], [0], [0], [0, 0, 1, 0], [], []>} : vector<1x128xf32>, vector<16x128xf32>, vector<1x16xf32> -> vector<1x16xf32>
    %c0_159 = arith.constant 0 : index
    %c0_160 = arith.constant 0 : index
    %c0_161 = arith.constant 0 : index
    %405 = vector.load %arg3[%c0_159, %c0_160, %c0_161] : memref<1x1x16xf32, #tpu.memory_space<vmem>>, vector<1x1x16xf32>
    %406 = vector.shape_cast %405 : vector<1x1x16xf32> to vector<1x16xf32>
    %407 = vector.shape_cast %404 : vector<1x16xf32> to vector<1x1x16xf32>
    tpu.vector_store %arg3[%c0_159, %c0_160, %c0_161], %407 {strides = array<i32>} : memref<1x1x16xf32, #tpu.memory_space<vmem>>, vector<1x1x16xf32>,
    return
  }
  func.func @transform_0(%arg0: i32) -> (i32, i32, i32) {
    %c0_i32 = arith.constant 0 : i32
    %c0_i32_0 = arith.constant 0 : i32
    %c0_i32_1 = arith.constant 0 : i32
    return %arg0, %c0_i32, %c0_i32_0 : i32, i32, i32
  }
  func.func @transform_1(%arg0: i32) -> (i32, i32) {
    %c0_i32 = arith.constant 0 : i32
    %c0_i32_0 = arith.constant 0 : i32
    %c0_i32_1 = arith.constant 0 : i32
    return %c0_i32, %c0_i32_0 : i32, i32
  }
  func.func @transform_2(%arg0: i32) -> (i32, i32, i32) {
    %c0_i32 = arith.constant 0 : i32
    %c0_i32_0 = arith.constant 0 : i32
    %c0_i32_1 = arith.constant 0 : i32
    return %arg0, %c0_i32, %c0_i32_0 : i32, i32, i32
  }
}

</mosaic_0001>

<llo_original>
// kernel: pyraformer_fc_forward.1
$region0: #{pyraformer_fc_forward.1}
  #allocation0 [shape = 'u32[]', space=smem, size = 0x4, offset = 0x4, fixed_abs, tag = 'smem constant byte address 0x4 - core index']
  #allocation1 [shape = 'u32[144,128]{1,0:T(1,128)}', space=vmem, size = 0x12000, scoped, tag = 'internal scratch']
  #allocation2 [shape = 'f32[30,16]{1,0:T(8,128)}', space=vmem, size = 0x4000, scoped, tag = 'scratch operand']
  #allocation3 [shape = 'f32[30,32]{1,0:T(8,128)}', space=vmem, size = 0x4000, scoped, tag = 'scratch operand']
  %s0 = inlined_call_operand.vmem [shape: f32[2,16,16], index: 0, kind: input, shape index: {}]
  %s1 = inlined_call_operand.vmem [shape: f32[248,128], index: 1, kind: input, shape index: {}]
  %s2 = inlined_call_operand.vmem [shape: f32[2,1,16], index: 2, kind: output, shape index: {}]
  %s3 = sld [smem:[#allocation0]]
  $region41: #{pyraformer_fc_forward.1} parent=0
    _
  %s5 = ssub.s32 1, %s3
  %s6 = scalar_select 0, %s5, %s3
  loop: start=0, step=1, limit=4
  $region2: #{pyraformer_fc_forward.1} parent=0 // loop_pre_header
    _
  $region3: #{pyraformer_fc_forward.1} parent=0 // loop_header
    %s8 = sphi 0, %s12
    %p9 = scmp.ge.s32.totalorder %s8, 4
    %s18 = sphi 0, %s20
    %s21 = sphi 0, %s18
    %s22 = sphi 0, %s21
    %s38 = sphi 0, %s22
    %s42 = sphi 0, %s42
    %s44 = sphi 0, %s42
    %s45 = sphi 0, %s44
    %s59 = sphi 0, %s45
    %s65 = sphi 0, %s67
    %s68 = sphi 0, %s65
    %s69 = sphi 0, %s68
    %s85 = sphi 0, %s69
  $region4: #{pyraformer_fc_forward.1} parent=0 // loop_header_branch
    %11 = sbr.rel (%p9) target = $region8
  $region5: #{pyraformer_fc_forward.1} parent=0 // loop_body
    %s13 = ssub.s32 %s8, 1
    %s14 = ssub.s32 %s8, 2
    %s15 = sadd.s32 %s8, 1
    %s16 = ssub.s32 %s8, %s15
    %p17 = scmp.eq.s32.totalorder %s16, 0
    %s19 = sadd.s32 %s18, 1
    %s20 = scalar_select %p17, %s18, %s19
    %p23 = pneg %p17
    %p24 = scmp.eq.s32.totalorder %s8, 1
    %p25 = por %p23, %p24
    %p26 = scmp.ne.s32.totalorder %s18, %s21
    %p27 = scmp.eq.s32.totalorder %s8, 0
    %p28 = por %p26, %p27
    %p29 = scmp.ne.s32.totalorder %s18, %s21
    %p30 = scmp.eq.s32.totalorder %s13, 1
    %p31 = por %p29, %p30
    %p32 = scmp.ne.s32.totalorder %s21, %s22
    %p33 = scmp.eq.s32.totalorder %s13, 0
    %p34 = por %p32, %p33
    %p35 = scmp.ne.s32.totalorder %s21, %s22
    %p36 = scmp.eq.s32.totalorder %s14, 1
    %p37 = por %p35, %p36
    %p39 = scmp.ne.s32.totalorder %s22, %s38
    %p40 = scmp.eq.s32.totalorder %s14, 0
    %p41 = por %p39, %p40
    %s43 = sadd.s32 %s42, 1
    %p46 = scmp.eq.s32.totalorder %s8, 1
    %p47 = scmp.ne.s32.totalorder %s42, %s44
    %p48 = scmp.eq.s32.totalorder %s8, 0
    %p49 = por %p47, %p48
    %p50 = scmp.ne.s32.totalorder %s42, %s44
    %p51 = scmp.eq.s32.totalorder %s13, 1
    %p52 = por %p50, %p51
    %p53 = scmp.ne.s32.totalorder %s44, %s45
    %p54 = scmp.eq.s32.totalorder %s13, 0
    %p55 = por %p53, %p54
    %p56 = scmp.ne.s32.totalorder %s44, %s45
    %p57 = scmp.eq.s32.totalorder %s14, 1
    %p58 = por %p56, %p57
    %p60 = scmp.ne.s32.totalorder %s45, %s59
    %p61 = scmp.eq.s32.totalorder %s14, 0
    %p62 = por %p60, %p61
    %s63 = ssub.s32 %s8, %s15
    %p64 = scmp.eq.s32.totalorder %s63, 0
    %s66 = sadd.s32 %s65, 1
    %s67 = scalar_select %p64, %s65, %s66
    %p70 = pneg %p64
    %p71 = scmp.eq.s32.totalorder %s8, 1
    %p72 = por %p70, %p71
    %p73 = scmp.ne.s32.totalorder %s65, %s68
    %p74 = scmp.eq.s32.totalorder %s8, 0
    %p75 = por %p73, %p74
    %p76 = scmp.ne.s32.totalorder %s65, %s68
    %p77 = scmp.eq.s32.totalorder %s13, 1
    %p78 = por %p76, %p77
    %p79 = scmp.ne.s32.totalorder %s68, %s69
    %p80 = scmp.eq.s32.totalorder %s13, 0
    %p81 = por %p79, %p80
    %p82 = scmp.ne.s32.totalorder %s68, %s69
    %p83 = scmp.eq.s32.totalorder %s14, 1
    %p84 = por %p82, %p83
    %p86 = scmp.ne.s32.totalorder %s69, %s85
    %p87 = scmp.eq.s32.totalorder %s14, 0
    %p88 = por %p86, %p87
    %p89 = scmp.le.s32.totalorder 1, %s8
    %p90 = scmp.lt.s32.totalorder %s8, 3
    %p91 = pnand %p89, %p90
    %p92 = pneg %p91
    // Predicated region
    $region9: #{pyraformer_fc_forward.1} parent=5 // pred_check
      _
    $region10: #{pyraformer_fc_forward.1} parent=5 // pred_check_branch
      %94 = sbr.rel (%p91) target = $region12
    $region11: #{pyraformer_fc_forward.1} parent=5 // pred_region
      %s95 = ssub.s32 %s8, 1
      // Predicated region
      $region13: #{pyraformer_fc_forward.1} parent=11 // pred_check
        %p96 = pneg %p55
      $region14: #{pyraformer_fc_forward.1} parent=11 // pred_check_branch
        %98 = sbr.rel (%p96) target = $region16
      $region15: #{pyraformer_fc_forward.1} parent=11 // pred_region
        _
      $region16: #{pyraformer_fc_forward.1} parent=11 // pred_fallthru
        _
    $region12: #{pyraformer_fc_forward.1} parent=5 // pred_fallthru
      _
    %p99 = scmp.lt.s32.totalorder %s8, 2
    // Predicated region
    $region17: #{pyraformer_fc_forward.1} parent=5 // pred_check
      %p100 = pneg %p99
    $region18: #{pyraformer_fc_forward.1} parent=5 // pred_check_branch
      %102 = sbr.rel (%p100) target = $region20
    $region19: #{pyraformer_fc_forward.1} parent=5 // pred_region
      // Predicated region
      $region21: #{pyraformer_fc_forward.1} parent=19 // pred_check
        %p103 = pneg %p28
      $region22: #{pyraformer_fc_forward.1} parent=19 // pred_check_branch
        %105 = sbr.rel (%p103) target = $region24
      $region23: #{pyraformer_fc_forward.1} parent=19 // pred_region
        %p106 = scmp.lt.s32.totalorder %s8, 1
        %s107 = scalar_select %p106, %s8, 1
        %s108 = smul.addr %s107, 2
        %s109 = smul.addr %s108, 8
        %s110 = scalar_lea.vmem %s0, %s109
      $region24: #{pyraformer_fc_forward.1} parent=19 // pred_fallthru
        _
    $region20: #{pyraformer_fc_forward.1} parent=5 // pred_fallthru
      _
    %p111 = scmp.le.s32.totalorder 1, %s8
    %p112 = scmp.lt.s32.totalorder %s8, 3
    %p113 = pnand %p111, %p112
    %p114 = pneg %p113
    // Predicated region
    $region25: #{pyraformer_fc_forward.1} parent=5 // pred_check
      _
    $region26: #{pyraformer_fc_forward.1} parent=5 // pred_check_branch
      %116 = sbr.rel (%p113) target = $region28
    $region27: #{pyraformer_fc_forward.1} parent=5 // pred_region
      %s117 = ssub.s32 %s8, 1
      %p118 = scmp.lt.s32.totalorder %s13, 1
      %s119 = scalar_select %p118, %s13, 1
      %s120 = smul.addr %s119, 2
      %s121 = smul.addr %s120, 8
      %s122 = scalar_lea.vmem %s0, %s121
      %p123 = pneg %p34
      %p124 = pneg %p31
      %p125 = pneg %p55
      %p126 = pneg %p52
      %p127 = pneg %p81
      %p128 = pneg %p78
      %p129 = scmp.lt.s32.totalorder %s13, 1
      %s130 = scalar_select %p129, %s13, 1
      %s131 = scalar_lea.vmem %s2, %s130
      %p132 = scmp.lt.s32.totalorder %s13, 1
      %s133 = scalar_select %p132, %s13, 1
      %s134 = smul.addr %s133, 2
      %s135 = smul.addr %s134, 8
      %s136 = scalar_lea.vmem %s0, %s135
      %p137 = scmp.lt.s32.totalorder %s13, 1
      %s138 = scalar_select %p137, %s13, 1
      %s139 = scalar_lea.vmem %s2, %s138
      %v140 = vld [vmem:[%s1 + $0x90] sm:$0xff]
      %v141 = vld [vmem:[%s1 + $0x98] sm:$0xff]
      %v142 = vld [vmem:[%s1 + $0xa0] sm:$0xff]
      %v143 = vld [vmem:[%s1 + $0xa8] sm:$0xff]
      %v144 = vld [vmem:[%s1 + $0xb0] sm:$0xff]
      %v145 = vld [vmem:[%s1 + $0xb8] sm:$0xff]
      %v146 = vld [vmem:[%s1 + $0xe1] sm:$0x1]
      %v147 = vld [vmem:[%s1 + $0xe2] sm:$0x1]
      %v148 = vld [vmem:[%s1 + $0xe3] sm:$0x1]
      %v149 = vld [vmem:[%s1 + $0xe0] sm:$0x1]
      %v150 = vld [vmem:[%s1 + $0xe4] sm:$0x1]
      %v151 = vld [vmem:[%s1 + $0xe5] sm:$0x1]
      %v152 = vld [vmem:[%s1 + $0xe6] sm:$0x1]
      %v153 = vld [vmem:[%s1 + $0xc0] sm:$0xff]
      %v154 = vld [vmem:[%s1 + $0xc8] sm:$0xff]
      %v155 = vld [vmem:[%s1 + $0xd0] sm:$0xff]
      %v156 = vld [vmem:[%s1 + $0xd8] sm:$0x3f]
      %v157 = vld [vmem:[%s1 + $0x80] sm:$0xff]
      %v158 = vld [vmem:[%s1 + $0x88] sm:$0xff]
      %v159 = vld [vmem:[%s1] sm:$0xff]
      %v160 = vld [vmem:[%s1 + $0x8] sm:$0xff]
      %v161 = vld [vmem:[%s1 + $0x10] sm:$0xff]
      %v162 = vld [vmem:[%s1 + $0x18] sm:$0xff]
      %v163 = vld [vmem:[%s1 + $0x40] sm:$0xff]
      %v164 = vld [vmem:[%s1 + $0x48] sm:$0xff]
      %v165 = vld [vmem:[%s1 + $0x50] sm:$0xff]
      %v166 = vld [vmem:[%s1 + $0x58] sm:$0xff]
      %v167 = vld [vmem:[%s1 + $0x60] sm:$0xff]
      %v168 = vld [vmem:[%s1 + $0x68] sm:$0xff]
      %v169 = vld [vmem:[%s1 + $0x70] sm:$0xff]
      %v170 = vld [vmem:[%s1 + $0x78] sm:$0xff]
      %v171 = vld [vmem:[%s1 + $0xe7] sm:$0x1]
      %v172 = vld [vmem:[%s1 + $0xe8] sm:$0x1]
      %v173 = vld [vmem:[%s1 + $0xe9] sm:$0x1]
      %v174 = vld [vmem:[%s1 + $0xea] sm:$0x1]
      %v175 = vld [vmem:[%s1 + $0xeb] sm:$0x1]
      %v176 = vld [vmem:[%s1 + $0xec] sm:$0x1]
      %v177 = vld [vmem:[%s1 + $0xed] sm:$0x1]
      %v178 = vld [vmem:[%s1 + $0x20] sm:$0xff]
      %v179 = vld [vmem:[%s1 + $0x28] sm:$0xff]
      %v180 = vld [vmem:[%s1 + $0x30] sm:$0xff]
      %v181 = vld [vmem:[%s1 + $0x38] sm:$0xff]
      %v182 = vld [vmem:[%s1 + $0xee] sm:$0x1]
      %v183 = vld [vmem:[%s1 + $0xef] sm:$0x1]
      %v184 = vld [vmem:[%s1 + $0xf0] sm:$0x1]
      %v185 = vld [vmem:[%s1 + $0xf1] sm:$0x1]
      %v186 = vld [vmem:[%s1 + $0xf2] sm:$0x1]
      %v187 = vld [vmem:[%s1 + $0xf3] sm:$0x1]
      %v188 = vld [vmem:[%s1 + $0xf4] sm:$0x1]
      %v189 = vld [vmem:[%s136] sm:$0xff]
      %v190 = vld [vmem:[%s136 + $0x8] sm:$0xff]
      %193 = vrot.lane.b32.xlu0 %v140, 96
      %v194 = vpop.permute.xlu0 %193
      %195 = vrot.lane.b32.xlu0 %v141, 96
      %v196 = vpop.permute.xlu0 %195
      %vm199 = vcmask 130048
      %v201 = vsel %vm199, %v189, 0
      %v204 = vsel %vm199, %v190, 0
      %206 = vmatprep.subr.mxu0 0.0
      %207 = vmatpush1.msra.mxu0 0.0
      %208 = vmatprep.subr.mxu0 0.0
      %209 = vmatpush1.msra.mxu0 0.0
      %210 = vmatprep.subr.mxu0 0.0
      %211 = vmatpush1.msra.mxu0 0.0
      %212 = vmatprep.subr.mxu0 0.0
      %213 = vmatpush1.msra.mxu0 0.0
      %214 = vmatprep.subr.mxu0 0.0
      %215 = vmatpush1.msra.mxu0 0.0
      %216 = vmatprep.subr.mxu0 0.0
      %217 = vmatpush1.msra.mxu0 0.0
      %218 = vmatprep.subr.mxu0 0.0
      %219 = vmatpush1.msra.mxu0 0.0
      %220 = vmatprep.subr.mxu0 0.0
      %221 = vmatpush1.msra.mxu0 0.0
      %222 = vmatprep.subr.mxu0 0.0
      %223 = vmatpush1.msra.mxu0 0.0
      %224 = vmatprep.subr.mxu0 0.0
      %225 = vmatpush1.msra.mxu0 0.0
      %226 = vmatprep.subr.mxu0 0.0
      %227 = vmatpush1.msra.mxu0 0.0
      %228 = vmatprep.subr.mxu0 0.0
      %229 = vmatpush1.msra.mxu0 0.0
      %230 = vmatprep.subr.mxu0 0.0
      %231 = vmatpush1.msra.mxu0 0.0
      %232 = vmatprep.subr.mxu0 0.0
      %233 = vmatpush1.msra.mxu0 0.0
      %234 = vmatprep.subr.mxu0 0.0
      %235 = vmatpush1.msra.mxu0 %v141
      %236 = vmatprep.subr.mxu0 0.0
      %237 = vmatpush1.msra.mxu0 %v140
      %238 = vmatprep.subr.mxu0 0.0
      %239 = vmatpush2.msra.mxu0 0.0
      %240 = vmatprep.subr.mxu0 0.0
      %241 = vmatpush2.msra.mxu0 0.0
      %242 = vmatprep.subr.mxu0 0.0
      %243 = vmatpush2.msra.mxu0 0.0
      %244 = vmatprep.subr.mxu0 0.0
      %245 = vmatpush2.msra.mxu0 0.0
      %246 = vmatprep.subr.mxu0 0.0
      %247 = vmatpush2.msra.mxu0 0.0
      %248 = vmatprep.subr.mxu0 0.0
      %249 = vmatpush2.msra.mxu0 0.0
      %250 = vmatprep.subr.mxu0 0.0
      %251 = vmatpush2.msra.mxu0 0.0
      %252 = vmatprep.subr.mxu0 0.0
      %253 = vmatpush2.msra.mxu0 0.0
      %254 = vmatprep.subr.mxu0 0.0
      %255 = vmatpush2.msra.mxu0 0.0
      %256 = vmatprep.subr.mxu0 0.0
      %257 = vmatpush2.msra.mxu0 0.0
      %258 = vmatprep.subr.mxu0 0.0
      %259 = vmatpush2.msra.mxu0 0.0
      %260 = vmatprep.subr.mxu0 0.0
      %261 = vmatpush2.msra.mxu0 0.0
      %262 = vmatprep.subr.mxu0 0.0
      %263 = vmatpush2.msra.mxu0 0.0
      %264 = vmatprep.subr.mxu0 0.0
      %265 = vmatpush2.msra.mxu0 0.0
      %266 = vmatprep.subr.mxu0 0.0
      %267 = vmatpush2.msra.mxu0 0.0
      %268 = vmatprep.subr.mxu0 0.0
      %269 = vmatpush2.msra.mxu0 0.0
      %270 = vmatprep.mubr.f32.mxu0 0.0
      %271 = vmatmul.mubr.f32.gmra.mxu0 %v201
      %v272 = vpop.f32.mrf.mxu0
      %v273 = vadd.f32 %v194, %v272
      %v274 = vpop.f32.mrf.mxu0
      %275 = vmatprep.mubr.f32.mxu0 0.0
      %276 = vmatmul.mubr.f32.gmra.mxu0 %v204
      %v277 = vpop.f32.mrf.mxu0
      %v278 = vadd.f32 %v196, %v277
      %v279 = vpop.f32.mrf.mxu0
      %280 = vdwg.mxu0
      %v281 = vlaneseq
      %v282 = vshrl.u32 %v281, 7
      %v283 = vsub.s32 0, %v282
      %v284 = vrot.slane %v149, %v283
      %vm285 = vcmask 261120
      %v287 = vsel %vm285, %v273, 0
      %v290 = vsel %vm285, %v278, 0
      %292 = vmatprep.subr.mxu0 0.0
      %293 = vmatpush1.msra.mxu0 0.0
      %294 = vmatprep.subr.mxu0 0.0
      %295 = vmatpush1.msra.mxu0 0.0
      %296 = vmatprep.subr.mxu0 0.0
      %297 = vmatpush1.msra.mxu0 0.0
      %298 = vmatprep.subr.mxu0 0.0
      %299 = vmatpush1.msra.mxu0 0.0
      %300 = vmatprep.subr.mxu0 0.0
      %301 = vmatpush1.msra.mxu0 0.0
      %302 = vmatprep.subr.mxu0 0.0
      %303 = vmatpush1.msra.mxu0 0.0
      %304 = vmatprep.subr.mxu0 0.0
      %305 = vmatpush1.msra.mxu0 0.0
      %306 = vmatprep.subr.mxu0 0.0
      %307 = vmatpush1.msra.mxu0 0.0
      %308 = vmatprep.subr.mxu0 0.0
      %309 = vmatpush1.msra.mxu0 0.0
      %310 = vmatprep.subr.mxu0 0.0
      %311 = vmatpush1.msra.mxu0 0.0
      %312 = vmatprep.subr.mxu0 0.0
      %313 = vmatpush1.msra.mxu0 0.0
      %314 = vmatprep.subr.mxu0 0.0
      %315 = vmatpush1.msra.mxu0 0.0
      %316 = vmatprep.subr.mxu0 0.0
      %317 = vmatpush1.msra.mxu0 %v145
      %318 = vmatprep.subr.mxu0 0.0
      %319 = vmatpush1.msra.mxu0 %v144
      %320 = vmatprep.subr.mxu0 0.0
      %321 = vmatpush1.msra.mxu0 %v143
      %322 = vmatprep.subr.mxu0 0.0
      %323 = vmatpush1.msra.mxu0 %v142
      %324 = vmatprep.subr.mxu0 0.0
      %325 = vmatpush2.msra.mxu0 0.0
      %326 = vmatprep.subr.mxu0 0.0
      %327 = vmatpush2.msra.mxu0 0.0
      %328 = vmatprep.subr.mxu0 0.0
      %329 = vmatpush2.msra.mxu0 0.0
      %330 = vmatprep.subr.mxu0 0.0
      %331 = vmatpush2.msra.mxu0 0.0
      %332 = vmatprep.subr.mxu0 0.0
      %333 = vmatpush2.msra.mxu0 0.0
      %334 = vmatprep.subr.mxu0 0.0
      %335 = vmatpush2.msra.mxu0 0.0
      %336 = vmatprep.subr.mxu0 0.0
      %337 = vmatpush2.msra.mxu0 0.0
      %338 = vmatprep.subr.mxu0 0.0
      %339 = vmatpush2.msra.mxu0 0.0
      %340 = vmatprep.subr.mxu0 0.0
      %341 = vmatpush2.msra.mxu0 0.0
      %342 = vmatprep.subr.mxu0 0.0
      %343 = vmatpush2.msra.mxu0 0.0
      %344 = vmatprep.subr.mxu0 0.0
      %345 = vmatpush2.msra.mxu0 0.0
      %346 = vmatprep.subr.mxu0 0.0
      %347 = vmatpush2.msra.mxu0 0.0
      %348 = vmatprep.subr.mxu0 0.0
      %349 = vmatpush2.msra.mxu0 0.0
      %350 = vmatprep.subr.mxu0 0.0
      %351 = vmatpush2.msra.mxu0 0.0
      %352 = vmatprep.subr.mxu0 0.0
      %353 = vmatpush2.msra.mxu0 0.0
      %354 = vmatprep.subr.mxu0 0.0
      %355 = vmatpush2.msra.mxu0 0.0
      %356 = vmatprep.mubr.f32.mxu0 0.0
      %357 = vmatmul.mubr.f32.gmra.mxu0 %v287
      %v358 = vpop.f32.mrf.mxu0
      %v359 = vadd.f32 %v284, %v358
      %v360 = vpop.f32.mrf.mxu0
      %361 = vmatprep.mubr.f32.mxu0 0.0
      %362 = vmatmul.mubr.f32.gmra.mxu0 %v290
      %v363 = vpop.f32.mrf.mxu0
      %v364 = vadd.f32 %v284, %v363
      %v365 = vpop.f32.mrf.mxu0
      %366 = vdwg.mxu0
      %367 = vst.msk [vmem:[#allocation2] sm:$0xff] %vm199, %v359
      %368 = vst.msk [vmem:[#allocation2 + $0x8] sm:$0xff] %vm199, %v364
      %v369 = vld [vmem:[#allocation2] ss:$2 sm:$0xff]
      %372 = vrot.lane.b32.xlu0 %v142, 112
      %v373 = vpop.permute.xlu0 %372
      %374 = vrot.lane.b32.xlu0 %v143, 112
      %v375 = vpop.permute.xlu0 %374
      %v379 = vsel %vm199, %v369, 0
      %381 = vmatprep.subr.mxu0 0.0
      %382 = vmatpush1.msra.mxu0 0.0
      %383 = vmatprep.subr.mxu0 0.0
      %384 = vmatpush1.msra.mxu0 0.0
      %385 = vmatprep.subr.mxu0 0.0
      %386 = vmatpush1.msra.mxu0 0.0
      %387 = vmatprep.subr.mxu0 0.0
      %388 = vmatpush1.msra.mxu0 0.0
      %389 = vmatprep.subr.mxu0 0.0
      %390 = vmatpush1.msra.mxu0 0.0
      %391 = vmatprep.subr.mxu0 0.0
      %392 = vmatpush1.msra.mxu0 0.0
      %393 = vmatprep.subr.mxu0 0.0
      %394 = vmatpush1.msra.mxu0 0.0
      %395 = vmatprep.subr.mxu0 0.0
      %396 = vmatpush1.msra.mxu0 0.0
      %397 = vmatprep.subr.mxu0 0.0
      %398 = vmatpush1.msra.mxu0 0.0
      %399 = vmatprep.subr.mxu0 0.0
      %400 = vmatpush1.msra.mxu0 0.0
      %401 = vmatprep.subr.mxu0 0.0
      %402 = vmatpush1.msra.mxu0 0.0
      %403 = vmatprep.subr.mxu0 0.0
      %404 = vmatpush1.msra.mxu0 0.0
      %405 = vmatprep.subr.mxu0 0.0
      %406 = vmatpush1.msra.mxu0 0.0
      %407 = vmatprep.subr.mxu0 0.0
      %408 = vmatpush1.msra.mxu0 0.0
      %409 = vmatprep.subr.mxu0 0.0
      %410 = vmatpush1.msra.mxu0 %v375
      %411 = vmatprep.subr.mxu0 0.0
      %412 = vmatpush1.msra.mxu0 %v373
      %413 = vmatprep.subr.mxu0 0.0
      %414 = vmatpush2.msra.mxu0 0.0
      %415 = vmatprep.subr.mxu0 0.0
      %416 = vmatpush2.msra.mxu0 0.0
      %417 = vmatprep.subr.mxu0 0.0
      %418 = vmatpush2.msra.mxu0 0.0
      %419 = vmatprep.subr.mxu0 0.0
      %420 = vmatpush2.msra.mxu0 0.0
      %421 = vmatprep.subr.mxu0 0.0
      %422 = vmatpush2.msra.mxu0 0.0
      %423 = vmatprep.subr.mxu0 0.0
      %424 = vmatpush2.msra.mxu0 0.0
      %425 = vmatprep.subr.mxu0 0.0
      %426 = vmatpush2.msra.mxu0 0.0
      %427 = vmatprep.subr.mxu0 0.0
      %428 = vmatpush2.msra.mxu0 0.0
      %429 = vmatprep.subr.mxu0 0.0
      %430 = vmatpush2.msra.mxu0 0.0
      %431 = vmatprep.subr.mxu0 0.0
      %432 = vmatpush2.msra.mxu0 0.0
      %433 = vmatprep.subr.mxu0 0.0
      %434 = vmatpush2.msra.mxu0 0.0
      %435 = vmatprep.subr.mxu0 0.0
      %436 = vmatpush2.msra.mxu0 0.0
      %437 = vmatprep.subr.mxu0 0.0
      %438 = vmatpush2.msra.mxu0 0.0
      %439 = vmatprep.subr.mxu0 0.0
      %440 = vmatpush2.msra.mxu0 0.0
      %441 = vmatprep.subr.mxu0 0.0
      %442 = vmatpush2.msra.mxu0 0.0
      %443 = vmatprep.subr.mxu0 0.0
      %444 = vmatpush2.msra.mxu0 0.0
      %445 = vmatprep.mubr.f32.mxu0 0.0
      %446 = vmatmul.mubr.f32.gmra.mxu0 %v379
      %v447 = vpop.f32.mrf.mxu0
      %v448 = vadd.f32 0.0, %v447
      %v449 = vpop.f32.mrf.mxu0
      %450 = vdwg.mxu0
      %v451 = vlaneseq
      %v452 = vshrl.u32 %v451, 7
      %v453 = vsub.s32 0, %v452
      %v454 = vrot.slane %v146, %v453
      %v455 = vadd.f32 %v454, %v448
      %s456 = scalar_lea.vmem [#allocation2], 1
      %v457 = vld [vmem:[%s456] ss:$2 sm:$0xff]
      %460 = vrot.lane.b32.xlu0 %v144, 112
      %v461 = vpop.permute.xlu0 %460
      %462 = vrot.lane.b32.xlu0 %v145, 112
      %v463 = vpop.permute.xlu0 %462
      %v467 = vsel %vm199, %v457, 0
      %469 = vmatprep.subr.mxu0 0.0
      %470 = vmatpush1.msra.mxu0 0.0
      %471 = vmatprep.subr.mxu0 0.0
      %472 = vmatpush1.msra.mxu0 0.0
      %473 = vmatprep.subr.mxu0 0.0
      %474 = vmatpush1.msra.mxu0 0.0
      %475 = vmatprep.subr.mxu0 0.0
      %476 = vmatpush1.msra.mxu0 0.0
      %477 = vmatprep.subr.mxu0 0.0
      %478 = vmatpush1.msra.mxu0 0.0
      %479 = vmatprep.subr.mxu0 0.0
      %480 = vmatpush1.msra.mxu0 0.0
      %481 = vmatprep.subr.mxu0 0.0
      %482 = vmatpush1.msra.mxu0 0.0
      %483 = vmatprep.subr.mxu0 0.0
      %484 = vmatpush1.msra.mxu0 0.0
      %485 = vmatprep.subr.mxu0 0.0
      %486 = vmatpush1.msra.mxu0 0.0
      %487 = vmatprep.subr.mxu0 0.0
      %488 = vmatpush1.msra.mxu0 0.0
      %489 = vmatprep.subr.mxu0 0.0
      %490 = vmatpush1.msra.mxu0 0.0
      %491 = vmatprep.subr.mxu0 0.0
      %492 = vmatpush1.msra.mxu0 0.0
      %493 = vmatprep.subr.mxu0 0.0
      %494 = vmatpush1.msra.mxu0 0.0
      %495 = vmatprep.subr.mxu0 0.0
      %496 = vmatpush1.msra.mxu0 0.0
      %497 = vmatprep.subr.mxu0 0.0
      %498 = vmatpush1.msra.mxu0 %v463
      %499 = vmatprep.subr.mxu0 0.0
      %500 = vmatpush1.msra.mxu0 %v461
      %501 = vmatprep.subr.mxu0 0.0
      %502 = vmatpush2.msra.mxu0 0.0
      %503 = vmatprep.subr.mxu0 0.0
      %504 = vmatpush2.msra.mxu0 0.0
      %505 = vmatprep.subr.mxu0 0.0
      %506 = vmatpush2.msra.mxu0 0.0
      %507 = vmatprep.subr.mxu0 0.0
      %508 = vmatpush2.msra.mxu0 0.0
      %509 = vmatprep.subr.mxu0 0.0
      %510 = vmatpush2.msra.mxu0 0.0
      %511 = vmatprep.subr.mxu0 0.0
      %512 = vmatpush2.msra.mxu0 0.0
      %513 = vmatprep.subr.mxu0 0.0
      %514 = vmatpush2.msra.mxu0 0.0
      %515 = vmatprep.subr.mxu0 0.0
      %516 = vmatpush2.msra.mxu0 0.0
      %517 = vmatprep.subr.mxu0 0.0
      %518 = vmatpush2.msra.mxu0 0.0
      %519 = vmatprep.subr.mxu0 0.0
      %520 = vmatpush2.msra.mxu0 0.0
      %521 = vmatprep.subr.mxu0 0.0
      %522 = vmatpush2.msra.mxu0 0.0
      %523 = vmatprep.subr.mxu0 0.0
      %524 = vmatpush2.msra.mxu0 0.0
      %525 = vmatprep.subr.mxu0 0.0
      %526 = vmatpush2.msra.mxu0 0.0
      %527 = vmatprep.subr.mxu0 0.0
      %528 = vmatpush2.msra.mxu0 0.0
      %529 = vmatprep.subr.mxu0 0.0
      %530 = vmatpush2.msra.mxu0 0.0
      %531 = vmatprep.subr.mxu0 0.0
      %532 = vmatpush2.msra.mxu0 0.0
      %533 = vmatprep.mubr.f32.mxu0 0.0
      %534 = vmatmul.mubr.f32.gmra.mxu0 %v467
      %v535 = vpop.f32.mrf.mxu0
      %v536 = vadd.f32 0.0, %v535
      %v537 = vpop.f32.mrf.mxu0
      %538 = vdwg.mxu0
      %v539 = vadd.f32 %v455, %v536
      %vm540 = vcmp.gt.f32.partialorder %v539, 0.0
      %v541 = vmin.f32 %v539, 0.0
      %v542 = vmul.f32 %v541, 1.442695
      %v543 = vpow.pop %v542
      %v544 = vsub.f32 %v543, 1.0
      %v545 = vsel %vm540, %v539, %v544
      %546 = vst.msk [vmem:[#allocation2 + $0x10] sm:$0xff] %vm199, %v545
      %s547 = scalar_lea.vmem [#allocation2], 16
      %v548 = vld [vmem:[%s547] ss:$2 sm:$0xf]
      %549 = vrot.lane.b32.xlu0 %v142, 96
      %v550 = vpop.permute.xlu0 %549
      %551 = vrot.lane.b32.xlu0 %v143, 96
      %v552 = vpop.permute.xlu0 %551
      %v556 = vsel %vm199, %v548, 0
      %558 = vmatprep.subr.mxu0 0.0
      %559 = vmatpush1.msra.mxu0 0.0
      %560 = vmatprep.subr.mxu0 0.0
      %561 = vmatpush1.msra.mxu0 0.0
      %562 = vmatprep.subr.mxu0 0.0
      %563 = vmatpush1.msra.mxu0 0.0
      %564 = vmatprep.subr.mxu0 0.0
      %565 = vmatpush1.msra.mxu0 0.0
      %566 = vmatprep.subr.mxu0 0.0
      %567 = vmatpush1.msra.mxu0 0.0
      %568 = vmatprep.subr.mxu0 0.0
      %569 = vmatpush1.msra.mxu0 0.0
      %570 = vmatprep.subr.mxu0 0.0
      %571 = vmatpush1.msra.mxu0 0.0
      %572 = vmatprep.subr.mxu0 0.0
      %573 = vmatpush1.msra.mxu0 0.0
      %574 = vmatprep.subr.mxu0 0.0
      %575 = vmatpush1.msra.mxu0 0.0
      %576 = vmatprep.subr.mxu0 0.0
      %577 = vmatpush1.msra.mxu0 0.0
      %578 = vmatprep.subr.mxu0 0.0
      %579 = vmatpush1.msra.mxu0 0.0
      %580 = vmatprep.subr.mxu0 0.0
      %581 = vmatpush1.msra.mxu0 0.0
      %582 = vmatprep.subr.mxu0 0.0
      %583 = vmatpush1.msra.mxu0 0.0
      %584 = vmatprep.subr.mxu0 0.0
      %585 = vmatpush1.msra.mxu0 0.0
      %586 = vmatprep.subr.mxu0 0.0
      %587 = vmatpush1.msra.mxu0 %v552
      %588 = vmatprep.subr.mxu0 0.0
      %589 = vmatpush1.msra.mxu0 %v550
      %590 = vmatprep.subr.mxu0 0.0
      %591 = vmatpush2.msra.mxu0 0.0
      %592 = vmatprep.subr.mxu0 0.0
      %593 = vmatpush2.msra.mxu0 0.0
      %594 = vmatprep.subr.mxu0 0.0
      %595 = vmatpush2.msra.mxu0 0.0
      %596 = vmatprep.subr.mxu0 0.0
      %597 = vmatpush2.msra.mxu0 0.0
      %598 = vmatprep.subr.mxu0 0.0
      %599 = vmatpush2.msra.mxu0 0.0
      %600 = vmatprep.subr.mxu0 0.0
      %601 = vmatpush2.msra.mxu0 0.0
      %602 = vmatprep.subr.mxu0 0.0
      %603 = vmatpush2.msra.mxu0 0.0
      %604 = vmatprep.subr.mxu0 0.0
      %605 = vmatpush2.msra.mxu0 0.0
      %606 = vmatprep.subr.mxu0 0.0
      %607 = vmatpush2.msra.mxu0 0.0
      %608 = vmatprep.subr.mxu0 0.0
      %609 = vmatpush2.msra.mxu0 0.0
      %610 = vmatprep.subr.mxu0 0.0
      %611 = vmatpush2.msra.mxu0 0.0
      %612 = vmatprep.subr.mxu0 0.0
      %613 = vmatpush2.msra.mxu0 0.0
      %614 = vmatprep.subr.mxu0 0.0
      %615 = vmatpush2.msra.mxu0 0.0
      %616 = vmatprep.subr.mxu0 0.0
      %617 = vmatpush2.msra.mxu0 0.0
      %618 = vmatprep.subr.mxu0 0.0
      %619 = vmatpush2.msra.mxu0 0.0
      %620 = vmatprep.subr.mxu0 0.0
      %621 = vmatpush2.msra.mxu0 0.0
      %622 = vmatprep.mubr.f32.mxu0 0.0
      %623 = vmatmul.mubr.f32.gmra.mxu0 %v556
      %v624 = vpop.f32.mrf.mxu0
      %v625 = vadd.f32 0.0, %v624
      %v626 = vpop.f32.mrf.mxu0
      %627 = vdwg.mxu0
      %v628 = vlaneseq
      %v629 = vshrl.u32 %v628, 7
      %v630 = vsub.s32 0, %v629
      %v631 = vrot.slane %v147, %v630
      %v632 = vadd.f32 %v631, %v625
      %s633 = scalar_lea.vmem [#allocation2], 17
      %v634 = vld [vmem:[%s633] ss:$2 sm:$0xf]
      %635 = vrot.lane.b32.xlu0 %v144, 96
      %v636 = vpop.permute.xlu0 %635
      %637 = vrot.lane.b32.xlu0 %v145, 96
      %v638 = vpop.permute.xlu0 %637
      %v642 = vsel %vm199, %v634, 0
      %644 = vmatprep.subr.mxu0 0.0
      %645 = vmatpush1.msra.mxu0 0.0
      %646 = vmatprep.subr.mxu0 0.0
      %647 = vmatpush1.msra.mxu0 0.0
      %648 = vmatprep.subr.mxu0 0.0
      %649 = vmatpush1.msra.mxu0 0.0
      %650 = vmatprep.subr.mxu0 0.0
      %651 = vmatpush1.msra.mxu0 0.0
      %652 = vmatprep.subr.mxu0 0.0
      %653 = vmatpush1.msra.mxu0 0.0
      %654 = vmatprep.subr.mxu0 0.0
      %655 = vmatpush1.msra.mxu0 0.0
      %656 = vmatprep.subr.mxu0 0.0
      %657 = vmatpush1.msra.mxu0 0.0
      %658 = vmatprep.subr.mxu0 0.0
      %659 = vmatpush1.msra.mxu0 0.0
      %660 = vmatprep.subr.mxu0 0.0
      %661 = vmatpush1.msra.mxu0 0.0
      %662 = vmatprep.subr.mxu0 0.0
      %663 = vmatpush1.msra.mxu0 0.0
      %664 = vmatprep.subr.mxu0 0.0
      %665 = vmatpush1.msra.mxu0 0.0
      %666 = vmatprep.subr.mxu0 0.0
      %667 = vmatpush1.msra.mxu0 0.0
      %668 = vmatprep.subr.mxu0 0.0
      %669 = vmatpush1.msra.mxu0 0.0
      %670 = vmatprep.subr.mxu0 0.0
      %671 = vmatpush1.msra.mxu0 0.0
      %672 = vmatprep.subr.mxu0 0.0
      %673 = vmatpush1.msra.mxu0 %v638
      %674 = vmatprep.subr.mxu0 0.0
      %675 = vmatpush1.msra.mxu0 %v636
      %676 = vmatprep.subr.mxu0 0.0
      %677 = vmatpush2.msra.mxu0 0.0
      %678 = vmatprep.subr.mxu0 0.0
      %679 = vmatpush2.msra.mxu0 0.0
      %680 = vmatprep.subr.mxu0 0.0
      %681 = vmatpush2.msra.mxu0 0.0
      %682 = vmatprep.subr.mxu0 0.0
      %683 = vmatpush2.msra.mxu0 0.0
      %684 = vmatprep.subr.mxu0 0.0
      %685 = vmatpush2.msra.mxu0 0.0
      %686 = vmatprep.subr.mxu0 0.0
      %687 = vmatpush2.msra.mxu0 0.0
      %688 = vmatprep.subr.mxu0 0.0
      %689 = vmatpush2.msra.mxu0 0.0
      %690 = vmatprep.subr.mxu0 0.0
      %691 = vmatpush2.msra.mxu0 0.0
      %692 = vmatprep.subr.mxu0 0.0
      %693 = vmatpush2.msra.mxu0 0.0
      %694 = vmatprep.subr.mxu0 0.0
      %695 = vmatpush2.msra.mxu0 0.0
      %696 = vmatprep.subr.mxu0 0.0
      %697 = vmatpush2.msra.mxu0 0.0
      %698 = vmatprep.subr.mxu0 0.0
      %699 = vmatpush2.msra.mxu0 0.0
      %700 = vmatprep.subr.mxu0 0.0
      %701 = vmatpush2.msra.mxu0 0.0
      %702 = vmatprep.subr.mxu0 0.0
      %703 = vmatpush2.msra.mxu0 0.0
      %704 = vmatprep.subr.mxu0 0.0
      %705 = vmatpush2.msra.mxu0 0.0
      %706 = vmatprep.subr.mxu0 0.0
      %707 = vmatpush2.msra.mxu0 0.0
      %708 = vmatprep.mubr.f32.mxu0 0.0
      %709 = vmatmul.mubr.f32.gmra.mxu0 %v642
      %v710 = vpop.f32.mrf.mxu0
      %v711 = vadd.f32 0.0, %v710
      %v712 = vpop.f32.mrf.mxu0
      %713 = vdwg.mxu0
      %v714 = vadd.f32 %v632, %v711
      %vm715 = vcmp.gt.f32.partialorder %v714, 0.0
      %v716 = vmin.f32 %v714, 0.0
      %v717 = vmul.f32 %v716, 1.442695
      %v718 = vpow.pop %v717
      %v719 = vsub.f32 %v718, 1.0
      %v720 = vsel %vm715, %v714, %v719
      %vm721 = vcmask 125952
      %722 = vst.msk [vmem:[#allocation2 + $0x18] sm:$0xf] %vm721, %v720
      %s723 = scalar_lea.vmem [#allocation2], 24
      %v724 = vld [vmem:[%s723] ss:$2 sm:$0x3]
      %725 = vrot.lane.b32.xlu0 %v142, 80
      %v726 = vpop.permute.xlu0 %725
      %727 = vrot.lane.b32.xlu0 %v143, 80
      %v728 = vpop.permute.xlu0 %727
      %v732 = vsel %vm199, %v724, 0
      %734 = vmatprep.subr.mxu0 0.0
      %735 = vmatpush1.msra.mxu0 0.0
      %736 = vmatprep.subr.mxu0 0.0
      %737 = vmatpush1.msra.mxu0 0.0
      %738 = vmatprep.subr.mxu0 0.0
      %739 = vmatpush1.msra.mxu0 0.0
      %740 = vmatprep.subr.mxu0 0.0
      %741 = vmatpush1.msra.mxu0 0.0
      %742 = vmatprep.subr.mxu0 0.0
      %743 = vmatpush1.msra.mxu0 0.0
      %744 = vmatprep.subr.mxu0 0.0
      %745 = vmatpush1.msra.mxu0 0.0
      %746 = vmatprep.subr.mxu0 0.0
      %747 = vmatpush1.msra.mxu0 0.0
      %748 = vmatprep.subr.mxu0 0.0
      %749 = vmatpush1.msra.mxu0 0.0
      %750 = vmatprep.subr.mxu0 0.0
      %751 = vmatpush1.msra.mxu0 0.0
      %752 = vmatprep.subr.mxu0 0.0
      %753 = vmatpush1.msra.mxu0 0.0
      %754 = vmatprep.subr.mxu0 0.0
      %755 = vmatpush1.msra.mxu0 0.0
      %756 = vmatprep.subr.mxu0 0.0
      %757 = vmatpush1.msra.mxu0 0.0
      %758 = vmatprep.subr.mxu0 0.0
      %759 = vmatpush1.msra.mxu0 0.0
      %760 = vmatprep.subr.mxu0 0.0
      %761 = vmatpush1.msra.mxu0 0.0
      %762 = vmatprep.subr.mxu0 0.0
      %763 = vmatpush1.msra.mxu0 %v728
      %764 = vmatprep.subr.mxu0 0.0
      %765 = vmatpush1.msra.mxu0 %v726
      %766 = vmatprep.subr.mxu0 0.0
      %767 = vmatpush2.msra.mxu0 0.0
      %768 = vmatprep.subr.mxu0 0.0
      %769 = vmatpush2.msra.mxu0 0.0
      %770 = vmatprep.subr.mxu0 0.0
      %771 = vmatpush2.msra.mxu0 0.0
      %772 = vmatprep.subr.mxu0 0.0
      %773 = vmatpush2.msra.mxu0 0.0
      %774 = vmatprep.subr.mxu0 0.0
      %775 = vmatpush2.msra.mxu0 0.0
      %776 = vmatprep.subr.mxu0 0.0
      %777 = vmatpush2.msra.mxu0 0.0
      %778 = vmatprep.subr.mxu0 0.0
      %779 = vmatpush2.msra.mxu0 0.0
      %780 = vmatprep.subr.mxu0 0.0
      %781 = vmatpush2.msra.mxu0 0.0
      %782 = vmatprep.subr.mxu0 0.0
      %783 = vmatpush2.msra.mxu0 0.0
      %784 = vmatprep.subr.mxu0 0.0
      %785 = vmatpush2.msra.mxu0 0.0
      %786 = vmatprep.subr.mxu0 0.0
      %787 = vmatpush2.msra.mxu0 0.0
      %788 = vmatprep.subr.mxu0 0.0
      %789 = vmatpush2.msra.mxu0 0.0
      %790 = vmatprep.subr.mxu0 0.0
      %791 = vmatpush2.msra.mxu0 0.0
      %792 = vmatprep.subr.mxu0 0.0
      %793 = vmatpush2.msra.mxu0 0.0
      %794 = vmatprep.subr.mxu0 0.0
      %795 = vmatpush2.msra.mxu0 0.0
      %796 = vmatprep.subr.mxu0 0.0
      %797 = vmatpush2.msra.mxu0 0.0
      %798 = vmatprep.mubr.f32.mxu0 0.0
      %799 = vmatmul.mubr.f32.gmra.mxu0 %v732
      %v800 = vpop.f32.mrf.mxu0
      %v801 = vadd.f32 0.0, %v800
      %v802 = vpop.f32.mrf.mxu0
      %803 = vdwg.mxu0
      %v804 = vlaneseq
      %v805 = vshrl.u32 %v804, 7
      %v806 = vsub.s32 0, %v805
      %v807 = vrot.slane %v148, %v806
      %v808 = vadd.f32 %v807, %v801
      %s809 = scalar_lea.vmem [#allocation2], 25
      %v810 = vld [vmem:[%s809] ss:$2 sm:$0x3]
      %811 = vrot.lane.b32.xlu0 %v144, 80
      %v812 = vpop.permute.xlu0 %811
      %813 = vrot.lane.b32.xlu0 %v145, 80
      %v814 = vpop.permute.xlu0 %813
      %v818 = vsel %vm199, %v810, 0
      %820 = vmatprep.subr.mxu0 0.0
      %821 = vmatpush1.msra.mxu0 0.0
      %822 = vmatprep.subr.mxu0 0.0
      %823 = vmatpush1.msra.mxu0 0.0
      %824 = vmatprep.subr.mxu0 0.0
      %825 = vmatpush1.msra.mxu0 0.0
      %826 = vmatprep.subr.mxu0 0.0
      %827 = vmatpush1.msra.mxu0 0.0
      %828 = vmatprep.subr.mxu0 0.0
      %829 = vmatpush1.msra.mxu0 0.0
      %830 = vmatprep.subr.mxu0 0.0
      %831 = vmatpush1.msra.mxu0 0.0
      %832 = vmatprep.subr.mxu0 0.0
      %833 = vmatpush1.msra.mxu0 0.0
      %834 = vmatprep.subr.mxu0 0.0
      %835 = vmatpush1.msra.mxu0 0.0
      %836 = vmatprep.subr.mxu0 0.0
      %837 = vmatpush1.msra.mxu0 0.0
      %838 = vmatprep.subr.mxu0 0.0
      %839 = vmatpush1.msra.mxu0 0.0
      %840 = vmatprep.subr.mxu0 0.0
      %841 = vmatpush1.msra.mxu0 0.0
      %842 = vmatprep.subr.mxu0 0.0
      %843 = vmatpush1.msra.mxu0 0.0
      %844 = vmatprep.subr.mxu0 0.0
      %845 = vmatpush1.msra.mxu0 0.0
      %846 = vmatprep.subr.mxu0 0.0
      %847 = vmatpush1.msra.mxu0 0.0
      %848 = vmatprep.subr.mxu0 0.0
      %849 = vmatpush1.msra.mxu0 %v814
      %850 = vmatprep.subr.mxu0 0.0
      %851 = vmatpush1.msra.mxu0 %v812
      %852 = vmatprep.subr.mxu0 0.0
      %853 = vmatpush2.msra.mxu0 0.0
      %854 = vmatprep.subr.mxu0 0.0
      %855 = vmatpush2.msra.mxu0 0.0
      %856 = vmatprep.subr.mxu0 0.0
      %857 = vmatpush2.msra.mxu0 0.0
      %858 = vmatprep.subr.mxu0 0.0
      %859 = vmatpush2.msra.mxu0 0.0
      %860 = vmatprep.subr.mxu0 0.0
      %861 = vmatpush2.msra.mxu0 0.0
      %862 = vmatprep.subr.mxu0 0.0
      %863 = vmatpush2.msra.mxu0 0.0
      %864 = vmatprep.subr.mxu0 0.0
      %865 = vmatpush2.msra.mxu0 0.0
      %866 = vmatprep.subr.mxu0 0.0
      %867 = vmatpush2.msra.mxu0 0.0
      %868 = vmatprep.subr.mxu0 0.0
      %869 = vmatpush2.msra.mxu0 0.0
      %870 = vmatprep.subr.mxu0 0.0
      %871 = vmatpush2.msra.mxu0 0.0
      %872 = vmatprep.subr.mxu0 0.0
      %873 = vmatpush2.msra.mxu0 0.0
      %874 = vmatprep.subr.mxu0 0.0
      %875 = vmatpush2.msra.mxu0 0.0
      %876 = vmatprep.subr.mxu0 0.0
      %877 = vmatpush2.msra.mxu0 0.0
      %878 = vmatprep.subr.mxu0 0.0
      %879 = vmatpush2.msra.mxu0 0.0
      %880 = vmatprep.subr.mxu0 0.0
      %881 = vmatpush2.msra.mxu0 0.0
      %882 = vmatprep.subr.mxu0 0.0
      %883 = vmatpush2.msra.mxu0 0.0
      %884 = vmatprep.mubr.f32.mxu0 0.0
      %885 = vmatmul.mubr.f32.gmra.mxu0 %v818
      %v886 = vpop.f32.mrf.mxu0
      %v887 = vadd.f32 0.0, %v886
      %v888 = vpop.f32.mrf.mxu0
      %889 = vdwg.mxu0
      %v890 = vadd.f32 %v808, %v887
      %vm891 = vcmp.gt.f32.partialorder %v890, 0.0
      %v892 = vmin.f32 %v890, 0.0
      %v893 = vmul.f32 %v892, 1.442695
      %v894 = vpow.pop %v893
      %v895 = vsub.f32 %v894, 1.0
      %v896 = vsel %vm891, %v890, %v895
      %vm897 = vcmask 123904
      %898 = vst.msk [vmem:[#allocation2 + $0x1c] sm:$0x3] %vm897, %v896
      %v899 = vld [vmem:[#allocation2 + $0x10] sm:$0xff]
      %v900 = vld [vmem:[#allocation2 + $0x18] sm:$0x3f]
      %v901 = vlaneseq
      %v902 = vshrl.u32 %v901, 7
      %v903 = vsub.s32 0, %v902
      %v904 = vrot.slane %v150, %v903
      %905 = vrot.lane.b32.xlu0 %v140, 64
      %v906 = vpop.permute.xlu0 %905
      %907 = vrot.lane.b32.xlu0 %v141, 64
      %v908 = vpop.permute.xlu0 %907
      %v912 = vsel %vm199, %v899, 0
      %v915 = vsel %vm199, %v900, 0
      %917 = vmatprep.subr.mxu0 0.0
      %918 = vmatpush1.msra.mxu0 0.0
      %919 = vmatprep.subr.mxu0 0.0
      %920 = vmatpush1.msra.mxu0 0.0
      %921 = vmatprep.subr.mxu0 0.0
      %922 = vmatpush1.msra.mxu0 0.0
      %923 = vmatprep.subr.mxu0 0.0
      %924 = vmatpush1.msra.mxu0 0.0
      %925 = vmatprep.subr.mxu0 0.0
      %926 = vmatpush1.msra.mxu0 0.0
      %927 = vmatprep.subr.mxu0 0.0
      %928 = vmatpush1.msra.mxu0 0.0
      %929 = vmatprep.subr.mxu0 0.0
      %930 = vmatpush1.msra.mxu0 0.0
      %931 = vmatprep.subr.mxu0 0.0
      %932 = vmatpush1.msra.mxu0 0.0
      %933 = vmatprep.subr.mxu0 0.0
      %934 = vmatpush1.msra.mxu0 0.0
      %935 = vmatprep.subr.mxu0 0.0
      %936 = vmatpush1.msra.mxu0 0.0
      %937 = vmatprep.subr.mxu0 0.0
      %938 = vmatpush1.msra.mxu0 0.0
      %939 = vmatprep.subr.mxu0 0.0
      %940 = vmatpush1.msra.mxu0 0.0
      %941 = vmatprep.subr.mxu0 0.0
      %942 = vmatpush1.msra.mxu0 0.0
      %943 = vmatprep.subr.mxu0 0.0
      %944 = vmatpush1.msra.mxu0 0.0
      %945 = vmatprep.subr.mxu0 0.0
      %946 = vmatpush1.msra.mxu0 %v908
      %947 = vmatprep.subr.mxu0 0.0
      %948 = vmatpush1.msra.mxu0 %v906
      %949 = vmatprep.subr.mxu0 0.0
      %950 = vmatpush2.msra.mxu0 0.0
      %951 = vmatprep.subr.mxu0 0.0
      %952 = vmatpush2.msra.mxu0 0.0
      %953 = vmatprep.subr.mxu0 0.0
      %954 = vmatpush2.msra.mxu0 0.0
      %955 = vmatprep.subr.mxu0 0.0
      %956 = vmatpush2.msra.mxu0 0.0
      %957 = vmatprep.subr.mxu0 0.0
      %958 = vmatpush2.msra.mxu0 0.0
      %959 = vmatprep.subr.mxu0 0.0
      %960 = vmatpush2.msra.mxu0 0.0
      %961 = vmatprep.subr.mxu0 0.0
      %962 = vmatpush2.msra.mxu0 0.0
      %963 = vmatprep.subr.mxu0 0.0
      %964 = vmatpush2.msra.mxu0 0.0
      %965 = vmatprep.subr.mxu0 0.0
      %966 = vmatpush2.msra.mxu0 0.0
      %967 = vmatprep.subr.mxu0 0.0
      %968 = vmatpush2.msra.mxu0 0.0
      %969 = vmatprep.subr.mxu0 0.0
      %970 = vmatpush2.msra.mxu0 0.0
      %971 = vmatprep.subr.mxu0 0.0
      %972 = vmatpush2.msra.mxu0 0.0
      %973 = vmatprep.subr.mxu0 0.0
      %974 = vmatpush2.msra.mxu0 0.0
      %975 = vmatprep.subr.mxu0 0.0
      %976 = vmatpush2.msra.mxu0 0.0
      %977 = vmatprep.subr.mxu0 0.0
      %978 = vmatpush2.msra.mxu0 0.0
      %979 = vmatprep.subr.mxu0 0.0
      %980 = vmatpush2.msra.mxu0 0.0
      %981 = vmatprep.mubr.f32.mxu0 0.0
      %982 = vmatmul.mubr.f32.gmra.mxu0 %v912
      %v983 = vpop.f32.mrf.mxu0
      %v984 = vadd.f32 %v904, %v983
      %v985 = vpop.f32.mrf.mxu0
      %986 = vmatprep.mubr.f32.mxu0 0.0
      %987 = vmatmul.mubr.f32.gmra.mxu0 %v915
      %v988 = vpop.f32.mrf.mxu0
      %v989 = vadd.f32 %v904, %v988
      %v990 = vpop.f32.mrf.mxu0
      %991 = vdwg.mxu0
      %v992 = vsel %vm285, %v273, 0.0
      %993 = vadd.xlane.f32.xlu0 %v992
      %v994 = vpop.xlane.xlu0 %993
      %v995 = vsel %vm285, %v278, 0.0
      %996 = vadd.xlane.f32.xlu0 %v995
      %v997 = vpop.xlane.xlu0 %996
      %v998 = vrcp.pop 32.0
      %v999 = vmul.f32 %v994, %v998
      %v1000 = vmul.f32 %v997, %v998
      %v1001 = vsub.f32 %v273, %v999
      %v1002 = vsub.f32 %v278, %v1000
      %v1003 = vmul.f32 %v1001, %v1001
      %v1004 = vmul.f32 %v1002, %v1002
      %v1005 = vsel %vm285, %v1003, 0.0
      %1006 = vadd.xlane.f32.xlu0 %v1005
      %v1007 = vpop.xlane.xlu0 %1006
      %v1008 = vsel %vm285, %v1004, 0.0
      %1009 = vadd.xlane.f32.xlu0 %v1008
      %v1010 = vpop.xlane.xlu0 %1009
      %v1011 = vmul.f32 %v1007, %v998
      %v1012 = vmul.f32 %v1010, %v998
      %v1013 = vadd.f32 %v1011, 1e-05
      %v1014 = vadd.f32 %v1012, 1e-05
      %v1015 = vrsqrt.pop %v1013
      %v1016 = vrsqrt.pop %v1014
      %v1017 = vmul.f32 %v1001, %v1015
      %v1018 = vmul.f32 %v1002, %v1016
      %v1019 = vlaneseq
      %v1020 = vshrl.u32 %v1019, 7
      %v1021 = vsub.s32 0, %v1020
      %v1022 = vrot.slane %v151, %v1021
      %v1023 = vmul.f32 %v1017, %v1022
      %v1024 = vmul.f32 %v1018, %v1022
      %v1025 = vlaneseq
      %v1026 = vshrl.u32 %v1025, 7
      %v1027 = vsub.s32 0, %v1026
      %v1028 = vrot.slane %v152, %v1027
      %v1029 = vadd.f32 %v1023, %v1028
      %v1030 = vadd.f32 %v1024, %v1028
      %1031 = vst.msk [vmem:[#allocation3] sm:$0xff] %vm285, %v1029
      %1032 = vst.msk [vmem:[#allocation3 + $0x8] sm:$0xff] %vm285, %v1030
      %v1033 = vsel %vm285, %v984, 0.0
      %1034 = vadd.xlane.f32.xlu0 %v1033
      %v1035 = vpop.xlane.xlu0 %1034
      %vm1036 = vcmask 259072
      %v1037 = vsel %vm1036, %v989, 0.0
      %1038 = vadd.xlane.f32.xlu0 %v1037
      %v1039 = vpop.xlane.xlu0 %1038
      %v1040 = vmul.f32 %v1035, %v998
      %v1041 = vmul.f32 %v1039, %v998
      %v1042 = vsub.f32 %v984, %v1040
      %v1043 = vsub.f32 %v989, %v1041
      %v1044 = vmul.f32 %v1042, %v1042
      %v1045 = vmul.f32 %v1043, %v1043
      %v1046 = vsel %vm285, %v1044, 0.0
      %1047 = vadd.xlane.f32.xlu0 %v1046
      %v1048 = vpop.xlane.xlu0 %1047
      %v1049 = vsel %vm1036, %v1045, 0.0
      %1050 = vadd.xlane.f32.xlu0 %v1049
      %v1051 = vpop.xlane.xlu0 %1050
      %v1052 = vmul.f32 %v1048, %v998
      %v1053 = vmul.f32 %v1051, %v998
      %v1054 = vadd.f32 %v1052, 1e-05
      %v1055 = vadd.f32 %v1053, 1e-05
      %v1056 = vrsqrt.pop %v1054
      %v1057 = vrsqrt.pop %v1055
      %v1058 = vmul.f32 %v1042, %v1056
      %v1059 = vmul.f32 %v1043, %v1057
      %v1060 = vmul.f32 %v1058, %v1022
      %v1061 = vmul.f32 %v1059, %v1022
      %v1062 = vadd.f32 %v1060, %v1028
      %v1063 = vadd.f32 %v1061, %v1028
      %1064 = vst.msk [vmem:[#allocation3 + $0x10] sm:$0xff] %vm285, %v1062
      %1065 = vst.msk [vmem:[#allocation3 + $0x18] sm:$0x3f] %vm1036, %v1063
      %v1066 = vld [vmem:[#allocation3] sm:$0xff]
      %v1067 = vld [vmem:[#allocation3 + $0x8] sm:$0xff]
      %v1068 = vld [vmem:[#allocation3 + $0x10] sm:$0xff]
      %v1069 = vld [vmem:[#allocation3 + $0x18] sm:$0x3f]
      %v1071 = vsel %vm285, %v1066, 0
      %v1074 = vsel %vm285, %v1067, 0
      %v1077 = vsel %vm285, %v1068, 0
      %v1080 = vsel %vm285, %v1069, 0
      %1082 = vmatprep.subr.mxu0 0.0
      %1083 = vmatpush1.msra.mxu0 0.0
      %1084 = vmatprep.subr.mxu0 0.0
      %1085 = vmatpush1.msra.mxu0 0.0
      %1086 = vmatprep.subr.mxu0 0.0
      %1087 = vmatpush1.msra.mxu0 0.0
      %1088 = vmatprep.subr.mxu0 0.0
      %1089 = vmatpush1.msra.mxu0 0.0
      %1090 = vmatprep.subr.mxu0 0.0
      %1091 = vmatpush1.msra.mxu0 0.0
      %1092 = vmatprep.subr.mxu0 0.0
      %1093 = vmatpush1.msra.mxu0 0.0
      %1094 = vmatprep.subr.mxu0 0.0
      %1095 = vmatpush1.msra.mxu0 0.0
      %1096 = vmatprep.subr.mxu0 0.0
      %1097 = vmatpush1.msra.mxu0 0.0
      %1098 = vmatprep.subr.mxu0 0.0
      %1099 = vmatpush1.msra.mxu0 0.0
      %1100 = vmatprep.subr.mxu0 0.0
      %1101 = vmatpush1.msra.mxu0 0.0
      %1102 = vmatprep.subr.mxu0 0.0
      %1103 = vmatpush1.msra.mxu0 0.0
      %1104 = vmatprep.subr.mxu0 0.0
      %1105 = vmatpush1.msra.mxu0 0.0
      %1106 = vmatprep.subr.mxu0 0.0
      %1107 = vmatpush1.msra.mxu0 %v162
      %1108 = vmatprep.subr.mxu0 0.0
      %1109 = vmatpush1.msra.mxu0 %v161
      %1110 = vmatprep.subr.mxu0 0.0
      %1111 = vmatpush1.msra.mxu0 %v160
      %1112 = vmatprep.subr.mxu0 0.0
      %1113 = vmatpush1.msra.mxu0 %v159
      %1114 = vmatprep.subr.mxu0 0.0
      %1115 = vmatpush2.msra.mxu0 0.0
      %1116 = vmatprep.subr.mxu0 0.0
      %1117 = vmatpush2.msra.mxu0 0.0
      %1118 = vmatprep.subr.mxu0 0.0
      %1119 = vmatpush2.msra.mxu0 0.0
      %1120 = vmatprep.subr.mxu0 0.0
      %1121 = vmatpush2.msra.mxu0 0.0
      %1122 = vmatprep.subr.mxu0 0.0
      %1123 = vmatpush2.msra.mxu0 0.0
      %1124 = vmatprep.subr.mxu0 0.0
      %1125 = vmatpush2.msra.mxu0 0.0
      %1126 = vmatprep.subr.mxu0 0.0
      %1127 = vmatpush2.msra.mxu0 0.0
      %1128 = vmatprep.subr.mxu0 0.0
      %1129 = vmatpush2.msra.mxu0 0.0
      %1130 = vmatprep.subr.mxu0 0.0
      %1131 = vmatpush2.msra.mxu0 0.0
      %1132 = vmatprep.subr.mxu0 0.0
      %1133 = vmatpush2.msra.mxu0 0.0
      %1134 = vmatprep.subr.mxu0 0.0
      %1135 = vmatpush2.msra.mxu0 0.0
      %1136 = vmatprep.subr.mxu0 0.0
      %1137 = vmatpush2.msra.mxu0 0.0
      %1138 = vmatprep.subr.mxu0 0.0
      %1139 = vmatpush2.msra.mxu0 0.0
      %1140 = vmatprep.subr.mxu0 0.0
      %1141 = vmatpush2.msra.mxu0 0.0
      %1142 = vmatprep.subr.mxu0 0.0
      %1143 = vmatpush2.msra.mxu0 0.0
      %1144 = vmatprep.subr.mxu0 0.0
      %1145 = vmatpush2.msra.mxu0 0.0
      %1146 = vmatprep.mubr.f32.mxu0 0.0
      %1147 = vmatmul.mubr.f32.gmra.mxu0 %v1071
      %v1148 = vpop.f32.mrf.mxu0
      %v1149 = vadd.f32 0.0, %v1148
      %v1150 = vpop.f32.mrf.mxu0
      %1151 = vmatprep.mubr.f32.mxu0 0.0
      %1152 = vmatmul.mubr.f32.gmra.mxu0 %v1074
      %v1153 = vpop.f32.mrf.mxu0
      %v1154 = vadd.f32 0.0, %v1153
      %v1155 = vpop.f32.mrf.mxu0
      %1156 = vmatprep.mubr.f32.mxu0 0.0
      %1157 = vmatmul.mubr.f32.gmra.mxu0 %v1077
      %v1158 = vpop.f32.mrf.mxu0
      %v1159 = vadd.f32 0.0, %v1158
      %v1160 = vpop.f32.mrf.mxu0
      %1161 = vmatprep.mubr.f32.mxu0 0.0
      %1162 = vmatmul.mubr.f32.gmra.mxu0 %v1080
      %v1163 = vpop.f32.mrf.mxu0
      %v1164 = vadd.f32 0.0, %v1163
      %v1165 = vpop.f32.mrf.mxu0
      %1166 = vdwg.mxu0
      %v1167 = vmul.f32 %v1149, 0.35355338
      %v1168 = vmul.f32 %v1154, 0.35355338
      %v1169 = vmul.f32 %v1159, 0.35355338
      %v1170 = vmul.f32 %v1164, 0.35355338
      %1175 = vrot.lane.b32.xlu0 %v1149, 96
      %v1176 = vpop.permute.xlu0 %1175
      %1177 = vrot.lane.b32.xlu0 %v1154, 96
      %v1178 = vpop.permute.xlu0 %1177
      %1179 = vrot.lane.b32.xlu0 %v1159, 96
      %v1180 = vpop.permute.xlu0 %1179
      %1181 = vrot.lane.b32.xlu0 %v1164, 96
      %v1182 = vpop.permute.xlu0 %1181
      %vm1183 = vcmask 64512
      %v1185 = vsel %vm1183, %v1167, 0
      %v1188 = vsel %vm1183, %v1168, 0
      %v1191 = vsel %vm1183, %v1169, 0
      %v1194 = vsel %vm1183, %v1170, 0
      %v1196 = vsel %vm1183, %v1176, 0
      %v1198 = vsel %vm1183, %v1178, 0
      %v1200 = vsel %vm1183, %v1180, 0
      %v1202 = vsel %vm1183, %v1182, 0
      %1204 = vmatprep.subr.mxu0 0.0
      %1205 = vmatpush1.xpose.msra.mxu0 0.0
      %1206 = vmatprep.subr.mxu0 0.0
      %1207 = vmatpush1.xpose.msra.mxu0 0.0
      %1208 = vmatprep.subr.mxu0 0.0
      %1209 = vmatpush1.xpose.msra.mxu0 0.0
      %1210 = vmatprep.subr.mxu0 0.0
      %1211 = vmatpush1.xpose.msra.mxu0 0.0
      %1212 = vmatprep.subr.mxu0 0.0
      %1213 = vmatpush1.xpose.msra.mxu0 0.0
      %1214 = vmatprep.subr.mxu0 0.0
      %1215 = vmatpush1.xpose.msra.mxu0 0.0
      %1216 = vmatprep.subr.mxu0 0.0
      %1217 = vmatpush1.xpose.msra.mxu0 0.0
      %1218 = vmatprep.subr.mxu0 0.0
      %1219 = vmatpush1.xpose.msra.mxu0 0.0
      %1220 = vmatprep.subr.mxu0 0.0
      %1221 = vmatpush1.xpose.msra.mxu0 0.0
      %1222 = vmatprep.subr.mxu0 0.0
      %1223 = vmatpush1.xpose.msra.mxu0 0.0
      %1224 = vmatprep.subr.mxu0 0.0
      %1225 = vmatpush1.xpose.msra.mxu0 0.0
      %1226 = vmatprep.subr.mxu0 0.0
      %1227 = vmatpush1.xpose.msra.mxu0 0.0
      %1228 = vmatprep.subr.mxu0 0.0
      %1229 = vmatpush1.xpose.msra.mxu0 %v1202
      %1230 = vmatprep.subr.mxu0 0.0
      %1231 = vmatpush1.xpose.msra.mxu0 %v1200
      %1232 = vmatprep.subr.mxu0 0.0
      %1233 = vmatpush1.xpose.msra.mxu0 %v1198
      %1234 = vmatprep.subr.mxu0 0.0
      %1235 = vmatpush1.xpose.msra.mxu0 %v1196
      %1236 = vmatprep.subr.mxu0 0.0
      %1237 = vmatpush2.xpose.msra.mxu0 0.0
      %1238 = vmatprep.subr.mxu0 0.0
      %1239 = vmatpush2.xpose.msra.mxu0 0.0
      %1240 = vmatprep.subr.mxu0 0.0
      %1241 = vmatpush2.xpose.msra.mxu0 0.0
      %1242 = vmatprep.subr.mxu0 0.0
      %1243 = vmatpush2.xpose.msra.mxu0 0.0
      %1244 = vmatprep.subr.mxu0 0.0
      %1245 = vmatpush2.xpose.msra.mxu0 0.0
      %1246 = vmatprep.subr.mxu0 0.0
      %1247 = vmatpush2.xpose.msra.mxu0 0.0
      %1248 = vmatprep.subr.mxu0 0.0
      %1249 = vmatpush2.xpose.msra.mxu0 0.0
      %1250 = vmatprep.subr.mxu0 0.0
      %1251 = vmatpush2.xpose.msra.mxu0 0.0
      %1252 = vmatprep.subr.mxu0 0.0
      %1253 = vmatpush2.xpose.msra.mxu0 0.0
      %1254 = vmatprep.subr.mxu0 0.0
      %1255 = vmatpush2.xpose.msra.mxu0 0.0
      %1256 = vmatprep.subr.mxu0 0.0
      %1257 = vmatpush2.xpose.msra.mxu0 0.0
      %1258 = vmatprep.subr.mxu0 0.0
      %1259 = vmatpush2.xpose.msra.mxu0 0.0
      %1260 = vmatprep.subr.mxu0 0.0
      %1261 = vmatpush2.xpose.msra.mxu0 0.0
      %1262 = vmatprep.subr.mxu0 0.0
      %1263 = vmatpush2.xpose.msra.mxu0 0.0
      %1264 = vmatprep.subr.mxu0 0.0
      %1265 = vmatpush2.xpose.msra.mxu0 0.0
      %1266 = vmatprep.subr.mxu0 0.0
      %1267 = vmatpush2.xpose.msra.mxu0 0.0
      %1268 = vmatprep.mubr.f32.mxu0 0.0
      %1269 = vmatmul.mubr.f32.gmra.mxu0 %v1185
      %v1270 = vpop.f32.mrf.mxu0
      %v1271 = vadd.f32 %v153, %v1270
      %v1272 = vpop.f32.mrf.mxu0
      %1273 = vmatprep.mubr.f32.mxu0 0.0
      %1274 = vmatmul.mubr.f32.gmra.mxu0 %v1188
      %v1275 = vpop.f32.mrf.mxu0
      %v1276 = vadd.f32 %v154, %v1275
      %v1277 = vpop.f32.mrf.mxu0
      %1278 = vmatprep.mubr.f32.mxu0 0.0
      %1279 = vmatmul.mubr.f32.gmra.mxu0 %v1191
      %v1280 = vpop.f32.mrf.mxu0
      %v1281 = vadd.f32 %v155, %v1280
      %v1282 = vpop.f32.mrf.mxu0
      %1283 = vmatprep.mubr.f32.mxu0 0.0
      %1284 = vmatmul.mubr.f32.gmra.mxu0 %v1194
      %v1285 = vpop.f32.mrf.mxu0
      %v1286 = vadd.f32 %v156, %v1285
      %v1287 = vpop.f32.mrf.mxu0
      %1288 = vdwg.mxu0
      %1289 = vrot.lane.b32.xlu0 %v1167, 120
      %v1290 = vpop.permute.xlu0 %1289
      %1291 = vrot.lane.b32.xlu0 %v1168, 120
      %v1292 = vpop.permute.xlu0 %1291
      %1293 = vrot.lane.b32.xlu0 %v1169, 120
      %v1294 = vpop.permute.xlu0 %1293
      %1295 = vrot.lane.b32.xlu0 %v1170, 120
      %v1296 = vpop.permute.xlu0 %1295
      %1297 = vrot.lane.b32.xlu0 %v1149, 88
      %v1298 = vpop.permute.xlu0 %1297
      %1299 = vrot.lane.b32.xlu0 %v1154, 88
      %v1300 = vpop.permute.xlu0 %1299
      %1301 = vrot.lane.b32.xlu0 %v1159, 88
      %v1302 = vpop.permute.xlu0 %1301
      %1303 = vrot.lane.b32.xlu0 %v1164, 88
      %v1304 = vpop.permute.xlu0 %1303
      %v1305 = vsel %vm1183, %v1290, 0
      %v1307 = vsel %vm1183, %v1292, 0
      %v1309 = vsel %vm1183, %v1294, 0
      %v1311 = vsel %vm1183, %v1296, 0
      %v1313 = vsel %vm1183, %v1298, 0
      %v1315 = vsel %vm1183, %v1300, 0
      %v1317 = vsel %vm1183, %v1302, 0
      %v1319 = vsel %vm1183, %v1304, 0
      %1321 = vmatprep.subr.mxu0 0.0
      %1322 = vmatpush1.xpose.msra.mxu0 0.0
      %1323 = vmatprep.subr.mxu0 0.0
      %1324 = vmatpush1.xpose.msra.mxu0 0.0
      %1325 = vmatprep.subr.mxu0 0.0
      %1326 = vmatpush1.xpose.msra.mxu0 0.0
      %1327 = vmatprep.subr.mxu0 0.0
      %1328 = vmatpush1.xpose.msra.mxu0 0.0
      %1329 = vmatprep.subr.mxu0 0.0
      %1330 = vmatpush1.xpose.msra.mxu0 0.0
      %1331 = vmatprep.subr.mxu0 0.0
      %1332 = vmatpush1.xpose.msra.mxu0 0.0
      %1333 = vmatprep.subr.mxu0 0.0
      %1334 = vmatpush1.xpose.msra.mxu0 0.0
      %1335 = vmatprep.subr.mxu0 0.0
      %1336 = vmatpush1.xpose.msra.mxu0 0.0
      %1337 = vmatprep.subr.mxu0 0.0
      %1338 = vmatpush1.xpose.msra.mxu0 0.0
      %1339 = vmatprep.subr.mxu0 0.0
      %1340 = vmatpush1.xpose.msra.mxu0 0.0
      %1341 = vmatprep.subr.mxu0 0.0
      %1342 = vmatpush1.xpose.msra.mxu0 0.0
      %1343 = vmatprep.subr.mxu0 0.0
      %1344 = vmatpush1.xpose.msra.mxu0 0.0
      %1345 = vmatprep.subr.mxu0 0.0
      %1346 = vmatpush1.xpose.msra.mxu0 %v1319
      %1347 = vmatprep.subr.mxu0 0.0
      %1348 = vmatpush1.xpose.msra.mxu0 %v1317
      %1349 = vmatprep.subr.mxu0 0.0
      %1350 = vmatpush1.xpose.msra.mxu0 %v1315
      %1351 = vmatprep.subr.mxu0 0.0
      %1352 = vmatpush1.xpose.msra.mxu0 %v1313
      %1353 = vmatprep.subr.mxu0 0.0
      %1354 = vmatpush2.xpose.msra.mxu0 0.0
      %1355 = vmatprep.subr.mxu0 0.0
      %1356 = vmatpush2.xpose.msra.mxu0 0.0
      %1357 = vmatprep.subr.mxu0 0.0
      %1358 = vmatpush2.xpose.msra.mxu0 0.0
      %1359 = vmatprep.subr.mxu0 0.0
      %1360 = vmatpush2.xpose.msra.mxu0 0.0
      %1361 = vmatprep.subr.mxu0 0.0
      %1362 = vmatpush2.xpose.msra.mxu0 0.0
      %1363 = vmatprep.subr.mxu0 0.0
      %1364 = vmatpush2.xpose.msra.mxu0 0.0
      %1365 = vmatprep.subr.mxu0 0.0
      %1366 = vmatpush2.xpose.msra.mxu0 0.0
      %1367 = vmatprep.subr.mxu0 0.0
      %1368 = vmatpush2.xpose.msra.mxu0 0.0
      %1369 = vmatprep.subr.mxu0 0.0
      %1370 = vmatpush2.xpose.msra.mxu0 0.0
      %1371 = vmatprep.subr.mxu0 0.0
      %1372 = vmatpush2.xpose.msra.mxu0 0.0
      %1373 = vmatprep.subr.mxu0 0.0
      %1374 = vmatpush2.xpose.msra.mxu0 0.0
      %1375 = vmatprep.subr.mxu0 0.0
      %1376 = vmatpush2.xpose.msra.mxu0 0.0
      %1377 = vmatprep.subr.mxu0 0.0
      %1378 = vmatpush2.xpose.msra.mxu0 0.0
      %1379 = vmatprep.subr.mxu0 0.0
      %1380 = vmatpush2.xpose.msra.mxu0 0.0
      %1381 = vmatprep.subr.mxu0 0.0
      %1382 = vmatpush2.xpose.msra.mxu0 0.0
      %1383 = vmatprep.subr.mxu0 0.0
      %1384 = vmatpush2.xpose.msra.mxu0 0.0
      %1385 = vmatprep.mubr.f32.mxu0 0.0
      %1386 = vmatmul.mubr.f32.gmra.mxu0 %v1305
      %v1387 = vpop.f32.mrf.mxu0
      %v1388 = vadd.f32 %v153, %v1387
      %v1389 = vpop.f32.mrf.mxu0
      %1390 = vmatprep.mubr.f32.mxu0 0.0
      %1391 = vmatmul.mubr.f32.gmra.mxu0 %v1307
      %v1392 = vpop.f32.mrf.mxu0
      %v1393 = vadd.f32 %v154, %v1392
      %v1394 = vpop.f32.mrf.mxu0
      %1395 = vmatprep.mubr.f32.mxu0 0.0
      %1396 = vmatmul.mubr.f32.gmra.mxu0 %v1309
      %v1397 = vpop.f32.mrf.mxu0
      %v1398 = vadd.f32 %v155, %v1397
      %v1399 = vpop.f32.mrf.mxu0
      %1400 = vmatprep.mubr.f32.mxu0 0.0
      %1401 = vmatmul.mubr.f32.gmra.mxu0 %v1311
      %v1402 = vpop.f32.mrf.mxu0
      %v1403 = vadd.f32 %v156, %v1402
      %v1404 = vpop.f32.mrf.mxu0
      %1405 = vdwg.mxu0
      %1406 = vrot.lane.b32.xlu0 %v1167, 112
      %v1407 = vpop.permute.xlu0 %1406
      %1408 = vrot.lane.b32.xlu0 %v1168, 112
      %v1409 = vpop.permute.xlu0 %1408
      %1410 = vrot.lane.b32.xlu0 %v1169, 112
      %v1411 = vpop.permute.xlu0 %1410
      %1412 = vrot.lane.b32.xlu0 %v1170, 112
      %v1413 = vpop.permute.xlu0 %1412
      %1414 = vrot.lane.b32.xlu0 %v1149, 80
      %v1415 = vpop.permute.xlu0 %1414
      %1416 = vrot.lane.b32.xlu0 %v1154, 80
      %v1417 = vpop.permute.xlu0 %1416
      %1418 = vrot.lane.b32.xlu0 %v1159, 80
      %v1419 = vpop.permute.xlu0 %1418
      %1420 = vrot.lane.b32.xlu0 %v1164, 80
      %v1421 = vpop.permute.xlu0 %1420
      %v1422 = vsel %vm1183, %v1407, 0
      %v1424 = vsel %vm1183, %v1409, 0
      %v1426 = vsel %vm1183, %v1411, 0
      %v1428 = vsel %vm1183, %v1413, 0
      %v1430 = vsel %vm1183, %v1415, 0
      %v1432 = vsel %vm1183, %v1417, 0
      %v1434 = vsel %vm1183, %v1419, 0
      %v1436 = vsel %vm1183, %v1421, 0
      %1438 = vmatprep.subr.mxu0 0.0
      %1439 = vmatpush1.xpose.msra.mxu0 0.0
      %1440 = vmatprep.subr.mxu0 0.0
      %1441 = vmatpush1.xpose.msra.mxu0 0.0
      %1442 = vmatprep.subr.mxu0 0.0
      %1443 = vmatpush1.xpose.msra.mxu0 0.0
      %1444 = vmatprep.subr.mxu0 0.0
      %1445 = vmatpush1.xpose.msra.mxu0 0.0
      %1446 = vmatprep.subr.mxu0 0.0
      %1447 = vmatpush1.xpose.msra.mxu0 0.0
      %1448 = vmatprep.subr.mxu0 0.0
      %1449 = vmatpush1.xpose.msra.mxu0 0.0
      %1450 = vmatprep.subr.mxu0 0.0
      %1451 = vmatpush1.xpose.msra.mxu0 0.0
      %1452 = vmatprep.subr.mxu0 0.0
      %1453 = vmatpush1.xpose.msra.mxu0 0.0
      %1454 = vmatprep.subr.mxu0 0.0
      %1455 = vmatpush1.xpose.msra.mxu0 0.0
      %1456 = vmatprep.subr.mxu0 0.0
      %1457 = vmatpush1.xpose.msra.mxu0 0.0
      %1458 = vmatprep.subr.mxu0 0.0
      %1459 = vmatpush1.xpose.msra.mxu0 0.0
      %1460 = vmatprep.subr.mxu0 0.0
      %1461 = vmatpush1.xpose.msra.mxu0 0.0
      %1462 = vmatprep.subr.mxu0 0.0
      %1463 = vmatpush1.xpose.msra.mxu0 %v1436
      %1464 = vmatprep.subr.mxu0 0.0
      %1465 = vmatpush1.xpose.msra.mxu0 %v1434
      %1466 = vmatprep.subr.mxu0 0.0
      %1467 = vmatpush1.xpose.msra.mxu0 %v1432
      %1468 = vmatprep.subr.mxu0 0.0
      %1469 = vmatpush1.xpose.msra.mxu0 %v1430
      %1470 = vmatprep.subr.mxu0 0.0
      %1471 = vmatpush2.xpose.msra.mxu0 0.0
      %1472 = vmatprep.subr.mxu0 0.0
      %1473 = vmatpush2.xpose.msra.mxu0 0.0
      %1474 = vmatprep.subr.mxu0 0.0
      %1475 = vmatpush2.xpose.msra.mxu0 0.0
      %1476 = vmatprep.subr.mxu0 0.0
      %1477 = vmatpush2.xpose.msra.mxu0 0.0
      %1478 = vmatprep.subr.mxu0 0.0
      %1479 = vmatpush2.xpose.msra.mxu0 0.0
      %1480 = vmatprep.subr.mxu0 0.0
      %1481 = vmatpush2.xpose.msra.mxu0 0.0
      %1482 = vmatprep.subr.mxu0 0.0
      %1483 = vmatpush2.xpose.msra.mxu0 0.0
      %1484 = vmatprep.subr.mxu0 0.0
      %1485 = vmatpush2.xpose.msra.mxu0 0.0
      %1486 = vmatprep.subr.mxu0 0.0
      %1487 = vmatpush2.xpose.msra.mxu0 0.0
      %1488 = vmatprep.subr.mxu0 0.0
      %1489 = vmatpush2.xpose.msra.mxu0 0.0
      %1490 = vmatprep.subr.mxu0 0.0
      %1491 = vmatpush2.xpose.msra.mxu0 0.0
      %1492 = vmatprep.subr.mxu0 0.0
      %1493 = vmatpush2.xpose.msra.mxu0 0.0
      %1494 = vmatprep.subr.mxu0 0.0
      %1495 = vmatpush2.xpose.msra.mxu0 0.0
      %1496 = vmatprep.subr.mxu0 0.0
      %1497 = vmatpush2.xpose.msra.mxu0 0.0
      %1498 = vmatprep.subr.mxu0 0.0
      %1499 = vmatpush2.xpose.msra.mxu0 0.0
      %1500 = vmatprep.subr.mxu0 0.0
      %1501 = vmatpush2.xpose.msra.mxu0 0.0
      %1502 = vmatprep.mubr.f32.mxu0 0.0
      %1503 = vmatmul.mubr.f32.gmra.mxu0 %v1422
      %v1504 = vpop.f32.mrf.mxu0
      %v1505 = vadd.f32 %v153, %v1504
      %v1506 = vpop.f32.mrf.mxu0
      %1507 = vmatprep.mubr.f32.mxu0 0.0
      %1508 = vmatmul.mubr.f32.gmra.mxu0 %v1424
      %v1509 = vpop.f32.mrf.mxu0
      %v1510 = vadd.f32 %v154, %v1509
      %v1511 = vpop.f32.mrf.mxu0
      %1512 = vmatprep.mubr.f32.mxu0 0.0
      %1513 = vmatmul.mubr.f32.gmra.mxu0 %v1426
      %v1514 = vpop.f32.mrf.mxu0
      %v1515 = vadd.f32 %v155, %v1514
      %v1516 = vpop.f32.mrf.mxu0
      %1517 = vmatprep.mubr.f32.mxu0 0.0
      %1518 = vmatmul.mubr.f32.gmra.mxu0 %v1428
      %v1519 = vpop.f32.mrf.mxu0
      %v1520 = vadd.f32 %v156, %v1519
      %v1521 = vpop.f32.mrf.mxu0
      %1522 = vdwg.mxu0
      %1523 = vrot.lane.b32.xlu0 %v1167, 104
      %v1524 = vpop.permute.xlu0 %1523
      %1525 = vrot.lane.b32.xlu0 %v1168, 104
      %v1526 = vpop.permute.xlu0 %1525
      %1527 = vrot.lane.b32.xlu0 %v1169, 104
      %v1528 = vpop.permute.xlu0 %1527
      %1529 = vrot.lane.b32.xlu0 %v1170, 104
      %v1530 = vpop.permute.xlu0 %1529
      %1531 = vrot.lane.b32.xlu0 %v1149, 72
      %v1532 = vpop.permute.xlu0 %1531
      %1533 = vrot.lane.b32.xlu0 %v1154, 72
      %v1534 = vpop.permute.xlu0 %1533
      %1535 = vrot.lane.b32.xlu0 %v1159, 72
      %v1536 = vpop.permute.xlu0 %1535
      %1537 = vrot.lane.b32.xlu0 %v1164, 72
      %v1538 = vpop.permute.xlu0 %1537
      %v1539 = vsel %vm1183, %v1524, 0
      %v1541 = vsel %vm1183, %v1526, 0
      %v1543 = vsel %vm1183, %v1528, 0
      %v1545 = vsel %vm1183, %v1530, 0
      %v1547 = vsel %vm1183, %v1532, 0
      %v1549 = vsel %vm1183, %v1534, 0
      %v1551 = vsel %vm1183, %v1536, 0
      %v1553 = vsel %vm1183, %v1538, 0
      %1555 = vmatprep.subr.mxu0 0.0
      %1556 = vmatpush1.xpose.msra.mxu0 0.0
      %1557 = vmatprep.subr.mxu0 0.0
      %1558 = vmatpush1.xpose.msra.mxu0 0.0
      %1559 = vmatprep.subr.mxu0 0.0
      %1560 = vmatpush1.xpose.msra.mxu0 0.0
      %1561 = vmatprep.subr.mxu0 0.0
      %1562 = vmatpush1.xpose.msra.mxu0 0.0
      %1563 = vmatprep.subr.mxu0 0.0
      %1564 = vmatpush1.xpose.msra.mxu0 0.0
      %1565 = vmatprep.subr.mxu0 0.0
      %1566 = vmatpush1.xpose.msra.mxu0 0.0
      %1567 = vmatprep.subr.mxu0 0.0
      %1568 = vmatpush1.xpose.msra.mxu0 0.0
      %1569 = vmatprep.subr.mxu0 0.0
      %1570 = vmatpush1.xpose.msra.mxu0 0.0
      %1571 = vmatprep.subr.mxu0 0.0
      %1572 = vmatpush1.xpose.msra.mxu0 0.0
      %1573 = vmatprep.subr.mxu0 0.0
      %1574 = vmatpush1.xpose.msra.mxu0 0.0
      %1575 = vmatprep.subr.mxu0 0.0
      %1576 = vmatpush1.xpose.msra.mxu0 0.0
      %1577 = vmatprep.subr.mxu0 0.0
      %1578 = vmatpush1.xpose.msra.mxu0 0.0
      %1579 = vmatprep.subr.mxu0 0.0
      %1580 = vmatpush1.xpose.msra.mxu0 %v1553
      %1581 = vmatprep.subr.mxu0 0.0
      %1582 = vmatpush1.xpose.msra.mxu0 %v1551
      %1583 = vmatprep.subr.mxu0 0.0
      %1584 = vmatpush1.xpose.msra.mxu0 %v1549
      %1585 = vmatprep.subr.mxu0 0.0
      %1586 = vmatpush1.xpose.msra.mxu0 %v1547
      %1587 = vmatprep.subr.mxu0 0.0
      %1588 = vmatpush2.xpose.msra.mxu0 0.0
      %1589 = vmatprep.subr.mxu0 0.0
      %1590 = vmatpush2.xpose.msra.mxu0 0.0
      %1591 = vmatprep.subr.mxu0 0.0
      %1592 = vmatpush2.xpose.msra.mxu0 0.0
      %1593 = vmatprep.subr.mxu0 0.0
      %1594 = vmatpush2.xpose.msra.mxu0 0.0
      %1595 = vmatprep.subr.mxu0 0.0
      %1596 = vmatpush2.xpose.msra.mxu0 0.0
      %1597 = vmatprep.subr.mxu0 0.0
      %1598 = vmatpush2.xpose.msra.mxu0 0.0
      %1599 = vmatprep.subr.mxu0 0.0
      %1600 = vmatpush2.xpose.msra.mxu0 0.0
      %1601 = vmatprep.subr.mxu0 0.0
      %1602 = vmatpush2.xpose.msra.mxu0 0.0
      %1603 = vmatprep.subr.mxu0 0.0
      %1604 = vmatpush2.xpose.msra.mxu0 0.0
      %1605 = vmatprep.subr.mxu0 0.0
      %1606 = vmatpush2.xpose.msra.mxu0 0.0
      %1607 = vmatprep.subr.mxu0 0.0
      %1608 = vmatpush2.xpose.msra.mxu0 0.0
      %1609 = vmatprep.subr.mxu0 0.0
      %1610 = vmatpush2.xpose.msra.mxu0 0.0
      %1611 = vmatprep.subr.mxu0 0.0
      %1612 = vmatpush2.xpose.msra.mxu0 0.0
      %1613 = vmatprep.subr.mxu0 0.0
      %1614 = vmatpush2.xpose.msra.mxu0 0.0
      %1615 = vmatprep.subr.mxu0 0.0
      %1616 = vmatpush2.xpose.msra.mxu0 0.0
      %1617 = vmatprep.subr.mxu0 0.0
      %1618 = vmatpush2.xpose.msra.mxu0 0.0
      %1619 = vmatprep.mubr.f32.mxu0 0.0
      %1620 = vmatmul.mubr.f32.gmra.mxu0 %v1539
      %v1621 = vpop.f32.mrf.mxu0
      %v1622 = vadd.f32 %v153, %v1621
      %v1623 = vpop.f32.mrf.mxu0
      %1624 = vmatprep.mubr.f32.mxu0 0.0
      %1625 = vmatmul.mubr.f32.gmra.mxu0 %v1541
      %v1626 = vpop.f32.mrf.mxu0
      %v1627 = vadd.f32 %v154, %v1626
      %v1628 = vpop.f32.mrf.mxu0
      %1629 = vmatprep.mubr.f32.mxu0 0.0
      %1630 = vmatmul.mubr.f32.gmra.mxu0 %v1543
      %v1631 = vpop.f32.mrf.mxu0
      %v1632 = vadd.f32 %v155, %v1631
      %v1633 = vpop.f32.mrf.mxu0
      %1634 = vmatprep.mubr.f32.mxu0 0.0
      %1635 = vmatmul.mubr.f32.gmra.mxu0 %v1545
      %v1636 = vpop.f32.mrf.mxu0
      %v1637 = vadd.f32 %v156, %v1636
      %v1638 = vpop.f32.mrf.mxu0
      %1639 = vdwg.mxu0
      %vm1640 = vcmask 244736
      %v1641 = vsel %vm1640, %v1271, -inf
      %1642 = vmax.xlane.f32.xlu0 %v1641
      %v1643 = vpop.xlane.xlu0 %1642
      %v1644 = vsel %vm1640, %v1276, -inf
      %1645 = vmax.xlane.f32.xlu0 %v1644
      %v1646 = vpop.xlane.xlu0 %1645
      %v1647 = vsel %vm1640, %v1281, -inf
      %1648 = vmax.xlane.f32.xlu0 %v1647
      %v1649 = vpop.xlane.xlu0 %1648
      %vm1650 = vcmask 242688
      %v1651 = vsel %vm1650, %v1286, -inf
      %1652 = vmax.xlane.f32.xlu0 %v1651
      %v1653 = vpop.xlane.xlu0 %1652
      %v1654 = vsel %vm1640, %v1388, -inf
      %1655 = vmax.xlane.f32.xlu0 %v1654
      %v1656 = vpop.xlane.xlu0 %1655
      %v1657 = vsel %vm1640, %v1393, -inf
      %1658 = vmax.xlane.f32.xlu0 %v1657
      %v1659 = vpop.xlane.xlu0 %1658
      %v1660 = vsel %vm1640, %v1398, -inf
      %1661 = vmax.xlane.f32.xlu0 %v1660
      %v1662 = vpop.xlane.xlu0 %1661
      %v1663 = vsel %vm1650, %v1403, -inf
      %1664 = vmax.xlane.f32.xlu0 %v1663
      %v1665 = vpop.xlane.xlu0 %1664
      %v1666 = vsel %vm1640, %v1505, -inf
      %1667 = vmax.xlane.f32.xlu0 %v1666
      %v1668 = vpop.xlane.xlu0 %1667
      %v1669 = vsel %vm1640, %v1510, -inf
      %1670 = vmax.xlane.f32.xlu0 %v1669
      %v1671 = vpop.xlane.xlu0 %1670
      %v1672 = vsel %vm1640, %v1515, -inf
      %1673 = vmax.xlane.f32.xlu0 %v1672
      %v1674 = vpop.xlane.xlu0 %1673
      %v1675 = vsel %vm1650, %v1520, -inf
      %1676 = vmax.xlane.f32.xlu0 %v1675
      %v1677 = vpop.xlane.xlu0 %1676
      %v1678 = vsel %vm1640, %v1622, -inf
      %1679 = vmax.xlane.f32.xlu0 %v1678
      %v1680 = vpop.xlane.xlu0 %1679
      %v1681 = vsel %vm1640, %v1627, -inf
      %1682 = vmax.xlane.f32.xlu0 %v1681
      %v1683 = vpop.xlane.xlu0 %1682
      %v1684 = vsel %vm1640, %v1632, -inf
      %1685 = vmax.xlane.f32.xlu0 %v1684
      %v1686 = vpop.xlane.xlu0 %1685
      %v1687 = vsel %vm1650, %v1637, -inf
      %1688 = vmax.xlane.f32.xlu0 %v1687
      %v1689 = vpop.xlane.xlu0 %1688
      %v1690 = vsub.f32 %v1271, %v1643
      %v1691 = vsub.f32 %v1276, %v1646
      %v1692 = vsub.f32 %v1281, %v1649
      %v1693 = vsub.f32 %v1286, %v1653
      %v1694 = vsub.f32 %v1388, %v1656
      %v1695 = vsub.f32 %v1393, %v1659
      %v1696 = vsub.f32 %v1398, %v1662
      %v1697 = vsub.f32 %v1403, %v1665
      %v1698 = vsub.f32 %v1505, %v1668
      %v1699 = vsub.f32 %v1510, %v1671
      %v1700 = vsub.f32 %v1515, %v1674
      %v1701 = vsub.f32 %v1520, %v1677
      %v1702 = vsub.f32 %v1622, %v1680
      %v1703 = vsub.f32 %v1627, %v1683
      %v1704 = vsub.f32 %v1632, %v1686
      %v1705 = vsub.f32 %v1637, %v1689
      %v1706 = vmul.f32 %v1690, 1.442695
      %v1707 = vpow.pop %v1706
      %v1708 = vmul.f32 %v1691, 1.442695
      %v1709 = vpow.pop %v1708
      %v1710 = vmul.f32 %v1692, 1.442695
      %v1711 = vpow.pop %v1710
      %v1712 = vmul.f32 %v1693, 1.442695
      %v1713 = vpow.pop %v1712
      %v1714 = vmul.f32 %v1694, 1.442695
      %v1715 = vpow.pop %v1714
      %v1716 = vmul.f32 %v1695, 1.442695
      %v1717 = vpow.pop %v1716
      %v1718 = vmul.f32 %v1696, 1.442695
      %v1719 = vpow.pop %v1718
      %v1720 = vmul.f32 %v1697, 1.442695
      %v1721 = vpow.pop %v1720
      %v1722 = vmul.f32 %v1698, 1.442695
      %v1723 = vpow.pop %v1722
      %v1724 = vmul.f32 %v1699, 1.442695
      %v1725 = vpow.pop %v1724
      %v1726 = vmul.f32 %v1700, 1.442695
      %v1727 = vpow.pop %v1726
      %v1728 = vmul.f32 %v1701, 1.442695
      %v1729 = vpow.pop %v1728
      %v1730 = vmul.f32 %v1702, 1.442695
      %v1731 = vpow.pop %v1730
      %v1732 = vmul.f32 %v1703, 1.442695
      %v1733 = vpow.pop %v1732
      %v1734 = vmul.f32 %v1704, 1.442695
      %v1735 = vpow.pop %v1734
      %v1736 = vmul.f32 %v1705, 1.442695
      %v1737 = vpow.pop %v1736
      %v1738 = vsel %vm1640, %v1707, 0.0
      %1739 = vadd.xlane.f32.xlu0 %v1738
      %v1740 = vpop.xlane.xlu0 %1739
      %v1741 = vsel %vm1640, %v1709, 0.0
      %1742 = vadd.xlane.f32.xlu0 %v1741
      %v1743 = vpop.xlane.xlu0 %1742
      %v1744 = vsel %vm1640, %v1711, 0.0
      %1745 = vadd.xlane.f32.xlu0 %v1744
      %v1746 = vpop.xlane.xlu0 %1745
      %v1747 = vsel %vm1650, %v1713, 0.0
      %1748 = vadd.xlane.f32.xlu0 %v1747
      %v1749 = vpop.xlane.xlu0 %1748
      %v1750 = vsel %vm1640, %v1715, 0.0
      %1751 = vadd.xlane.f32.xlu0 %v1750
      %v1752 = vpop.xlane.xlu0 %1751
      %v1753 = vsel %vm1640, %v1717, 0.0
      %1754 = vadd.xlane.f32.xlu0 %v1753
      %v1755 = vpop.xlane.xlu0 %1754
      %v1756 = vsel %vm1640, %v1719, 0.0
      %1757 = vadd.xlane.f32.xlu0 %v1756
      %v1758 = vpop.xlane.xlu0 %1757
      %v1759 = vsel %vm1650, %v1721, 0.0
      %1760 = vadd.xlane.f32.xlu0 %v1759
      %v1761 = vpop.xlane.xlu0 %1760
      %v1762 = vsel %vm1640, %v1723, 0.0
      %1763 = vadd.xlane.f32.xlu0 %v1762
      %v1764 = vpop.xlane.xlu0 %1763
      %v1765 = vsel %vm1640, %v1725, 0.0
      %1766 = vadd.xlane.f32.xlu0 %v1765
      %v1767 = vpop.xlane.xlu0 %1766
      %v1768 = vsel %vm1640, %v1727, 0.0
      %1769 = vadd.xlane.f32.xlu0 %v1768
      %v1770 = vpop.xlane.xlu0 %1769
      %v1771 = vsel %vm1650, %v1729, 0.0
      %1772 = vadd.xlane.f32.xlu0 %v1771
      %v1773 = vpop.xlane.xlu0 %1772
      %v1774 = vsel %vm1640, %v1731, 0.0
      %1775 = vadd.xlane.f32.xlu0 %v1774
      %v1776 = vpop.xlane.xlu0 %1775
      %v1777 = vsel %vm1640, %v1733, 0.0
      %1778 = vadd.xlane.f32.xlu0 %v1777
      %v1779 = vpop.xlane.xlu0 %1778
      %v1780 = vsel %vm1640, %v1735, 0.0
      %1781 = vadd.xlane.f32.xlu0 %v1780
      %v1782 = vpop.xlane.xlu0 %1781
      %v1783 = vsel %vm1650, %v1737, 0.0
      %1784 = vadd.xlane.f32.xlu0 %v1783
      %v1785 = vpop.xlane.xlu0 %1784
      %v1786 = vrcp.pop %v1740
      %v1787 = vmul.f32 %v1707, %v1786
      %v1788 = vrcp.pop %v1743
      %v1789 = vmul.f32 %v1709, %v1788
      %v1790 = vrcp.pop %v1746
      %v1791 = vmul.f32 %v1711, %v1790
      %v1792 = vrcp.pop %v1749
      %v1793 = vmul.f32 %v1713, %v1792
      %v1794 = vrcp.pop %v1752
      %v1795 = vmul.f32 %v1715, %v1794
      %v1796 = vrcp.pop %v1755
      %v1797 = vmul.f32 %v1717, %v1796
      %v1798 = vrcp.pop %v1758
      %v1799 = vmul.f32 %v1719, %v1798
      %v1800 = vrcp.pop %v1761
      %v1801 = vmul.f32 %v1721, %v1800
      %v1802 = vrcp.pop %v1764
      %v1803 = vmul.f32 %v1723, %v1802
      %v1804 = vrcp.pop %v1767
      %v1805 = vmul.f32 %v1725, %v1804
      %v1806 = vrcp.pop %v1770
      %v1807 = vmul.f32 %v1727, %v1806
      %v1808 = vrcp.pop %v1773
      %v1809 = vmul.f32 %v1729, %v1808
      %v1810 = vrcp.pop %v1776
      %v1811 = vmul.f32 %v1731, %v1810
      %v1812 = vrcp.pop %v1779
      %v1813 = vmul.f32 %v1733, %v1812
      %v1814 = vrcp.pop %v1782
      %v1815 = vmul.f32 %v1735, %v1814
      %v1816 = vrcp.pop %v1785
      %v1817 = vmul.f32 %v1737, %v1816
      %1818 = vrot.lane.b32.xlu0 %v1149, 64
      %v1819 = vpop.permute.xlu0 %1818
      %1820 = vrot.lane.b32.xlu0 %v1154, 64
      %v1821 = vpop.permute.xlu0 %1820
      %1822 = vrot.lane.b32.xlu0 %v1159, 64
      %v1823 = vpop.permute.xlu0 %1822
      %1824 = vrot.lane.b32.xlu0 %v1164, 64
      %v1825 = vpop.permute.xlu0 %1824
      %v1830 = vsel %vm1640, %v1787, 0
      %v1833 = vsel %vm1640, %v1789, 0
      %v1836 = vsel %vm1640, %v1791, 0
      %v1839 = vsel %vm1640, %v1793, 0
      %vm1841 = vcmask 1045504
      %v1842 = vsel %vm1841, %v1825, 0
      %1844 = vmatprep.subr.mxu0 0.0
      %1845 = vmatpush1.msra.mxu0 0.0
      %1846 = vmatprep.subr.mxu0 0.0
      %1847 = vmatpush1.msra.mxu0 0.0
      %1848 = vmatprep.subr.mxu0 0.0
      %1849 = vmatpush1.msra.mxu0 0.0
      %1850 = vmatprep.subr.mxu0 0.0
      %1851 = vmatpush1.msra.mxu0 0.0
      %1852 = vmatprep.subr.mxu0 0.0
      %1853 = vmatpush1.msra.mxu0 0.0
      %1854 = vmatprep.subr.mxu0 0.0
      %1855 = vmatpush1.msra.mxu0 0.0
      %1856 = vmatprep.subr.mxu0 0.0
      %1857 = vmatpush1.msra.mxu0 0.0
      %1858 = vmatprep.subr.mxu0 0.0
      %1859 = vmatpush1.msra.mxu0 0.0
      %1860 = vmatprep.subr.mxu0 0.0
      %1861 = vmatpush1.msra.mxu0 0.0
      %1862 = vmatprep.subr.mxu0 0.0
      %1863 = vmatpush1.msra.mxu0 0.0
      %1864 = vmatprep.subr.mxu0 0.0
      %1865 = vmatpush1.msra.mxu0 0.0
      %1866 = vmatprep.subr.mxu0 0.0
      %1867 = vmatpush1.msra.mxu0 0.0
      %1868 = vmatprep.subr.mxu0 0.0
      %1869 = vmatpush1.msra.mxu0 %v1842
      %1870 = vmatprep.subr.mxu0 0.0
      %1871 = vmatpush1.msra.mxu0 %v1823
      %1872 = vmatprep.subr.mxu0 0.0
      %1873 = vmatpush1.msra.mxu0 %v1821
      %1874 = vmatprep.subr.mxu0 0.0
      %1875 = vmatpush1.msra.mxu0 %v1819
      %1876 = vmatprep.subr.mxu0 0.0
      %1877 = vmatpush2.msra.mxu0 0.0
      %1878 = vmatprep.subr.mxu0 0.0
      %1879 = vmatpush2.msra.mxu0 0.0
      %1880 = vmatprep.subr.mxu0 0.0
      %1881 = vmatpush2.msra.mxu0 0.0
      %1882 = vmatprep.subr.mxu0 0.0
      %1883 = vmatpush2.msra.mxu0 0.0
      %1884 = vmatprep.subr.mxu0 0.0
      %1885 = vmatpush2.msra.mxu0 0.0
      %1886 = vmatprep.subr.mxu0 0.0
      %1887 = vmatpush2.msra.mxu0 0.0
      %1888 = vmatprep.subr.mxu0 0.0
      %1889 = vmatpush2.msra.mxu0 0.0
      %1890 = vmatprep.subr.mxu0 0.0
      %1891 = vmatpush2.msra.mxu0 0.0
      %1892 = vmatprep.subr.mxu0 0.0
      %1893 = vmatpush2.msra.mxu0 0.0
      %1894 = vmatprep.subr.mxu0 0.0
      %1895 = vmatpush2.msra.mxu0 0.0
      %1896 = vmatprep.subr.mxu0 0.0
      %1897 = vmatpush2.msra.mxu0 0.0
      %1898 = vmatprep.subr.mxu0 0.0
      %1899 = vmatpush2.msra.mxu0 0.0
      %1900 = vmatprep.subr.mxu0 0.0
      %1901 = vmatpush2.msra.mxu0 0.0
      %1902 = vmatprep.subr.mxu0 0.0
      %1903 = vmatpush2.msra.mxu0 0.0
      %1904 = vmatprep.subr.mxu0 0.0
      %1905 = vmatpush2.msra.mxu0 0.0
      %1906 = vmatprep.subr.mxu0 0.0
      %1907 = vmatpush2.msra.mxu0 0.0
      %1908 = vmatprep.mubr.f32.mxu0 0.0
      %1909 = vmatmul.mubr.f32.gmra.mxu0 %v1830
      %v1910 = vpop.f32.mrf.mxu0
      %v1911 = vadd.f32 0.0, %v1910
      %v1912 = vpop.f32.mrf.mxu0
      %1913 = vmatprep.mubr.f32.mxu0 0.0
      %1914 = vmatmul.mubr.f32.gmra.mxu0 %v1833
      %v1915 = vpop.f32.mrf.mxu0
      %v1916 = vadd.f32 0.0, %v1915
      %v1917 = vpop.f32.mrf.mxu0
      %1918 = vmatprep.mubr.f32.mxu0 0.0
      %1919 = vmatmul.mubr.f32.gmra.mxu0 %v1836
      %v1920 = vpop.f32.mrf.mxu0
      %v1921 = vadd.f32 0.0, %v1920
      %v1922 = vpop.f32.mrf.mxu0
      %1923 = vmatprep.mubr.f32.mxu0 0.0
      %1924 = vmatmul.mubr.f32.gmra.mxu0 %v1839
      %v1925 = vpop.f32.mrf.mxu0
      %v1926 = vadd.f32 0.0, %v1925
      %v1927 = vpop.f32.mrf.mxu0
      %1928 = vdwg.mxu0
      %1929 = vrot.lane.b32.xlu0 %v1149, 56
      %v1930 = vpop.permute.xlu0 %1929
      %1931 = vrot.lane.b32.xlu0 %v1154, 56
      %v1932 = vpop.permute.xlu0 %1931
      %1933 = vrot.lane.b32.xlu0 %v1159, 56
      %v1934 = vpop.permute.xlu0 %1933
      %1935 = vrot.lane.b32.xlu0 %v1164, 56
      %v1936 = vpop.permute.xlu0 %1935
      %v1941 = vsel %vm1640, %v1795, 0
      %v1944 = vsel %vm1640, %v1797, 0
      %v1947 = vsel %vm1640, %v1799, 0
      %v1950 = vsel %vm1640, %v1801, 0
      %v1952 = vsel %vm1841, %v1936, 0
      %1954 = vmatprep.subr.mxu0 0.0
      %1955 = vmatpush1.msra.mxu0 0.0
      %1956 = vmatprep.subr.mxu0 0.0
      %1957 = vmatpush1.msra.mxu0 0.0
      %1958 = vmatprep.subr.mxu0 0.0
      %1959 = vmatpush1.msra.mxu0 0.0
      %1960 = vmatprep.subr.mxu0 0.0
      %1961 = vmatpush1.msra.mxu0 0.0
      %1962 = vmatprep.subr.mxu0 0.0
      %1963 = vmatpush1.msra.mxu0 0.0
      %1964 = vmatprep.subr.mxu0 0.0
      %1965 = vmatpush1.msra.mxu0 0.0
      %1966 = vmatprep.subr.mxu0 0.0
      %1967 = vmatpush1.msra.mxu0 0.0
      %1968 = vmatprep.subr.mxu0 0.0
      %1969 = vmatpush1.msra.mxu0 0.0
      %1970 = vmatprep.subr.mxu0 0.0
      %1971 = vmatpush1.msra.mxu0 0.0
      %1972 = vmatprep.subr.mxu0 0.0
      %1973 = vmatpush1.msra.mxu0 0.0
      %1974 = vmatprep.subr.mxu0 0.0
      %1975 = vmatpush1.msra.mxu0 0.0
      %1976 = vmatprep.subr.mxu0 0.0
      %1977 = vmatpush1.msra.mxu0 0.0
      %1978 = vmatprep.subr.mxu0 0.0
      %1979 = vmatpush1.msra.mxu0 %v1952
      %1980 = vmatprep.subr.mxu0 0.0
      %1981 = vmatpush1.msra.mxu0 %v1934
      %1982 = vmatprep.subr.mxu0 0.0
      %1983 = vmatpush1.msra.mxu0 %v1932
      %1984 = vmatprep.subr.mxu0 0.0
      %1985 = vmatpush1.msra.mxu0 %v1930
      %1986 = vmatprep.subr.mxu0 0.0
      %1987 = vmatpush2.msra.mxu0 0.0
      %1988 = vmatprep.subr.mxu0 0.0
      %1989 = vmatpush2.msra.mxu0 0.0
      %1990 = vmatprep.subr.mxu0 0.0
      %1991 = vmatpush2.msra.mxu0 0.0
      %1992 = vmatprep.subr.mxu0 0.0
      %1993 = vmatpush2.msra.mxu0 0.0
      %1994 = vmatprep.subr.mxu0 0.0
      %1995 = vmatpush2.msra.mxu0 0.0
      %1996 = vmatprep.subr.mxu0 0.0
      %1997 = vmatpush2.msra.mxu0 0.0
      %1998 = vmatprep.subr.mxu0 0.0
      %1999 = vmatpush2.msra.mxu0 0.0
      %2000 = vmatprep.subr.mxu0 0.0
      %2001 = vmatpush2.msra.mxu0 0.0
      %2002 = vmatprep.subr.mxu0 0.0
      %2003 = vmatpush2.msra.mxu0 0.0
      %2004 = vmatprep.subr.mxu0 0.0
      %2005 = vmatpush2.msra.mxu0 0.0
      %2006 = vmatprep.subr.mxu0 0.0
      %2007 = vmatpush2.msra.mxu0 0.0
      %2008 = vmatprep.subr.mxu0 0.0
      %2009 = vmatpush2.msra.mxu0 0.0
      %2010 = vmatprep.subr.mxu0 0.0
      %2011 = vmatpush2.msra.mxu0 0.0
      %2012 = vmatprep.subr.mxu0 0.0
      %2013 = vmatpush2.msra.mxu0 0.0
      %2014 = vmatprep.subr.mxu0 0.0
      %2015 = vmatpush2.msra.mxu0 0.0
      %2016 = vmatprep.subr.mxu0 0.0
      %2017 = vmatpush2.msra.mxu0 0.0
      %2018 = vmatprep.mubr.f32.mxu0 0.0
      %2019 = vmatmul.mubr.f32.gmra.mxu0 %v1941
      %v2020 = vpop.f32.mrf.mxu0
      %v2021 = vadd.f32 0.0, %v2020
      %v2022 = vpop.f32.mrf.mxu0
      %2023 = vmatprep.mubr.f32.mxu0 0.0
      %2024 = vmatmul.mubr.f32.gmra.mxu0 %v1944
      %v2025 = vpop.f32.mrf.mxu0
      %v2026 = vadd.f32 0.0, %v2025
      %v2027 = vpop.f32.mrf.mxu0
      %2028 = vmatprep.mubr.f32.mxu0 0.0
      %2029 = vmatmul.mubr.f32.gmra.mxu0 %v1947
      %v2030 = vpop.f32.mrf.mxu0
      %v2031 = vadd.f32 0.0, %v2030
      %v2032 = vpop.f32.mrf.mxu0
      %2033 = vmatprep.mubr.f32.mxu0 0.0
      %2034 = vmatmul.mubr.f32.gmra.mxu0 %v1950
      %v2035 = vpop.f32.mrf.mxu0
      %v2036 = vadd.f32 0.0, %v2035
      %v2037 = vpop.f32.mrf.mxu0
      %2038 = vdwg.mxu0
      %2039 = vrot.lane.b32.xlu0 %v1149, 48
      %v2040 = vpop.permute.xlu0 %2039
      %2041 = vrot.lane.b32.xlu0 %v1154, 48
      %v2042 = vpop.permute.xlu0 %2041
      %2043 = vrot.lane.b32.xlu0 %v1159, 48
      %v2044 = vpop.permute.xlu0 %2043
      %2045 = vrot.lane.b32.xlu0 %v1164, 48
      %v2046 = vpop.permute.xlu0 %2045
      %v2051 = vsel %vm1640, %v1803, 0
      %v2054 = vsel %vm1640, %v1805, 0
      %v2057 = vsel %vm1640, %v1807, 0
      %v2060 = vsel %vm1640, %v1809, 0
      %v2062 = vsel %vm1841, %v2046, 0
      %2064 = vmatprep.subr.mxu0 0.0
      %2065 = vmatpush1.msra.mxu0 0.0
      %2066 = vmatprep.subr.mxu0 0.0
      %2067 = vmatpush1.msra.mxu0 0.0
      %2068 = vmatprep.subr.mxu0 0.0
      %2069 = vmatpush1.msra.mxu0 0.0
      %2070 = vmatprep.subr.mxu0 0.0
      %2071 = vmatpush1.msra.mxu0 0.0
      %2072 = vmatprep.subr.mxu0 0.0
      %2073 = vmatpush1.msra.mxu0 0.0
      %2074 = vmatprep.subr.mxu0 0.0
      %2075 = vmatpush1.msra.mxu0 0.0
      %2076 = vmatprep.subr.mxu0 0.0
      %2077 = vmatpush1.msra.mxu0 0.0
      %2078 = vmatprep.subr.mxu0 0.0
      %2079 = vmatpush1.msra.mxu0 0.0
      %2080 = vmatprep.subr.mxu0 0.0
      %2081 = vmatpush1.msra.mxu0 0.0
      %2082 = vmatprep.subr.mxu0 0.0
      %2083 = vmatpush1.msra.mxu0 0.0
      %2084 = vmatprep.subr.mxu0 0.0
      %2085 = vmatpush1.msra.mxu0 0.0
      %2086 = vmatprep.subr.mxu0 0.0
      %2087 = vmatpush1.msra.mxu0 0.0
      %2088 = vmatprep.subr.mxu0 0.0
      %2089 = vmatpush1.msra.mxu0 %v2062
      %2090 = vmatprep.subr.mxu0 0.0
      %2091 = vmatpush1.msra.mxu0 %v2044
      %2092 = vmatprep.subr.mxu0 0.0
      %2093 = vmatpush1.msra.mxu0 %v2042
      %2094 = vmatprep.subr.mxu0 0.0
      %2095 = vmatpush1.msra.mxu0 %v2040
      %2096 = vmatprep.subr.mxu0 0.0
      %2097 = vmatpush2.msra.mxu0 0.0
      %2098 = vmatprep.subr.mxu0 0.0
      %2099 = vmatpush2.msra.mxu0 0.0
      %2100 = vmatprep.subr.mxu0 0.0
      %2101 = vmatpush2.msra.mxu0 0.0
      %2102 = vmatprep.subr.mxu0 0.0
      %2103 = vmatpush2.msra.mxu0 0.0
      %2104 = vmatprep.subr.mxu0 0.0
      %2105 = vmatpush2.msra.mxu0 0.0
      %2106 = vmatprep.subr.mxu0 0.0
      %2107 = vmatpush2.msra.mxu0 0.0
      %2108 = vmatprep.subr.mxu0 0.0
      %2109 = vmatpush2.msra.mxu0 0.0
      %2110 = vmatprep.subr.mxu0 0.0
      %2111 = vmatpush2.msra.mxu0 0.0
      %2112 = vmatprep.subr.mxu0 0.0
      %2113 = vmatpush2.msra.mxu0 0.0
      %2114 = vmatprep.subr.mxu0 0.0
      %2115 = vmatpush2.msra.mxu0 0.0
      %2116 = vmatprep.subr.mxu0 0.0
      %2117 = vmatpush2.msra.mxu0 0.0
      %2118 = vmatprep.subr.mxu0 0.0
      %2119 = vmatpush2.msra.mxu0 0.0
      %2120 = vmatprep.subr.mxu0 0.0
      %2121 = vmatpush2.msra.mxu0 0.0
      %2122 = vmatprep.subr.mxu0 0.0
      %2123 = vmatpush2.msra.mxu0 0.0
      %2124 = vmatprep.subr.mxu0 0.0
      %2125 = vmatpush2.msra.mxu0 0.0
      %2126 = vmatprep.subr.mxu0 0.0
      %2127 = vmatpush2.msra.mxu0 0.0
      %2128 = vmatprep.mubr.f32.mxu0 0.0
      %2129 = vmatmul.mubr.f32.gmra.mxu0 %v2051
      %v2130 = vpop.f32.mrf.mxu0
      %v2131 = vadd.f32 0.0, %v2130
      %v2132 = vpop.f32.mrf.mxu0
      %2133 = vmatprep.mubr.f32.mxu0 0.0
      %2134 = vmatmul.mubr.f32.gmra.mxu0 %v2054
      %v2135 = vpop.f32.mrf.mxu0
      %v2136 = vadd.f32 0.0, %v2135
      %v2137 = vpop.f32.mrf.mxu0
      %2138 = vmatprep.mubr.f32.mxu0 0.0
      %2139 = vmatmul.mubr.f32.gmra.mxu0 %v2057
      %v2140 = vpop.f32.mrf.mxu0
      %v2141 = vadd.f32 0.0, %v2140
      %v2142 = vpop.f32.mrf.mxu0
      %2143 = vmatprep.mubr.f32.mxu0 0.0
      %2144 = vmatmul.mubr.f32.gmra.mxu0 %v2060
      %v2145 = vpop.f32.mrf.mxu0
      %v2146 = vadd.f32 0.0, %v2145
      %v2147 = vpop.f32.mrf.mxu0
      %2148 = vdwg.mxu0
      %2149 = vrot.lane.b32.xlu0 %v1149, 40
      %v2150 = vpop.permute.xlu0 %2149
      %2151 = vrot.lane.b32.xlu0 %v1154, 40
      %v2152 = vpop.permute.xlu0 %2151
      %2153 = vrot.lane.b32.xlu0 %v1159, 40
      %v2154 = vpop.permute.xlu0 %2153
      %2155 = vrot.lane.b32.xlu0 %v1164, 40
      %v2156 = vpop.permute.xlu0 %2155
      %v2161 = vsel %vm1640, %v1811, 0
      %v2164 = vsel %vm1640, %v1813, 0
      %v2167 = vsel %vm1640, %v1815, 0
      %v2170 = vsel %vm1640, %v1817, 0
      %v2172 = vsel %vm1841, %v2156, 0
      %2174 = vmatprep.subr.mxu0 0.0
      %2175 = vmatpush1.msra.mxu0 0.0
      %2176 = vmatprep.subr.mxu0 0.0
      %2177 = vmatpush1.msra.mxu0 0.0
      %2178 = vmatprep.subr.mxu0 0.0
      %2179 = vmatpush1.msra.mxu0 0.0
      %2180 = vmatprep.subr.mxu0 0.0
      %2181 = vmatpush1.msra.mxu0 0.0
      %2182 = vmatprep.subr.mxu0 0.0
      %2183 = vmatpush1.msra.mxu0 0.0
      %2184 = vmatprep.subr.mxu0 0.0
      %2185 = vmatpush1.msra.mxu0 0.0
      %2186 = vmatprep.subr.mxu0 0.0
      %2187 = vmatpush1.msra.mxu0 0.0
      %2188 = vmatprep.subr.mxu0 0.0
      %2189 = vmatpush1.msra.mxu0 0.0
      %2190 = vmatprep.subr.mxu0 0.0
      %2191 = vmatpush1.msra.mxu0 0.0
      %2192 = vmatprep.subr.mxu0 0.0
      %2193 = vmatpush1.msra.mxu0 0.0
      %2194 = vmatprep.subr.mxu0 0.0
      %2195 = vmatpush1.msra.mxu0 0.0
      %2196 = vmatprep.subr.mxu0 0.0
      %2197 = vmatpush1.msra.mxu0 0.0
      %2198 = vmatprep.subr.mxu0 0.0
      %2199 = vmatpush1.msra.mxu0 %v2172
      %2200 = vmatprep.subr.mxu0 0.0
      %2201 = vmatpush1.msra.mxu0 %v2154
      %2202 = vmatprep.subr.mxu0 0.0
      %2203 = vmatpush1.msra.mxu0 %v2152
      %2204 = vmatprep.subr.mxu0 0.0
      %2205 = vmatpush1.msra.mxu0 %v2150
      %2206 = vmatprep.subr.mxu0 0.0
      %2207 = vmatpush2.msra.mxu0 0.0
      %2208 = vmatprep.subr.mxu0 0.0
      %2209 = vmatpush2.msra.mxu0 0.0
      %2210 = vmatprep.subr.mxu0 0.0
      %2211 = vmatpush2.msra.mxu0 0.0
      %2212 = vmatprep.subr.mxu0 0.0
      %2213 = vmatpush2.msra.mxu0 0.0
      %2214 = vmatprep.subr.mxu0 0.0
      %2215 = vmatpush2.msra.mxu0 0.0
      %2216 = vmatprep.subr.mxu0 0.0
      %2217 = vmatpush2.msra.mxu0 0.0
      %2218 = vmatprep.subr.mxu0 0.0
      %2219 = vmatpush2.msra.mxu0 0.0
      %2220 = vmatprep.subr.mxu0 0.0
      %2221 = vmatpush2.msra.mxu0 0.0
      %2222 = vmatprep.subr.mxu0 0.0
      %2223 = vmatpush2.msra.mxu0 0.0
      %2224 = vmatprep.subr.mxu0 0.0
      %2225 = vmatpush2.msra.mxu0 0.0
      %2226 = vmatprep.subr.mxu0 0.0
      %2227 = vmatpush2.msra.mxu0 0.0
      %2228 = vmatprep.subr.mxu0 0.0
      %2229 = vmatpush2.msra.mxu0 0.0
      %2230 = vmatprep.subr.mxu0 0.0
      %2231 = vmatpush2.msra.mxu0 0.0
      %2232 = vmatprep.subr.mxu0 0.0
      %2233 = vmatpush2.msra.mxu0 0.0
      %2234 = vmatprep.subr.mxu0 0.0
      %2235 = vmatpush2.msra.mxu0 0.0
      %2236 = vmatprep.subr.mxu0 0.0
      %2237 = vmatpush2.msra.mxu0 0.0
      %2238 = vmatprep.mubr.f32.mxu0 0.0
      %2239 = vmatmul.mubr.f32.gmra.mxu0 %v2161
      %v2240 = vpop.f32.mrf.mxu0
      %v2241 = vadd.f32 0.0, %v2240
      %v2242 = vpop.f32.mrf.mxu0
      %2243 = vmatprep.mubr.f32.mxu0 0.0
      %2244 = vmatmul.mubr.f32.gmra.mxu0 %v2164
      %v2245 = vpop.f32.mrf.mxu0
      %v2246 = vadd.f32 0.0, %v2245
      %v2247 = vpop.f32.mrf.mxu0
      %2248 = vmatprep.mubr.f32.mxu0 0.0
      %2249 = vmatmul.mubr.f32.gmra.mxu0 %v2167
      %v2250 = vpop.f32.mrf.mxu0
      %v2251 = vadd.f32 0.0, %v2250
      %v2252 = vpop.f32.mrf.mxu0
      %2253 = vmatprep.mubr.f32.mxu0 0.0
      %2254 = vmatmul.mubr.f32.gmra.mxu0 %v2170
      %v2255 = vpop.f32.mrf.mxu0
      %v2256 = vadd.f32 0.0, %v2255
      %v2257 = vpop.f32.mrf.mxu0
      %2258 = vdwg.mxu0
      %2263 = vrot.lane.b32.xlu0 %v2021, 8
      %v2264 = vpop.permute.xlu0 %2263
      %2265 = vrot.lane.b32.xlu0 %v2026, 8
      %v2266 = vpop.permute.xlu0 %2265
      %2267 = vrot.lane.b32.xlu0 %v2031, 8
      %v2268 = vpop.permute.xlu0 %2267
      %2269 = vrot.lane.b32.xlu0 %v2036, 8
      %v2270 = vpop.permute.xlu0 %2269
      %2279 = vrot.lane.b32.xlu0 %v2131, 16
      %v2280 = vpop.permute.xlu0 %2279
      %2281 = vrot.lane.b32.xlu0 %v2136, 16
      %v2282 = vpop.permute.xlu0 %2281
      %2283 = vrot.lane.b32.xlu0 %v2141, 16
      %v2284 = vpop.permute.xlu0 %2283
      %2285 = vrot.lane.b32.xlu0 %v2146, 16
      %v2286 = vpop.permute.xlu0 %2285
      %2295 = vrot.lane.b32.xlu0 %v2241, 24
      %v2296 = vpop.permute.xlu0 %2295
      %2297 = vrot.lane.b32.xlu0 %v2246, 24
      %v2298 = vpop.permute.xlu0 %2297
      %2299 = vrot.lane.b32.xlu0 %v2251, 24
      %v2300 = vpop.permute.xlu0 %2299
      %2301 = vrot.lane.b32.xlu0 %v2256, 24
      %v2302 = vpop.permute.xlu0 %2301
      %v2307 = vsel %vm1183, %v1911, %v2264
      %v2308 = vsel %vm1183, %v1916, %v2266
      %v2309 = vsel %vm1183, %v1921, %v2268
      %v2310 = vsel %vm1183, %v1926, %v2270
      %v2311 = vsel %vm199, %v2307, %v2280
      %v2312 = vsel %vm199, %v2308, %v2282
      %v2313 = vsel %vm199, %v2309, %v2284
      %v2314 = vsel %vm199, %v2310, %v2286
      %vm2315 = vcmask 195584
      %v2316 = vsel %vm2315, %v2311, %v2296
      %v2317 = vsel %vm2315, %v2312, %v2298
      %v2318 = vsel %vm2315, %v2313, %v2300
      %v2319 = vsel %vm2315, %v2314, %v2302
      %v2320 = vlaneseq
      %v2321 = vshrl.u32 %v2320, 7
      %v2322 = vsub.s32 0, %v2321
      %v2323 = vrot.slane %v171, %v2322
      %2328 = vrot.lane.b32.xlu0 %v159, 32
      %v2329 = vpop.permute.xlu0 %2328
      %2330 = vrot.lane.b32.xlu0 %v160, 32
      %v2331 = vpop.permute.xlu0 %2330
      %2332 = vrot.lane.b32.xlu0 %v161, 32
      %v2333 = vpop.permute.xlu0 %2332
      %2334 = vrot.lane.b32.xlu0 %v162, 32
      %v2335 = vpop.permute.xlu0 %2334
      %v2341 = vsel %vm285, %v2316, 0
      %v2344 = vsel %vm285, %v2317, 0
      %v2347 = vsel %vm285, %v2318, 0
      %v2350 = vsel %vm285, %v2319, 0
      %2352 = vmatprep.subr.mxu0 0.0
      %2353 = vmatpush1.msra.mxu0 0.0
      %2354 = vmatprep.subr.mxu0 0.0
      %2355 = vmatpush1.msra.mxu0 0.0
      %2356 = vmatprep.subr.mxu0 0.0
      %2357 = vmatpush1.msra.mxu0 0.0
      %2358 = vmatprep.subr.mxu0 0.0
      %2359 = vmatpush1.msra.mxu0 0.0
      %2360 = vmatprep.subr.mxu0 0.0
      %2361 = vmatpush1.msra.mxu0 0.0
      %2362 = vmatprep.subr.mxu0 0.0
      %2363 = vmatpush1.msra.mxu0 0.0
      %2364 = vmatprep.subr.mxu0 0.0
      %2365 = vmatpush1.msra.mxu0 0.0
      %2366 = vmatprep.subr.mxu0 0.0
      %2367 = vmatpush1.msra.mxu0 0.0
      %2368 = vmatprep.subr.mxu0 0.0
      %2369 = vmatpush1.msra.mxu0 0.0
      %2370 = vmatprep.subr.mxu0 0.0
      %2371 = vmatpush1.msra.mxu0 0.0
      %2372 = vmatprep.subr.mxu0 0.0
      %2373 = vmatpush1.msra.mxu0 0.0
      %2374 = vmatprep.subr.mxu0 0.0
      %2375 = vmatpush1.msra.mxu0 0.0
      %2376 = vmatprep.subr.mxu0 0.0
      %2377 = vmatpush1.msra.mxu0 %v2335
      %2378 = vmatprep.subr.mxu0 0.0
      %2379 = vmatpush1.msra.mxu0 %v2333
      %2380 = vmatprep.subr.mxu0 0.0
      %2381 = vmatpush1.msra.mxu0 %v2331
      %2382 = vmatprep.subr.mxu0 0.0
      %2383 = vmatpush1.msra.mxu0 %v2329
      %2384 = vmatprep.subr.mxu0 0.0
      %2385 = vmatpush2.msra.mxu0 0.0
      %2386 = vmatprep.subr.mxu0 0.0
      %2387 = vmatpush2.msra.mxu0 0.0
      %2388 = vmatprep.subr.mxu0 0.0
      %2389 = vmatpush2.msra.mxu0 0.0
      %2390 = vmatprep.subr.mxu0 0.0
      %2391 = vmatpush2.msra.mxu0 0.0
      %2392 = vmatprep.subr.mxu0 0.0
      %2393 = vmatpush2.msra.mxu0 0.0
      %2394 = vmatprep.subr.mxu0 0.0
      %2395 = vmatpush2.msra.mxu0 0.0
      %2396 = vmatprep.subr.mxu0 0.0
      %2397 = vmatpush2.msra.mxu0 0.0
      %2398 = vmatprep.subr.mxu0 0.0
      %2399 = vmatpush2.msra.mxu0 0.0
      %2400 = vmatprep.subr.mxu0 0.0
      %2401 = vmatpush2.msra.mxu0 0.0
      %2402 = vmatprep.subr.mxu0 0.0
      %2403 = vmatpush2.msra.mxu0 0.0
      %2404 = vmatprep.subr.mxu0 0.0
      %2405 = vmatpush2.msra.mxu0 0.0
      %2406 = vmatprep.subr.mxu0 0.0
      %2407 = vmatpush2.msra.mxu0 0.0
      %2408 = vmatprep.subr.mxu0 0.0
      %2409 = vmatpush2.msra.mxu0 0.0
      %2410 = vmatprep.subr.mxu0 0.0
      %2411 = vmatpush2.msra.mxu0 0.0
      %2412 = vmatprep.subr.mxu0 0.0
      %2413 = vmatpush2.msra.mxu0 0.0
      %2414 = vmatprep.subr.mxu0 0.0
      %2415 = vmatpush2.msra.mxu0 0.0
      %2416 = vmatprep.mubr.f32.mxu0 0.0
      %2417 = vmatmul.mubr.f32.gmra.mxu0 %v2341
      %v2418 = vpop.f32.mrf.mxu0
      %v2419 = vadd.f32 %v2323, %v2418
      %v2420 = vpop.f32.mrf.mxu0
      %2421 = vmatprep.mubr.f32.mxu0 0.0
      %2422 = vmatmul.mubr.f32.gmra.mxu0 %v2344
      %v2423 = vpop.f32.mrf.mxu0
      %v2424 = vadd.f32 %v2323, %v2423
      %v2425 = vpop.f32.mrf.mxu0
      %2426 = vmatprep.mubr.f32.mxu0 0.0
      %2427 = vmatmul.mubr.f32.gmra.mxu0 %v2347
      %v2428 = vpop.f32.mrf.mxu0
      %v2429 = vadd.f32 %v2323, %v2428
      %v2430 = vpop.f32.mrf.mxu0
      %2431 = vmatprep.mubr.f32.mxu0 0.0
      %2432 = vmatmul.mubr.f32.gmra.mxu0 %v2350
      %v2433 = vpop.f32.mrf.mxu0
      %v2434 = vadd.f32 %v2323, %v2433
      %v2435 = vpop.f32.mrf.mxu0
      %2436 = vdwg.mxu0
      %v2437 = vadd.f32 %v2419, %v1066
      %v2438 = vadd.f32 %v2424, %v1067
      %v2439 = vadd.f32 %v2429, %v1068
      %v2440 = vadd.f32 %v2434, %v1069
      %v2441 = vsel %vm285, %v2437, 0.0
      %2442 = vadd.xlane.f32.xlu0 %v2441
      %v2443 = vpop.xlane.xlu0 %2442
      %v2444 = vsel %vm285, %v2438, 0.0
      %2445 = vadd.xlane.f32.xlu0 %v2444
      %v2446 = vpop.xlane.xlu0 %2445
      %v2447 = vsel %vm285, %v2439, 0.0
      %2448 = vadd.xlane.f32.xlu0 %v2447
      %v2449 = vpop.xlane.xlu0 %2448
      %v2450 = vsel %vm1036, %v2440, 0.0
      %2451 = vadd.xlane.f32.xlu0 %v2450
      %v2452 = vpop.xlane.xlu0 %2451
      %v2453 = vmul.f32 %v2443, %v998
      %v2454 = vmul.f32 %v2446, %v998
      %v2455 = vmul.f32 %v2449, %v998
      %v2456 = vmul.f32 %v2452, %v998
      %v2457 = vsub.f32 %v2437, %v2453
      %v2458 = vsub.f32 %v2438, %v2454
      %v2459 = vsub.f32 %v2439, %v2455
      %v2460 = vsub.f32 %v2440, %v2456
      %v2461 = vmul.f32 %v2457, %v2457
      %v2462 = vmul.f32 %v2458, %v2458
      %v2463 = vmul.f32 %v2459, %v2459
      %v2464 = vmul.f32 %v2460, %v2460
      %v2465 = vsel %vm285, %v2461, 0.0
      %2466 = vadd.xlane.f32.xlu0 %v2465
      %v2467 = vpop.xlane.xlu0 %2466
      %v2468 = vsel %vm285, %v2462, 0.0
      %2469 = vadd.xlane.f32.xlu0 %v2468
      %v2470 = vpop.xlane.xlu0 %2469
      %v2471 = vsel %vm285, %v2463, 0.0
      %2472 = vadd.xlane.f32.xlu0 %v2471
      %v2473 = vpop.xlane.xlu0 %2472
      %v2474 = vsel %vm1036, %v2464, 0.0
      %2475 = vadd.xlane.f32.xlu0 %v2474
      %v2476 = vpop.xlane.xlu0 %2475
      %v2477 = vmul.f32 %v2467, %v998
      %v2478 = vmul.f32 %v2470, %v998
      %v2479 = vmul.f32 %v2473, %v998
      %v2480 = vmul.f32 %v2476, %v998
      %v2481 = vadd.f32 %v2477, 1e-06
      %v2482 = vadd.f32 %v2478, 1e-06
      %v2483 = vadd.f32 %v2479, 1e-06
      %v2484 = vadd.f32 %v2480, 1e-06
      %v2485 = vrsqrt.pop %v2481
      %v2486 = vrsqrt.pop %v2482
      %v2487 = vrsqrt.pop %v2483
      %v2488 = vrsqrt.pop %v2484
      %v2489 = vmul.f32 %v2457, %v2485
      %v2490 = vmul.f32 %v2458, %v2486
      %v2491 = vmul.f32 %v2459, %v2487
      %v2492 = vmul.f32 %v2460, %v2488
      %v2493 = vlaneseq
      %v2494 = vshrl.u32 %v2493, 7
      %v2495 = vsub.s32 0, %v2494
      %v2496 = vrot.slane %v172, %v2495
      %v2497 = vmul.f32 %v2489, %v2496
      %v2498 = vmul.f32 %v2490, %v2496
      %v2499 = vmul.f32 %v2491, %v2496
      %v2500 = vmul.f32 %v2492, %v2496
      %v2501 = vlaneseq
      %v2502 = vshrl.u32 %v2501, 7
      %v2503 = vsub.s32 0, %v2502
      %v2504 = vrot.slane %v173, %v2503
      %v2505 = vadd.f32 %v2497, %v2504
      %v2506 = vadd.f32 %v2498, %v2504
      %v2507 = vadd.f32 %v2499, %v2504
      %v2508 = vadd.f32 %v2500, %v2504
      %v2509 = vlaneseq
      %v2510 = vshrl.u32 %v2509, 7
      %v2511 = vsub.s32 0, %v2510
      %v2512 = vrot.slane %v174, %v2511
      %v2514 = vsel %vm285, %v2505, 0
      %v2517 = vsel %vm285, %v2506, 0
      %v2520 = vsel %vm285, %v2507, 0
      %v2523 = vsel %vm285, %v2508, 0
      %2525 = vmatprep.subr.mxu0 0.0
      %2526 = vmatpush1.msra.mxu0 0.0
      %2527 = vmatprep.subr.mxu0 0.0
      %2528 = vmatpush1.msra.mxu0 0.0
      %2529 = vmatprep.subr.mxu0 0.0
      %2530 = vmatpush1.msra.mxu0 0.0
      %2531 = vmatprep.subr.mxu0 0.0
      %2532 = vmatpush1.msra.mxu0 0.0
      %2533 = vmatprep.subr.mxu0 0.0
      %2534 = vmatpush1.msra.mxu0 0.0
      %2535 = vmatprep.subr.mxu0 0.0
      %2536 = vmatpush1.msra.mxu0 0.0
      %2537 = vmatprep.subr.mxu0 0.0
      %2538 = vmatpush1.msra.mxu0 0.0
      %2539 = vmatprep.subr.mxu0 0.0
      %2540 = vmatpush1.msra.mxu0 0.0
      %2541 = vmatprep.subr.mxu0 0.0
      %2542 = vmatpush1.msra.mxu0 0.0
      %2543 = vmatprep.subr.mxu0 0.0
      %2544 = vmatpush1.msra.mxu0 0.0
      %2545 = vmatprep.subr.mxu0 0.0
      %2546 = vmatpush1.msra.mxu0 0.0
      %2547 = vmatprep.subr.mxu0 0.0
      %2548 = vmatpush1.msra.mxu0 0.0
      %2549 = vmatprep.subr.mxu0 0.0
      %2550 = vmatpush1.msra.mxu0 %v166
      %2551 = vmatprep.subr.mxu0 0.0
      %2552 = vmatpush1.msra.mxu0 %v165
      %2553 = vmatprep.subr.mxu0 0.0
      %2554 = vmatpush1.msra.mxu0 %v164
      %2555 = vmatprep.subr.mxu0 0.0
      %2556 = vmatpush1.msra.mxu0 %v163
      %2557 = vmatprep.subr.mxu0 0.0
      %2558 = vmatpush2.msra.mxu0 0.0
      %2559 = vmatprep.subr.mxu0 0.0
      %2560 = vmatpush2.msra.mxu0 0.0
      %2561 = vmatprep.subr.mxu0 0.0
      %2562 = vmatpush2.msra.mxu0 0.0
      %2563 = vmatprep.subr.mxu0 0.0
      %2564 = vmatpush2.msra.mxu0 0.0
      %2565 = vmatprep.subr.mxu0 0.0
      %2566 = vmatpush2.msra.mxu0 0.0
      %2567 = vmatprep.subr.mxu0 0.0
      %2568 = vmatpush2.msra.mxu0 0.0
      %2569 = vmatprep.subr.mxu0 0.0
      %2570 = vmatpush2.msra.mxu0 0.0
      %2571 = vmatprep.subr.mxu0 0.0
      %2572 = vmatpush2.msra.mxu0 0.0
      %2573 = vmatprep.subr.mxu0 0.0
      %2574 = vmatpush2.msra.mxu0 0.0
      %2575 = vmatprep.subr.mxu0 0.0
      %2576 = vmatpush2.msra.mxu0 0.0
      %2577 = vmatprep.subr.mxu0 0.0
      %2578 = vmatpush2.msra.mxu0 0.0
      %2579 = vmatprep.subr.mxu0 0.0
      %2580 = vmatpush2.msra.mxu0 0.0
      %2581 = vmatprep.subr.mxu0 0.0
      %2582 = vmatpush2.msra.mxu0 0.0
      %2583 = vmatprep.subr.mxu0 0.0
      %2584 = vmatpush2.msra.mxu0 0.0
      %2585 = vmatprep.subr.mxu0 0.0
      %2586 = vmatpush2.msra.mxu0 0.0
      %2587 = vmatprep.subr.mxu0 0.0
      %2588 = vmatpush2.msra.mxu0 0.0
      %2589 = vmatprep.mubr.f32.mxu0 0.0
      %2590 = vmatmul.mubr.f32.gmra.mxu0 %v2514
      %v2591 = vpop.f32.mrf.mxu0
      %v2592 = vadd.f32 %v2512, %v2591
      %v2593 = vpop.f32.mrf.mxu0
      %2594 = vmatprep.mubr.f32.mxu0 0.0
      %2595 = vmatmul.mubr.f32.gmra.mxu0 %v2517
      %v2596 = vpop.f32.mrf.mxu0
      %v2597 = vadd.f32 %v2512, %v2596
      %v2598 = vpop.f32.mrf.mxu0
      %2599 = vmatprep.mubr.f32.mxu0 0.0
      %2600 = vmatmul.mubr.f32.gmra.mxu0 %v2520
      %v2601 = vpop.f32.mrf.mxu0
      %v2602 = vadd.f32 %v2512, %v2601
      %v2603 = vpop.f32.mrf.mxu0
      %2604 = vmatprep.mubr.f32.mxu0 0.0
      %2605 = vmatmul.mubr.f32.gmra.mxu0 %v2523
      %v2606 = vpop.f32.mrf.mxu0
      %v2607 = vadd.f32 %v2512, %v2606
      %v2608 = vpop.f32.mrf.mxu0
      %2609 = vdwg.mxu0
      %v2610 = vmul.f32 %v2592, 0.5
      %v2611 = vmul.f32 %v2597, 0.5
      %v2612 = vmul.f32 %v2602, 0.5
      %v2613 = vmul.f32 %v2607, 0.5
      %v2614 = vmul.f32 %v2592, 0.044715
      %v2615 = vmul.f32 %v2597, 0.044715
      %v2616 = vmul.f32 %v2602, 0.044715
      %v2617 = vmul.f32 %v2607, 0.044715
      %v2618 = vmul.f32 %v2614, %v2592
      %v2619 = vmul.f32 %v2615, %v2597
      %v2620 = vmul.f32 %v2616, %v2602
      %v2621 = vmul.f32 %v2617, %v2607
      %v2622 = vmul.f32 %v2618, %v2592
      %v2623 = vmul.f32 %v2619, %v2597
      %v2624 = vmul.f32 %v2620, %v2602
      %v2625 = vmul.f32 %v2621, %v2607
      %v2626 = vadd.f32 %v2592, %v2622
      %v2627 = vadd.f32 %v2597, %v2623
      %v2628 = vadd.f32 %v2602, %v2624
      %v2629 = vadd.f32 %v2607, %v2625
      %v2630 = vmul.f32 %v2626, 0.7978846
      %v2631 = vmul.f32 %v2627, 0.7978846
      %v2632 = vmul.f32 %v2628, 0.7978846
      %v2633 = vmul.f32 %v2629, 0.7978846
      %v2634 = vtanh.pop %v2630
      %v2635 = vtanh.pop %v2631
      %v2636 = vtanh.pop %v2632
      %v2637 = vtanh.pop %v2633
      %v2638 = vadd.f32 %v2634, 1.0
      %v2639 = vadd.f32 %v2635, 1.0
      %v2640 = vadd.f32 %v2636, 1.0
      %v2641 = vadd.f32 %v2637, 1.0
      %v2642 = vmul.f32 %v2610, %v2638
      %v2643 = vmul.f32 %v2611, %v2639
      %v2644 = vmul.f32 %v2612, %v2640
      %v2645 = vmul.f32 %v2613, %v2641
      %v2646 = vlaneseq
      %v2647 = vshrl.u32 %v2646, 7
      %v2648 = vsub.s32 0, %v2647
      %v2649 = vrot.slane %v175, %v2648
      %vm2650 = vcmask 523264
      %v2652 = vsel %vm2650, %v2642, 0
      %v2655 = vsel %vm2650, %v2643, 0
      %v2658 = vsel %vm2650, %v2644, 0
      %v2661 = vsel %vm2650, %v2645, 0
      %v2664 = vsel %vm2650, %v167, 0
      %v2667 = vsel %vm2650, %v168, 0
      %v2670 = vsel %vm2650, %v169, 0
      %v2673 = vsel %vm2650, %v170, 0
      %2675 = vmatprep.subr.mxu0 0.0
      %2676 = vmatpush1.xpose.msra.mxu0 0.0
      %2677 = vmatprep.subr.mxu0 0.0
      %2678 = vmatpush1.xpose.msra.mxu0 0.0
      %2679 = vmatprep.subr.mxu0 0.0
      %2680 = vmatpush1.xpose.msra.mxu0 0.0
      %2681 = vmatprep.subr.mxu0 0.0
      %2682 = vmatpush1.xpose.msra.mxu0 0.0
      %2683 = vmatprep.subr.mxu0 0.0
      %2684 = vmatpush1.xpose.msra.mxu0 0.0
      %2685 = vmatprep.subr.mxu0 0.0
      %2686 = vmatpush1.xpose.msra.mxu0 0.0
      %2687 = vmatprep.subr.mxu0 0.0
      %2688 = vmatpush1.xpose.msra.mxu0 0.0
      %2689 = vmatprep.subr.mxu0 0.0
      %2690 = vmatpush1.xpose.msra.mxu0 0.0
      %2691 = vmatprep.subr.mxu0 0.0
      %2692 = vmatpush1.xpose.msra.mxu0 0.0
      %2693 = vmatprep.subr.mxu0 0.0
      %2694 = vmatpush1.xpose.msra.mxu0 0.0
      %2695 = vmatprep.subr.mxu0 0.0
      %2696 = vmatpush1.xpose.msra.mxu0 0.0
      %2697 = vmatprep.subr.mxu0 0.0
      %2698 = vmatpush1.xpose.msra.mxu0 0.0
      %2699 = vmatprep.subr.mxu0 0.0
      %2700 = vmatpush1.xpose.msra.mxu0 %v2673
      %2701 = vmatprep.subr.mxu0 0.0
      %2702 = vmatpush1.xpose.msra.mxu0 %v2670
      %2703 = vmatprep.subr.mxu0 0.0
      %2704 = vmatpush1.xpose.msra.mxu0 %v2667
      %2705 = vmatprep.subr.mxu0 0.0
      %2706 = vmatpush1.xpose.msra.mxu0 %v2664
      %2707 = vmatprep.subr.mxu0 0.0
      %2708 = vmatpush2.xpose.msra.mxu0 0.0
      %2709 = vmatprep.subr.mxu0 0.0
      %2710 = vmatpush2.xpose.msra.mxu0 0.0
      %2711 = vmatprep.subr.mxu0 0.0
      %2712 = vmatpush2.xpose.msra.mxu0 0.0
      %2713 = vmatprep.subr.mxu0 0.0
      %2714 = vmatpush2.xpose.msra.mxu0 0.0
      %2715 = vmatprep.subr.mxu0 0.0
      %2716 = vmatpush2.xpose.msra.mxu0 0.0
      %2717 = vmatprep.subr.mxu0 0.0
      %2718 = vmatpush2.xpose.msra.mxu0 0.0
      %2719 = vmatprep.subr.mxu0 0.0
      %2720 = vmatpush2.xpose.msra.mxu0 0.0
      %2721 = vmatprep.subr.mxu0 0.0
      %2722 = vmatpush2.xpose.msra.mxu0 0.0
      %2723 = vmatprep.subr.mxu0 0.0
      %2724 = vmatpush2.xpose.msra.mxu0 0.0
      %2725 = vmatprep.subr.mxu0 0.0
      %2726 = vmatpush2.xpose.msra.mxu0 0.0
      %2727 = vmatprep.subr.mxu0 0.0
      %2728 = vmatpush2.xpose.msra.mxu0 0.0
      %2729 = vmatprep.subr.mxu0 0.0
      %2730 = vmatpush2.xpose.msra.mxu0 0.0
      %2731 = vmatprep.subr.mxu0 0.0
      %2732 = vmatpush2.xpose.msra.mxu0 0.0
      %2733 = vmatprep.subr.mxu0 0.0
      %2734 = vmatpush2.xpose.msra.mxu0 0.0
      %2735 = vmatprep.subr.mxu0 0.0
      %2736 = vmatpush2.xpose.msra.mxu0 0.0
      %2737 = vmatprep.subr.mxu0 0.0
      %2738 = vmatpush2.xpose.msra.mxu0 0.0
      %2739 = vmatprep.mubr.f32.mxu0 0.0
      %2740 = vmatmul.mubr.f32.gmra.mxu0 %v2652
      %v2741 = vpop.f32.mrf.mxu0
      %v2742 = vadd.f32 %v2649, %v2741
      %v2743 = vpop.f32.mrf.mxu0
      %2744 = vmatprep.mubr.f32.mxu0 0.0
      %2745 = vmatmul.mubr.f32.gmra.mxu0 %v2655
      %v2746 = vpop.f32.mrf.mxu0
      %v2747 = vadd.f32 %v2649, %v2746
      %v2748 = vpop.f32.mrf.mxu0
      %2749 = vmatprep.mubr.f32.mxu0 0.0
      %2750 = vmatmul.mubr.f32.gmra.mxu0 %v2658
      %v2751 = vpop.f32.mrf.mxu0
      %v2752 = vadd.f32 %v2649, %v2751
      %v2753 = vpop.f32.mrf.mxu0
      %2754 = vmatprep.mubr.f32.mxu0 0.0
      %2755 = vmatmul.mubr.f32.gmra.mxu0 %v2661
      %v2756 = vpop.f32.mrf.mxu0
      %v2757 = vadd.f32 %v2649, %v2756
      %v2758 = vpop.f32.mrf.mxu0
      %2759 = vdwg.mxu0
      %v2760 = vadd.f32 %v2742, %v2505
      %v2761 = vadd.f32 %v2747, %v2506
      %v2762 = vadd.f32 %v2752, %v2507
      %v2763 = vadd.f32 %v2757, %v2508
      %v2764 = vsel %vm285, %v2760, 0.0
      %2765 = vadd.xlane.f32.xlu0 %v2764
      %v2766 = vpop.xlane.xlu0 %2765
      %v2767 = vsel %vm285, %v2761, 0.0
      %2768 = vadd.xlane.f32.xlu0 %v2767
      %v2769 = vpop.xlane.xlu0 %2768
      %v2770 = vsel %vm285, %v2762, 0.0
      %2771 = vadd.xlane.f32.xlu0 %v2770
      %v2772 = vpop.xlane.xlu0 %2771
      %v2773 = vsel %vm1036, %v2763, 0.0
      %2774 = vadd.xlane.f32.xlu0 %v2773
      %v2775 = vpop.xlane.xlu0 %2774
      %v2776 = vmul.f32 %v2766, %v998
      %v2777 = vmul.f32 %v2769, %v998
      %v2778 = vmul.f32 %v2772, %v998
      %v2779 = vmul.f32 %v2775, %v998
      %v2780 = vsub.f32 %v2760, %v2776
      %v2781 = vsub.f32 %v2761, %v2777
      %v2782 = vsub.f32 %v2762, %v2778
      %v2783 = vsub.f32 %v2763, %v2779
      %v2784 = vmul.f32 %v2780, %v2780
      %v2785 = vmul.f32 %v2781, %v2781
      %v2786 = vmul.f32 %v2782, %v2782
      %v2787 = vmul.f32 %v2783, %v2783
      %v2788 = vsel %vm285, %v2784, 0.0
      %2789 = vadd.xlane.f32.xlu0 %v2788
      %v2790 = vpop.xlane.xlu0 %2789
      %v2791 = vsel %vm285, %v2785, 0.0
      %2792 = vadd.xlane.f32.xlu0 %v2791
      %v2793 = vpop.xlane.xlu0 %2792
      %v2794 = vsel %vm285, %v2786, 0.0
      %2795 = vadd.xlane.f32.xlu0 %v2794
      %v2796 = vpop.xlane.xlu0 %2795
      %v2797 = vsel %vm1036, %v2787, 0.0
      %2798 = vadd.xlane.f32.xlu0 %v2797
      %v2799 = vpop.xlane.xlu0 %2798
      %v2800 = vmul.f32 %v2790, %v998
      %v2801 = vmul.f32 %v2793, %v998
      %v2802 = vmul.f32 %v2796, %v998
      %v2803 = vmul.f32 %v2799, %v998
      %v2804 = vadd.f32 %v2800, 1e-06
      %v2805 = vadd.f32 %v2801, 1e-06
      %v2806 = vadd.f32 %v2802, 1e-06
      %v2807 = vadd.f32 %v2803, 1e-06
      %v2808 = vrsqrt.pop %v2804
      %v2809 = vrsqrt.pop %v2805
      %v2810 = vrsqrt.pop %v2806
      %v2811 = vrsqrt.pop %v2807
      %v2812 = vmul.f32 %v2780, %v2808
      %v2813 = vmul.f32 %v2781, %v2809
      %v2814 = vmul.f32 %v2782, %v2810
      %v2815 = vmul.f32 %v2783, %v2811
      %v2816 = vlaneseq
      %v2817 = vshrl.u32 %v2816, 7
      %v2818 = vsub.s32 0, %v2817
      %v2819 = vrot.slane %v176, %v2818
      %v2820 = vmul.f32 %v2812, %v2819
      %v2821 = vmul.f32 %v2813, %v2819
      %v2822 = vmul.f32 %v2814, %v2819
      %v2823 = vmul.f32 %v2815, %v2819
      %v2824 = vlaneseq
      %v2825 = vshrl.u32 %v2824, 7
      %v2826 = vsub.s32 0, %v2825
      %v2827 = vrot.slane %v177, %v2826
      %v2828 = vadd.f32 %v2820, %v2827
      %v2829 = vadd.f32 %v2821, %v2827
      %v2830 = vadd.f32 %v2822, %v2827
      %v2831 = vadd.f32 %v2823, %v2827
      %v2833 = vsel %vm285, %v2828, 0
      %v2836 = vsel %vm285, %v2829, 0
      %v2839 = vsel %vm285, %v2830, 0
      %v2842 = vsel %vm285, %v2831, 0
      %2844 = vmatprep.subr.mxu0 0.0
      %2845 = vmatpush1.msra.mxu0 0.0
      %2846 = vmatprep.subr.mxu0 0.0
      %2847 = vmatpush1.msra.mxu0 0.0
      %2848 = vmatprep.subr.mxu0 0.0
      %2849 = vmatpush1.msra.mxu0 0.0
      %2850 = vmatprep.subr.mxu0 0.0
      %2851 = vmatpush1.msra.mxu0 0.0
      %2852 = vmatprep.subr.mxu0 0.0
      %2853 = vmatpush1.msra.mxu0 0.0
      %2854 = vmatprep.subr.mxu0 0.0
      %2855 = vmatpush1.msra.mxu0 0.0
      %2856 = vmatprep.subr.mxu0 0.0
      %2857 = vmatpush1.msra.mxu0 0.0
      %2858 = vmatprep.subr.mxu0 0.0
      %2859 = vmatpush1.msra.mxu0 0.0
      %2860 = vmatprep.subr.mxu0 0.0
      %2861 = vmatpush1.msra.mxu0 0.0
      %2862 = vmatprep.subr.mxu0 0.0
      %2863 = vmatpush1.msra.mxu0 0.0
      %2864 = vmatprep.subr.mxu0 0.0
      %2865 = vmatpush1.msra.mxu0 0.0
      %2866 = vmatprep.subr.mxu0 0.0
      %2867 = vmatpush1.msra.mxu0 0.0
      %2868 = vmatprep.subr.mxu0 0.0
      %2869 = vmatpush1.msra.mxu0 %v181
      %2870 = vmatprep.subr.mxu0 0.0
      %2871 = vmatpush1.msra.mxu0 %v180
      %2872 = vmatprep.subr.mxu0 0.0
      %2873 = vmatpush1.msra.mxu0 %v179
      %2874 = vmatprep.subr.mxu0 0.0
      %2875 = vmatpush1.msra.mxu0 %v178
      %2876 = vmatprep.subr.mxu0 0.0
      %2877 = vmatpush2.msra.mxu0 0.0
      %2878 = vmatprep.subr.mxu0 0.0
      %2879 = vmatpush2.msra.mxu0 0.0
      %2880 = vmatprep.subr.mxu0 0.0
      %2881 = vmatpush2.msra.mxu0 0.0
      %2882 = vmatprep.subr.mxu0 0.0
      %2883 = vmatpush2.msra.mxu0 0.0
      %2884 = vmatprep.subr.mxu0 0.0
      %2885 = vmatpush2.msra.mxu0 0.0
      %2886 = vmatprep.subr.mxu0 0.0
      %2887 = vmatpush2.msra.mxu0 0.0
      %2888 = vmatprep.subr.mxu0 0.0
      %2889 = vmatpush2.msra.mxu0 0.0
      %2890 = vmatprep.subr.mxu0 0.0
      %2891 = vmatpush2.msra.mxu0 0.0
      %2892 = vmatprep.subr.mxu0 0.0
      %2893 = vmatpush2.msra.mxu0 0.0
      %2894 = vmatprep.subr.mxu0 0.0
      %2895 = vmatpush2.msra.mxu0 0.0
      %2896 = vmatprep.subr.mxu0 0.0
      %2897 = vmatpush2.msra.mxu0 0.0
      %2898 = vmatprep.subr.mxu0 0.0
      %2899 = vmatpush2.msra.mxu0 0.0
      %2900 = vmatprep.subr.mxu0 0.0
      %2901 = vmatpush2.msra.mxu0 0.0
      %2902 = vmatprep.subr.mxu0 0.0
      %2903 = vmatpush2.msra.mxu0 0.0
      %2904 = vmatprep.subr.mxu0 0.0
      %2905 = vmatpush2.msra.mxu0 0.0
      %2906 = vmatprep.subr.mxu0 0.0
      %2907 = vmatpush2.msra.mxu0 0.0
      %2908 = vmatprep.mubr.f32.mxu0 0.0
      %2909 = vmatmul.mubr.f32.gmra.mxu0 %v2833
      %v2910 = vpop.f32.mrf.mxu0
      %v2911 = vadd.f32 0.0, %v2910
      %v2912 = vpop.f32.mrf.mxu0
      %2913 = vmatprep.mubr.f32.mxu0 0.0
      %2914 = vmatmul.mubr.f32.gmra.mxu0 %v2836
      %v2915 = vpop.f32.mrf.mxu0
      %v2916 = vadd.f32 0.0, %v2915
      %v2917 = vpop.f32.mrf.mxu0
      %2918 = vmatprep.mubr.f32.mxu0 0.0
      %2919 = vmatmul.mubr.f32.gmra.mxu0 %v2839
      %v2920 = vpop.f32.mrf.mxu0
      %v2921 = vadd.f32 0.0, %v2920
      %v2922 = vpop.f32.mrf.mxu0
      %2923 = vmatprep.mubr.f32.mxu0 0.0
      %2924 = vmatmul.mubr.f32.gmra.mxu0 %v2842
      %v2925 = vpop.f32.mrf.mxu0
      %v2926 = vadd.f32 0.0, %v2925
      %v2927 = vpop.f32.mrf.mxu0
      %2928 = vdwg.mxu0
      %v2929 = vmul.f32 %v2911, 0.35355338
      %v2930 = vmul.f32 %v2916, 0.35355338
      %v2931 = vmul.f32 %v2921, 0.35355338
      %v2932 = vmul.f32 %v2926, 0.35355338
      %2937 = vrot.lane.b32.xlu0 %v2911, 96
      %v2938 = vpop.permute.xlu0 %2937
      %2939 = vrot.lane.b32.xlu0 %v2916, 96
      %v2940 = vpop.permute.xlu0 %2939
      %2941 = vrot.lane.b32.xlu0 %v2921, 96
      %v2942 = vpop.permute.xlu0 %2941
      %2943 = vrot.lane.b32.xlu0 %v2926, 96
      %v2944 = vpop.permute.xlu0 %2943
      %v2946 = vsel %vm1183, %v2929, 0
      %v2949 = vsel %vm1183, %v2930, 0
      %v2952 = vsel %vm1183, %v2931, 0
      %v2955 = vsel %vm1183, %v2932, 0
      %v2957 = vsel %vm1183, %v2938, 0
      %v2959 = vsel %vm1183, %v2940, 0
      %v2961 = vsel %vm1183, %v2942, 0
      %v2963 = vsel %vm1183, %v2944, 0
      %2965 = vmatprep.subr.mxu0 0.0
      %2966 = vmatpush1.xpose.msra.mxu0 0.0
      %2967 = vmatprep.subr.mxu0 0.0
      %2968 = vmatpush1.xpose.msra.mxu0 0.0
      %2969 = vmatprep.subr.mxu0 0.0
      %2970 = vmatpush1.xpose.msra.mxu0 0.0
      %2971 = vmatprep.subr.mxu0 0.0
      %2972 = vmatpush1.xpose.msra.mxu0 0.0
      %2973 = vmatprep.subr.mxu0 0.0
      %2974 = vmatpush1.xpose.msra.mxu0 0.0
      %2975 = vmatprep.subr.mxu0 0.0
      %2976 = vmatpush1.xpose.msra.mxu0 0.0
      %2977 = vmatprep.subr.mxu0 0.0
      %2978 = vmatpush1.xpose.msra.mxu0 0.0
      %2979 = vmatprep.subr.mxu0 0.0
      %2980 = vmatpush1.xpose.msra.mxu0 0.0
      %2981 = vmatprep.subr.mxu0 0.0
      %2982 = vmatpush1.xpose.msra.mxu0 0.0
      %2983 = vmatprep.subr.mxu0 0.0
      %2984 = vmatpush1.xpose.msra.mxu0 0.0
      %2985 = vmatprep.subr.mxu0 0.0
      %2986 = vmatpush1.xpose.msra.mxu0 0.0
      %2987 = vmatprep.subr.mxu0 0.0
      %2988 = vmatpush1.xpose.msra.mxu0 0.0
      %2989 = vmatprep.subr.mxu0 0.0
      %2990 = vmatpush1.xpose.msra.mxu0 %v2963
      %2991 = vmatprep.subr.mxu0 0.0
      %2992 = vmatpush1.xpose.msra.mxu0 %v2961
      %2993 = vmatprep.subr.mxu0 0.0
      %2994 = vmatpush1.xpose.msra.mxu0 %v2959
      %2995 = vmatprep.subr.mxu0 0.0
      %2996 = vmatpush1.xpose.msra.mxu0 %v2957
      %2997 = vmatprep.subr.mxu0 0.0
      %2998 = vmatpush2.xpose.msra.mxu0 0.0
      %2999 = vmatprep.subr.mxu0 0.0
      %3000 = vmatpush2.xpose.msra.mxu0 0.0
      %3001 = vmatprep.subr.mxu0 0.0
      %3002 = vmatpush2.xpose.msra.mxu0 0.0
      %3003 = vmatprep.subr.mxu0 0.0
      %3004 = vmatpush2.xpose.msra.mxu0 0.0
      %3005 = vmatprep.subr.mxu0 0.0
      %3006 = vmatpush2.xpose.msra.mxu0 0.0
      %3007 = vmatprep.subr.mxu0 0.0
      %3008 = vmatpush2.xpose.msra.mxu0 0.0
      %3009 = vmatprep.subr.mxu0 0.0
      %3010 = vmatpush2.xpose.msra.mxu0 0.0
      %3011 = vmatprep.subr.mxu0 0.0
      %3012 = vmatpush2.xpose.msra.mxu0 0.0
      %3013 = vmatprep.subr.mxu0 0.0
      %3014 = vmatpush2.xpose.msra.mxu0 0.0
      %3015 = vmatprep.subr.mxu0 0.0
      %3016 = vmatpush2.xpose.msra.mxu0 0.0
      %3017 = vmatprep.subr.mxu0 0.0
      %3018 = vmatpush2.xpose.msra.mxu0 0.0
      %3019 = vmatprep.subr.mxu0 0.0
      %3020 = vmatpush2.xpose.msra.mxu0 0.0
      %3021 = vmatprep.subr.mxu0 0.0
      %3022 = vmatpush2.xpose.msra.mxu0 0.0
      %3023 = vmatprep.subr.mxu0 0.0
      %3024 = vmatpush2.xpose.msra.mxu0 0.0
      %3025 = vmatprep.subr.mxu0 0.0
      %3026 = vmatpush2.xpose.msra.mxu0 0.0
      %3027 = vmatprep.subr.mxu0 0.0
      %3028 = vmatpush2.xpose.msra.mxu0 0.0
      %3029 = vmatprep.mubr.f32.mxu0 0.0
      %3030 = vmatmul.mubr.f32.gmra.mxu0 %v2946
      %v3031 = vpop.f32.mrf.mxu0
      %v3032 = vadd.f32 %v153, %v3031
      %v3033 = vpop.f32.mrf.mxu0
      %3034 = vmatprep.mubr.f32.mxu0 0.0
      %3035 = vmatmul.mubr.f32.gmra.mxu0 %v2949
      %v3036 = vpop.f32.mrf.mxu0
      %v3037 = vadd.f32 %v154, %v3036
      %v3038 = vpop.f32.mrf.mxu0
      %3039 = vmatprep.mubr.f32.mxu0 0.0
      %3040 = vmatmul.mubr.f32.gmra.mxu0 %v2952
      %v3041 = vpop.f32.mrf.mxu0
      %v3042 = vadd.f32 %v155, %v3041
      %v3043 = vpop.f32.mrf.mxu0
      %3044 = vmatprep.mubr.f32.mxu0 0.0
      %3045 = vmatmul.mubr.f32.gmra.mxu0 %v2955
      %v3046 = vpop.f32.mrf.mxu0
      %v3047 = vadd.f32 %v156, %v3046
      %v3048 = vpop.f32.mrf.mxu0
      %3049 = vdwg.mxu0
      %3050 = vrot.lane.b32.xlu0 %v2929, 120
      %v3051 = vpop.permute.xlu0 %3050
      %3052 = vrot.lane.b32.xlu0 %v2930, 120
      %v3053 = vpop.permute.xlu0 %3052
      %3054 = vrot.lane.b32.xlu0 %v2931, 120
      %v3055 = vpop.permute.xlu0 %3054
      %3056 = vrot.lane.b32.xlu0 %v2932, 120
      %v3057 = vpop.permute.xlu0 %3056
      %3058 = vrot.lane.b32.xlu0 %v2911, 88
      %v3059 = vpop.permute.xlu0 %3058
      %3060 = vrot.lane.b32.xlu0 %v2916, 88
      %v3061 = vpop.permute.xlu0 %3060
      %3062 = vrot.lane.b32.xlu0 %v2921, 88
      %v3063 = vpop.permute.xlu0 %3062
      %3064 = vrot.lane.b32.xlu0 %v2926, 88
      %v3065 = vpop.permute.xlu0 %3064
      %v3066 = vsel %vm1183, %v3051, 0
      %v3068 = vsel %vm1183, %v3053, 0
      %v3070 = vsel %vm1183, %v3055, 0
      %v3072 = vsel %vm1183, %v3057, 0
      %v3074 = vsel %vm1183, %v3059, 0
      %v3076 = vsel %vm1183, %v3061, 0
      %v3078 = vsel %vm1183, %v3063, 0
      %v3080 = vsel %vm1183, %v3065, 0
      %3082 = vmatprep.subr.mxu0 0.0
      %3083 = vmatpush1.xpose.msra.mxu0 0.0
      %3084 = vmatprep.subr.mxu0 0.0
      %3085 = vmatpush1.xpose.msra.mxu0 0.0
      %3086 = vmatprep.subr.mxu0 0.0
      %3087 = vmatpush1.xpose.msra.mxu0 0.0
      %3088 = vmatprep.subr.mxu0 0.0
      %3089 = vmatpush1.xpose.msra.mxu0 0.0
      %3090 = vmatprep.subr.mxu0 0.0
      %3091 = vmatpush1.xpose.msra.mxu0 0.0
      %3092 = vmatprep.subr.mxu0 0.0
      %3093 = vmatpush1.xpose.msra.mxu0 0.0
      %3094 = vmatprep.subr.mxu0 0.0
      %3095 = vmatpush1.xpose.msra.mxu0 0.0
      %3096 = vmatprep.subr.mxu0 0.0
      %3097 = vmatpush1.xpose.msra.mxu0 0.0
      %3098 = vmatprep.subr.mxu0 0.0
      %3099 = vmatpush1.xpose.msra.mxu0 0.0
      %3100 = vmatprep.subr.mxu0 0.0
      %3101 = vmatpush1.xpose.msra.mxu0 0.0
      %3102 = vmatprep.subr.mxu0 0.0
      %3103 = vmatpush1.xpose.msra.mxu0 0.0
      %3104 = vmatprep.subr.mxu0 0.0
      %3105 = vmatpush1.xpose.msra.mxu0 0.0
      %3106 = vmatprep.subr.mxu0 0.0
      %3107 = vmatpush1.xpose.msra.mxu0 %v3080
      %3108 = vmatprep.subr.mxu0 0.0
      %3109 = vmatpush1.xpose.msra.mxu0 %v3078
      %3110 = vmatprep.subr.mxu0 0.0
      %3111 = vmatpush1.xpose.msra.mxu0 %v3076
      %3112 = vmatprep.subr.mxu0 0.0
      %3113 = vmatpush1.xpose.msra.mxu0 %v3074
      %3114 = vmatprep.subr.mxu0 0.0
      %3115 = vmatpush2.xpose.msra.mxu0 0.0
      %3116 = vmatprep.subr.mxu0 0.0
      %3117 = vmatpush2.xpose.msra.mxu0 0.0
      %3118 = vmatprep.subr.mxu0 0.0
      %3119 = vmatpush2.xpose.msra.mxu0 0.0
      %3120 = vmatprep.subr.mxu0 0.0
      %3121 = vmatpush2.xpose.msra.mxu0 0.0
      %3122 = vmatprep.subr.mxu0 0.0
      %3123 = vmatpush2.xpose.msra.mxu0 0.0
      %3124 = vmatprep.subr.mxu0 0.0
      %3125 = vmatpush2.xpose.msra.mxu0 0.0
      %3126 = vmatprep.subr.mxu0 0.0
      %3127 = vmatpush2.xpose.msra.mxu0 0.0
      %3128 = vmatprep.subr.mxu0 0.0
      %3129 = vmatpush2.xpose.msra.mxu0 0.0
      %3130 = vmatprep.subr.mxu0 0.0
      %3131 = vmatpush2.xpose.msra.mxu0 0.0
      %3132 = vmatprep.subr.mxu0 0.0
      %3133 = vmatpush2.xpose.msra.mxu0 0.0
      %3134 = vmatprep.subr.mxu0 0.0
      %3135 = vmatpush2.xpose.msra.mxu0 0.0
      %3136 = vmatprep.subr.mxu0 0.0
      %3137 = vmatpush2.xpose.msra.mxu0 0.0
      %3138 = vmatprep.subr.mxu0 0.0
      %3139 = vmatpush2.xpose.msra.mxu0 0.0
      %3140 = vmatprep.subr.mxu0 0.0
      %3141 = vmatpush2.xpose.msra.mxu0 0.0
      %3142 = vmatprep.subr.mxu0 0.0
      %3143 = vmatpush2.xpose.msra.mxu0 0.0
      %3144 = vmatprep.subr.mxu0 0.0
      %3145 = vmatpush2.xpose.msra.mxu0 0.0
      %3146 = vmatprep.mubr.f32.mxu0 0.0
      %3147 = vmatmul.mubr.f32.gmra.mxu0 %v3066
      %v3148 = vpop.f32.mrf.mxu0
      %v3149 = vadd.f32 %v153, %v3148
      %v3150 = vpop.f32.mrf.mxu0
      %3151 = vmatprep.mubr.f32.mxu0 0.0
      %3152 = vmatmul.mubr.f32.gmra.mxu0 %v3068
      %v3153 = vpop.f32.mrf.mxu0
      %v3154 = vadd.f32 %v154, %v3153
      %v3155 = vpop.f32.mrf.mxu0
      %3156 = vmatprep.mubr.f32.mxu0 0.0
      %3157 = vmatmul.mubr.f32.gmra.mxu0 %v3070
      %v3158 = vpop.f32.mrf.mxu0
      %v3159 = vadd.f32 %v155, %v3158
      %v3160 = vpop.f32.mrf.mxu0
      %3161 = vmatprep.mubr.f32.mxu0 0.0
      %3162 = vmatmul.mubr.f32.gmra.mxu0 %v3072
      %v3163 = vpop.f32.mrf.mxu0
      %v3164 = vadd.f32 %v156, %v3163
      %v3165 = vpop.f32.mrf.mxu0
      %3166 = vdwg.mxu0
      %3167 = vrot.lane.b32.xlu0 %v2929, 112
      %v3168 = vpop.permute.xlu0 %3167
      %3169 = vrot.lane.b32.xlu0 %v2930, 112
      %v3170 = vpop.permute.xlu0 %3169
      %3171 = vrot.lane.b32.xlu0 %v2931, 112
      %v3172 = vpop.permute.xlu0 %3171
      %3173 = vrot.lane.b32.xlu0 %v2932, 112
      %v3174 = vpop.permute.xlu0 %3173
      %3175 = vrot.lane.b32.xlu0 %v2911, 80
      %v3176 = vpop.permute.xlu0 %3175
      %3177 = vrot.lane.b32.xlu0 %v2916, 80
      %v3178 = vpop.permute.xlu0 %3177
      %3179 = vrot.lane.b32.xlu0 %v2921, 80
      %v3180 = vpop.permute.xlu0 %3179
      %3181 = vrot.lane.b32.xlu0 %v2926, 80
      %v3182 = vpop.permute.xlu0 %3181
      %v3183 = vsel %vm1183, %v3168, 0
      %v3185 = vsel %vm1183, %v3170, 0
      %v3187 = vsel %vm1183, %v3172, 0
      %v3189 = vsel %vm1183, %v3174, 0
      %v3191 = vsel %vm1183, %v3176, 0
      %v3193 = vsel %vm1183, %v3178, 0
      %v3195 = vsel %vm1183, %v3180, 0
      %v3197 = vsel %vm1183, %v3182, 0
      %3199 = vmatprep.subr.mxu0 0.0
      %3200 = vmatpush1.xpose.msra.mxu0 0.0
      %3201 = vmatprep.subr.mxu0 0.0
      %3202 = vmatpush1.xpose.msra.mxu0 0.0
      %3203 = vmatprep.subr.mxu0 0.0
      %3204 = vmatpush1.xpose.msra.mxu0 0.0
      %3205 = vmatprep.subr.mxu0 0.0
      %3206 = vmatpush1.xpose.msra.mxu0 0.0
      %3207 = vmatprep.subr.mxu0 0.0
      %3208 = vmatpush1.xpose.msra.mxu0 0.0
      %3209 = vmatprep.subr.mxu0 0.0
      %3210 = vmatpush1.xpose.msra.mxu0 0.0
      %3211 = vmatprep.subr.mxu0 0.0
      %3212 = vmatpush1.xpose.msra.mxu0 0.0
      %3213 = vmatprep.subr.mxu0 0.0
      %3214 = vmatpush1.xpose.msra.mxu0 0.0
      %3215 = vmatprep.subr.mxu0 0.0
      %3216 = vmatpush1.xpose.msra.mxu0 0.0
      %3217 = vmatprep.subr.mxu0 0.0
      %3218 = vmatpush1.xpose.msra.mxu0 0.0
      %3219 = vmatprep.subr.mxu0 0.0
      %3220 = vmatpush1.xpose.msra.mxu0 0.0
      %3221 = vmatprep.subr.mxu0 0.0
      %3222 = vmatpush1.xpose.msra.mxu0 0.0
      %3223 = vmatprep.subr.mxu0 0.0
      %3224 = vmatpush1.xpose.msra.mxu0 %v3197
      %3225 = vmatprep.subr.mxu0 0.0
      %3226 = vmatpush1.xpose.msra.mxu0 %v3195
      %3227 = vmatprep.subr.mxu0 0.0
      %3228 = vmatpush1.xpose.msra.mxu0 %v3193
      %3229 = vmatprep.subr.mxu0 0.0
      %3230 = vmatpush1.xpose.msra.mxu0 %v3191
      %3231 = vmatprep.subr.mxu0 0.0
      %3232 = vmatpush2.xpose.msra.mxu0 0.0
      %3233 = vmatprep.subr.mxu0 0.0
      %3234 = vmatpush2.xpose.msra.mxu0 0.0
      %3235 = vmatprep.subr.mxu0 0.0
      %3236 = vmatpush2.xpose.msra.mxu0 0.0
      %3237 = vmatprep.subr.mxu0 0.0
      %3238 = vmatpush2.xpose.msra.mxu0 0.0
      %3239 = vmatprep.subr.mxu0 0.0
      %3240 = vmatpush2.xpose.msra.mxu0 0.0
      %3241 = vmatprep.subr.mxu0 0.0
      %3242 = vmatpush2.xpose.msra.mxu0 0.0
      %3243 = vmatprep.subr.mxu0 0.0
      %3244 = vmatpush2.xpose.msra.mxu0 0.0
      %3245 = vmatprep.subr.mxu0 0.0
      %3246 = vmatpush2.xpose.msra.mxu0 0.0
      %3247 = vmatprep.subr.mxu0 0.0
      %3248 = vmatpush2.xpose.msra.mxu0 0.0
      %3249 = vmatprep.subr.mxu0 0.0
      %3250 = vmatpush2.xpose.msra.mxu0 0.0
      %3251 = vmatprep.subr.mxu0 0.0
      %3252 = vmatpush2.xpose.msra.mxu0 0.0
      %3253 = vmatprep.subr.mxu0 0.0
      %3254 = vmatpush2.xpose.msra.mxu0 0.0
      %3255 = vmatprep.subr.mxu0 0.0
      %3256 = vmatpush2.xpose.msra.mxu0 0.0
      %3257 = vmatprep.subr.mxu0 0.0
      %3258 = vmatpush2.xpose.msra.mxu0 0.0
      %3259 = vmatprep.subr.mxu0 0.0
      %3260 = vmatpush2.xpose.msra.mxu0 0.0
      %3261 = vmatprep.subr.mxu0 0.0
      %3262 = vmatpush2.xpose.msra.mxu0 0.0
      %3263 = vmatprep.mubr.f32.mxu0 0.0
      %3264 = vmatmul.mubr.f32.gmra.mxu0 %v3183
      %v3265 = vpop.f32.mrf.mxu0
      %v3266 = vadd.f32 %v153, %v3265
      %v3267 = vpop.f32.mrf.mxu0
      %3268 = vmatprep.mubr.f32.mxu0 0.0
      %3269 = vmatmul.mubr.f32.gmra.mxu0 %v3185
      %v3270 = vpop.f32.mrf.mxu0
      %v3271 = vadd.f32 %v154, %v3270
      %v3272 = vpop.f32.mrf.mxu0
      %3273 = vmatprep.mubr.f32.mxu0 0.0
      %3274 = vmatmul.mubr.f32.gmra.mxu0 %v3187
      %v3275 = vpop.f32.mrf.mxu0
      %v3276 = vadd.f32 %v155, %v3275
      %v3277 = vpop.f32.mrf.mxu0
      %3278 = vmatprep.mubr.f32.mxu0 0.0
      %3279 = vmatmul.mubr.f32.gmra.mxu0 %v3189
      %v3280 = vpop.f32.mrf.mxu0
      %v3281 = vadd.f32 %v156, %v3280
      %v3282 = vpop.f32.mrf.mxu0
      %3283 = vdwg.mxu0
      %3284 = vrot.lane.b32.xlu0 %v2929, 104
      %v3285 = vpop.permute.xlu0 %3284
      %3286 = vrot.lane.b32.xlu0 %v2930, 104
      %v3287 = vpop.permute.xlu0 %3286
      %3288 = vrot.lane.b32.xlu0 %v2931, 104
      %v3289 = vpop.permute.xlu0 %3288
      %3290 = vrot.lane.b32.xlu0 %v2932, 104
      %v3291 = vpop.permute.xlu0 %3290
      %3292 = vrot.lane.b32.xlu0 %v2911, 72
      %v3293 = vpop.permute.xlu0 %3292
      %3294 = vrot.lane.b32.xlu0 %v2916, 72
      %v3295 = vpop.permute.xlu0 %3294
      %3296 = vrot.lane.b32.xlu0 %v2921, 72
      %v3297 = vpop.permute.xlu0 %3296
      %3298 = vrot.lane.b32.xlu0 %v2926, 72
      %v3299 = vpop.permute.xlu0 %3298
      %v3300 = vsel %vm1183, %v3285, 0
      %v3302 = vsel %vm1183, %v3287, 0
      %v3304 = vsel %vm1183, %v3289, 0
      %v3306 = vsel %vm1183, %v3291, 0
      %v3308 = vsel %vm1183, %v3293, 0
      %v3310 = vsel %vm1183, %v3295, 0
      %v3312 = vsel %vm1183, %v3297, 0
      %v3314 = vsel %vm1183, %v3299, 0
      %3316 = vmatprep.subr.mxu0 0.0
      %3317 = vmatpush1.xpose.msra.mxu0 0.0
      %3318 = vmatprep.subr.mxu0 0.0
      %3319 = vmatpush1.xpose.msra.mxu0 0.0
      %3320 = vmatprep.subr.mxu0 0.0
      %3321 = vmatpush1.xpose.msra.mxu0 0.0
      %3322 = vmatprep.subr.mxu0 0.0
      %3323 = vmatpush1.xpose.msra.mxu0 0.0
      %3324 = vmatprep.subr.mxu0 0.0
      %3325 = vmatpush1.xpose.msra.mxu0 0.0
      %3326 = vmatprep.subr.mxu0 0.0
      %3327 = vmatpush1.xpose.msra.mxu0 0.0
      %3328 = vmatprep.subr.mxu0 0.0
      %3329 = vmatpush1.xpose.msra.mxu0 0.0
      %3330 = vmatprep.subr.mxu0 0.0
      %3331 = vmatpush1.xpose.msra.mxu0 0.0
      %3332 = vmatprep.subr.mxu0 0.0
      %3333 = vmatpush1.xpose.msra.mxu0 0.0
      %3334 = vmatprep.subr.mxu0 0.0
      %3335 = vmatpush1.xpose.msra.mxu0 0.0
      %3336 = vmatprep.subr.mxu0 0.0
      %3337 = vmatpush1.xpose.msra.mxu0 0.0
      %3338 = vmatprep.subr.mxu0 0.0
      %3339 = vmatpush1.xpose.msra.mxu0 0.0
      %3340 = vmatprep.subr.mxu0 0.0
      %3341 = vmatpush1.xpose.msra.mxu0 %v3314
      %3342 = vmatprep.subr.mxu0 0.0
      %3343 = vmatpush1.xpose.msra.mxu0 %v3312
      %3344 = vmatprep.subr.mxu0 0.0
      %3345 = vmatpush1.xpose.msra.mxu0 %v3310
      %3346 = vmatprep.subr.mxu0 0.0
      %3347 = vmatpush1.xpose.msra.mxu0 %v3308
      %3348 = vmatprep.subr.mxu0 0.0
      %3349 = vmatpush2.xpose.msra.mxu0 0.0
      %3350 = vmatprep.subr.mxu0 0.0
      %3351 = vmatpush2.xpose.msra.mxu0 0.0
      %3352 = vmatprep.subr.mxu0 0.0
      %3353 = vmatpush2.xpose.msra.mxu0 0.0
      %3354 = vmatprep.subr.mxu0 0.0
      %3355 = vmatpush2.xpose.msra.mxu0 0.0
      %3356 = vmatprep.subr.mxu0 0.0
      %3357 = vmatpush2.xpose.msra.mxu0 0.0
      %3358 = vmatprep.subr.mxu0 0.0
      %3359 = vmatpush2.xpose.msra.mxu0 0.0
      %3360 = vmatprep.subr.mxu0 0.0
      %3361 = vmatpush2.xpose.msra.mxu0 0.0
      %3362 = vmatprep.subr.mxu0 0.0
      %3363 = vmatpush2.xpose.msra.mxu0 0.0
      %3364 = vmatprep.subr.mxu0 0.0
      %3365 = vmatpush2.xpose.msra.mxu0 0.0
      %3366 = vmatprep.subr.mxu0 0.0
      %3367 = vmatpush2.xpose.msra.mxu0 0.0
      %3368 = vmatprep.subr.mxu0 0.0
      %3369 = vmatpush2.xpose.msra.mxu0 0.0
      %3370 = vmatprep.subr.mxu0 0.0
      %3371 = vmatpush2.xpose.msra.mxu0 0.0
      %3372 = vmatprep.subr.mxu0 0.0
      %3373 = vmatpush2.xpose.msra.mxu0 0.0
      %3374 = vmatprep.subr.mxu0 0.0
      %3375 = vmatpush2.xpose.msra.mxu0 0.0
      %3376 = vmatprep.subr.mxu0 0.0
      %3377 = vmatpush2.xpose.msra.mxu0 0.0
      %3378 = vmatprep.subr.mxu0 0.0
      %3379 = vmatpush2.xpose.msra.mxu0 0.0
      %3380 = vmatprep.mubr.f32.mxu0 0.0
      %3381 = vmatmul.mubr.f32.gmra.mxu0 %v3300
      %v3382 = vpop.f32.mrf.mxu0
      %v3383 = vadd.f32 %v153, %v3382
      %v3384 = vpop.f32.mrf.mxu0
      %3385 = vmatprep.mubr.f32.mxu0 0.0
      %3386 = vmatmul.mubr.f32.gmra.mxu0 %v3302
      %v3387 = vpop.f32.mrf.mxu0
      %v3388 = vadd.f32 %v154, %v3387
      %v3389 = vpop.f32.mrf.mxu0
      %3390 = vmatprep.mubr.f32.mxu0 0.0
      %3391 = vmatmul.mubr.f32.gmra.mxu0 %v3304
      %v3392 = vpop.f32.mrf.mxu0
      %v3393 = vadd.f32 %v155, %v3392
      %v3394 = vpop.f32.mrf.mxu0
      %3395 = vmatprep.mubr.f32.mxu0 0.0
      %3396 = vmatmul.mubr.f32.gmra.mxu0 %v3306
      %v3397 = vpop.f32.mrf.mxu0
      %v3398 = vadd.f32 %v156, %v3397
      %v3399 = vpop.f32.mrf.mxu0
      %3400 = vdwg.mxu0
      %v3401 = vsel %vm1640, %v3032, -inf
      %3402 = vmax.xlane.f32.xlu0 %v3401
      %v3403 = vpop.xlane.xlu0 %3402
      %v3404 = vsel %vm1640, %v3037, -inf
      %3405 = vmax.xlane.f32.xlu0 %v3404
      %v3406 = vpop.xlane.xlu0 %3405
      %v3407 = vsel %vm1640, %v3042, -inf
      %3408 = vmax.xlane.f32.xlu0 %v3407
      %v3409 = vpop.xlane.xlu0 %3408
      %v3410 = vsel %vm1650, %v3047, -inf
      %3411 = vmax.xlane.f32.xlu0 %v3410
      %v3412 = vpop.xlane.xlu0 %3411
      %v3413 = vsel %vm1640, %v3149, -inf
      %3414 = vmax.xlane.f32.xlu0 %v3413
      %v3415 = vpop.xlane.xlu0 %3414
      %v3416 = vsel %vm1640, %v3154, -inf
      %3417 = vmax.xlane.f32.xlu0 %v3416
      %v3418 = vpop.xlane.xlu0 %3417
      %v3419 = vsel %vm1640, %v3159, -inf
      %3420 = vmax.xlane.f32.xlu0 %v3419
      %v3421 = vpop.xlane.xlu0 %3420
      %v3422 = vsel %vm1650, %v3164, -inf
      %3423 = vmax.xlane.f32.xlu0 %v3422
      %v3424 = vpop.xlane.xlu0 %3423
      %v3425 = vsel %vm1640, %v3266, -inf
      %3426 = vmax.xlane.f32.xlu0 %v3425
      %v3427 = vpop.xlane.xlu0 %3426
      %v3428 = vsel %vm1640, %v3271, -inf
      %3429 = vmax.xlane.f32.xlu0 %v3428
      %v3430 = vpop.xlane.xlu0 %3429
      %v3431 = vsel %vm1640, %v3276, -inf
      %3432 = vmax.xlane.f32.xlu0 %v3431
      %v3433 = vpop.xlane.xlu0 %3432
      %v3434 = vsel %vm1650, %v3281, -inf
      %3435 = vmax.xlane.f32.xlu0 %v3434
      %v3436 = vpop.xlane.xlu0 %3435
      %v3437 = vsel %vm1640, %v3383, -inf
      %3438 = vmax.xlane.f32.xlu0 %v3437
      %v3439 = vpop.xlane.xlu0 %3438
      %v3440 = vsel %vm1640, %v3388, -inf
      %3441 = vmax.xlane.f32.xlu0 %v3440
      %v3442 = vpop.xlane.xlu0 %3441
      %v3443 = vsel %vm1640, %v3393, -inf
      %3444 = vmax.xlane.f32.xlu0 %v3443
      %v3445 = vpop.xlane.xlu0 %3444
      %v3446 = vsel %vm1650, %v3398, -inf
      %3447 = vmax.xlane.f32.xlu0 %v3446
      %v3448 = vpop.xlane.xlu0 %3447
      %v3449 = vsub.f32 %v3032, %v3403
      %v3450 = vsub.f32 %v3037, %v3406
      %v3451 = vsub.f32 %v3042, %v3409
      %v3452 = vsub.f32 %v3047, %v3412
      %v3453 = vsub.f32 %v3149, %v3415
      %v3454 = vsub.f32 %v3154, %v3418
      %v3455 = vsub.f32 %v3159, %v3421
      %v3456 = vsub.f32 %v3164, %v3424
      %v3457 = vsub.f32 %v3266, %v3427
      %v3458 = vsub.f32 %v3271, %v3430
      %v3459 = vsub.f32 %v3276, %v3433
      %v3460 = vsub.f32 %v3281, %v3436
      %v3461 = vsub.f32 %v3383, %v3439
      %v3462 = vsub.f32 %v3388, %v3442
      %v3463 = vsub.f32 %v3393, %v3445
      %v3464 = vsub.f32 %v3398, %v3448
      %v3465 = vmul.f32 %v3449, 1.442695
      %v3466 = vpow.pop %v3465
      %v3467 = vmul.f32 %v3450, 1.442695
      %v3468 = vpow.pop %v3467
      %v3469 = vmul.f32 %v3451, 1.442695
      %v3470 = vpow.pop %v3469
      %v3471 = vmul.f32 %v3452, 1.442695
      %v3472 = vpow.pop %v3471
      %v3473 = vmul.f32 %v3453, 1.442695
      %v3474 = vpow.pop %v3473
      %v3475 = vmul.f32 %v3454, 1.442695
      %v3476 = vpow.pop %v3475
      %v3477 = vmul.f32 %v3455, 1.442695
      %v3478 = vpow.pop %v3477
      %v3479 = vmul.f32 %v3456, 1.442695
      %v3480 = vpow.pop %v3479
      %v3481 = vmul.f32 %v3457, 1.442695
      %v3482 = vpow.pop %v3481
      %v3483 = vmul.f32 %v3458, 1.442695
      %v3484 = vpow.pop %v3483
      %v3485 = vmul.f32 %v3459, 1.442695
      %v3486 = vpow.pop %v3485
      %v3487 = vmul.f32 %v3460, 1.442695
      %v3488 = vpow.pop %v3487
      %v3489 = vmul.f32 %v3461, 1.442695
      %v3490 = vpow.pop %v3489
      %v3491 = vmul.f32 %v3462, 1.442695
      %v3492 = vpow.pop %v3491
      %v3493 = vmul.f32 %v3463, 1.442695
      %v3494 = vpow.pop %v3493
      %v3495 = vmul.f32 %v3464, 1.442695
      %v3496 = vpow.pop %v3495
      %v3497 = vsel %vm1640, %v3466, 0.0
      %3498 = vadd.xlane.f32.xlu0 %v3497
      %v3499 = vpop.xlane.xlu0 %3498
      %v3500 = vsel %vm1640, %v3468, 0.0
      %3501 = vadd.xlane.f32.xlu0 %v3500
      %v3502 = vpop.xlane.xlu0 %3501
      %v3503 = vsel %vm1640, %v3470, 0.0
      %3504 = vadd.xlane.f32.xlu0 %v3503
      %v3505 = vpop.xlane.xlu0 %3504
      %v3506 = vsel %vm1650, %v3472, 0.0
      %3507 = vadd.xlane.f32.xlu0 %v3506
      %v3508 = vpop.xlane.xlu0 %3507
      %v3509 = vsel %vm1640, %v3474, 0.0
      %3510 = vadd.xlane.f32.xlu0 %v3509
      %v3511 = vpop.xlane.xlu0 %3510
      %v3512 = vsel %vm1640, %v3476, 0.0
      %3513 = vadd.xlane.f32.xlu0 %v3512
      %v3514 = vpop.xlane.xlu0 %3513
      %v3515 = vsel %vm1640, %v3478, 0.0
      %3516 = vadd.xlane.f32.xlu0 %v3515
      %v3517 = vpop.xlane.xlu0 %3516
      %v3518 = vsel %vm1650, %v3480, 0.0
      %3519 = vadd.xlane.f32.xlu0 %v3518
      %v3520 = vpop.xlane.xlu0 %3519
      %v3521 = vsel %vm1640, %v3482, 0.0
      %3522 = vadd.xlane.f32.xlu0 %v3521
      %v3523 = vpop.xlane.xlu0 %3522
      %v3524 = vsel %vm1640, %v3484, 0.0
      %3525 = vadd.xlane.f32.xlu0 %v3524
      %v3526 = vpop.xlane.xlu0 %3525
      %v3527 = vsel %vm1640, %v3486, 0.0
      %3528 = vadd.xlane.f32.xlu0 %v3527
      %v3529 = vpop.xlane.xlu0 %3528
      %v3530 = vsel %vm1650, %v3488, 0.0
      %3531 = vadd.xlane.f32.xlu0 %v3530
      %v3532 = vpop.xlane.xlu0 %3531
      %v3533 = vsel %vm1640, %v3490, 0.0
      %3534 = vadd.xlane.f32.xlu0 %v3533
      %v3535 = vpop.xlane.xlu0 %3534
      %v3536 = vsel %vm1640, %v3492, 0.0
      %3537 = vadd.xlane.f32.xlu0 %v3536
      %v3538 = vpop.xlane.xlu0 %3537
      %v3539 = vsel %vm1640, %v3494, 0.0
      %3540 = vadd.xlane.f32.xlu0 %v3539
      %v3541 = vpop.xlane.xlu0 %3540
      %v3542 = vsel %vm1650, %v3496, 0.0
      %3543 = vadd.xlane.f32.xlu0 %v3542
      %v3544 = vpop.xlane.xlu0 %3543
      %v3545 = vrcp.pop %v3499
      %v3546 = vmul.f32 %v3466, %v3545
      %v3547 = vrcp.pop %v3502
      %v3548 = vmul.f32 %v3468, %v3547
      %v3549 = vrcp.pop %v3505
      %v3550 = vmul.f32 %v3470, %v3549
      %v3551 = vrcp.pop %v3508
      %v3552 = vmul.f32 %v3472, %v3551
      %v3553 = vrcp.pop %v3511
      %v3554 = vmul.f32 %v3474, %v3553
      %v3555 = vrcp.pop %v3514
      %v3556 = vmul.f32 %v3476, %v3555
      %v3557 = vrcp.pop %v3517
      %v3558 = vmul.f32 %v3478, %v3557
      %v3559 = vrcp.pop %v3520
      %v3560 = vmul.f32 %v3480, %v3559
      %v3561 = vrcp.pop %v3523
      %v3562 = vmul.f32 %v3482, %v3561
      %v3563 = vrcp.pop %v3526
      %v3564 = vmul.f32 %v3484, %v3563
      %v3565 = vrcp.pop %v3529
      %v3566 = vmul.f32 %v3486, %v3565
      %v3567 = vrcp.pop %v3532
      %v3568 = vmul.f32 %v3488, %v3567
      %v3569 = vrcp.pop %v3535
      %v3570 = vmul.f32 %v3490, %v3569
      %v3571 = vrcp.pop %v3538
      %v3572 = vmul.f32 %v3492, %v3571
      %v3573 = vrcp.pop %v3541
      %v3574 = vmul.f32 %v3494, %v3573
      %v3575 = vrcp.pop %v3544
      %v3576 = vmul.f32 %v3496, %v3575
      %3577 = vrot.lane.b32.xlu0 %v2911, 64
      %v3578 = vpop.permute.xlu0 %3577
      %3579 = vrot.lane.b32.xlu0 %v2916, 64
      %v3580 = vpop.permute.xlu0 %3579
      %3581 = vrot.lane.b32.xlu0 %v2921, 64
      %v3582 = vpop.permute.xlu0 %3581
      %3583 = vrot.lane.b32.xlu0 %v2926, 64
      %v3584 = vpop.permute.xlu0 %3583
      %v3589 = vsel %vm1640, %v3546, 0
      %v3592 = vsel %vm1640, %v3548, 0
      %v3595 = vsel %vm1640, %v3550, 0
      %v3598 = vsel %vm1640, %v3552, 0
      %v3600 = vsel %vm1841, %v3584, 0
      %3602 = vmatprep.subr.mxu0 0.0
      %3603 = vmatpush1.msra.mxu0 0.0
      %3604 = vmatprep.subr.mxu0 0.0
      %3605 = vmatpush1.msra.mxu0 0.0
      %3606 = vmatprep.subr.mxu0 0.0
      %3607 = vmatpush1.msra.mxu0 0.0
      %3608 = vmatprep.subr.mxu0 0.0
      %3609 = vmatpush1.msra.mxu0 0.0
      %3610 = vmatprep.subr.mxu0 0.0
      %3611 = vmatpush1.msra.mxu0 0.0
      %3612 = vmatprep.subr.mxu0 0.0
      %3613 = vmatpush1.msra.mxu0 0.0
      %3614 = vmatprep.subr.mxu0 0.0
      %3615 = vmatpush1.msra.mxu0 0.0
      %3616 = vmatprep.subr.mxu0 0.0
      %3617 = vmatpush1.msra.mxu0 0.0
      %3618 = vmatprep.subr.mxu0 0.0
      %3619 = vmatpush1.msra.mxu0 0.0
      %3620 = vmatprep.subr.mxu0 0.0
      %3621 = vmatpush1.msra.mxu0 0.0
      %3622 = vmatprep.subr.mxu0 0.0
      %3623 = vmatpush1.msra.mxu0 0.0
      %3624 = vmatprep.subr.mxu0 0.0
      %3625 = vmatpush1.msra.mxu0 0.0
      %3626 = vmatprep.subr.mxu0 0.0
      %3627 = vmatpush1.msra.mxu0 %v3600
      %3628 = vmatprep.subr.mxu0 0.0
      %3629 = vmatpush1.msra.mxu0 %v3582
      %3630 = vmatprep.subr.mxu0 0.0
      %3631 = vmatpush1.msra.mxu0 %v3580
      %3632 = vmatprep.subr.mxu0 0.0
      %3633 = vmatpush1.msra.mxu0 %v3578
      %3634 = vmatprep.subr.mxu0 0.0
      %3635 = vmatpush2.msra.mxu0 0.0
      %3636 = vmatprep.subr.mxu0 0.0
      %3637 = vmatpush2.msra.mxu0 0.0
      %3638 = vmatprep.subr.mxu0 0.0
      %3639 = vmatpush2.msra.mxu0 0.0
      %3640 = vmatprep.subr.mxu0 0.0
      %3641 = vmatpush2.msra.mxu0 0.0
      %3642 = vmatprep.subr.mxu0 0.0
      %3643 = vmatpush2.msra.mxu0 0.0
      %3644 = vmatprep.subr.mxu0 0.0
      %3645 = vmatpush2.msra.mxu0 0.0
      %3646 = vmatprep.subr.mxu0 0.0
      %3647 = vmatpush2.msra.mxu0 0.0
      %3648 = vmatprep.subr.mxu0 0.0
      %3649 = vmatpush2.msra.mxu0 0.0
      %3650 = vmatprep.subr.mxu0 0.0
      %3651 = vmatpush2.msra.mxu0 0.0
      %3652 = vmatprep.subr.mxu0 0.0
      %3653 = vmatpush2.msra.mxu0 0.0
      %3654 = vmatprep.subr.mxu0 0.0
      %3655 = vmatpush2.msra.mxu0 0.0
      %3656 = vmatprep.subr.mxu0 0.0
      %3657 = vmatpush2.msra.mxu0 0.0
      %3658 = vmatprep.subr.mxu0 0.0
      %3659 = vmatpush2.msra.mxu0 0.0
      %3660 = vmatprep.subr.mxu0 0.0
      %3661 = vmatpush2.msra.mxu0 0.0
      %3662 = vmatprep.subr.mxu0 0.0
      %3663 = vmatpush2.msra.mxu0 0.0
      %3664 = vmatprep.subr.mxu0 0.0
      %3665 = vmatpush2.msra.mxu0 0.0
      %3666 = vmatprep.mubr.f32.mxu0 0.0
      %3667 = vmatmul.mubr.f32.gmra.mxu0 %v3589
      %v3668 = vpop.f32.mrf.mxu0
      %v3669 = vadd.f32 0.0, %v3668
      %v3670 = vpop.f32.mrf.mxu0
      %3671 = vmatprep.mubr.f32.mxu0 0.0
      %3672 = vmatmul.mubr.f32.gmra.mxu0 %v3592
      %v3673 = vpop.f32.mrf.mxu0
      %v3674 = vadd.f32 0.0, %v3673
      %v3675 = vpop.f32.mrf.mxu0
      %3676 = vmatprep.mubr.f32.mxu0 0.0
      %3677 = vmatmul.mubr.f32.gmra.mxu0 %v3595
      %v3678 = vpop.f32.mrf.mxu0
      %v3679 = vadd.f32 0.0, %v3678
      %v3680 = vpop.f32.mrf.mxu0
      %3681 = vmatprep.mubr.f32.mxu0 0.0
      %3682 = vmatmul.mubr.f32.gmra.mxu0 %v3598
      %v3683 = vpop.f32.mrf.mxu0
      %v3684 = vadd.f32 0.0, %v3683
      %v3685 = vpop.f32.mrf.mxu0
      %3686 = vdwg.mxu0
      %3687 = vrot.lane.b32.xlu0 %v2911, 56
      %v3688 = vpop.permute.xlu0 %3687
      %3689 = vrot.lane.b32.xlu0 %v2916, 56
      %v3690 = vpop.permute.xlu0 %3689
      %3691 = vrot.lane.b32.xlu0 %v2921, 56
      %v3692 = vpop.permute.xlu0 %3691
      %3693 = vrot.lane.b32.xlu0 %v2926, 56
      %v3694 = vpop.permute.xlu0 %3693
      %v3699 = vsel %vm1640, %v3554, 0
      %v3702 = vsel %vm1640, %v3556, 0
      %v3705 = vsel %vm1640, %v3558, 0
      %v3708 = vsel %vm1640, %v3560, 0
      %v3710 = vsel %vm1841, %v3694, 0
      %3712 = vmatprep.subr.mxu0 0.0
      %3713 = vmatpush1.msra.mxu0 0.0
      %3714 = vmatprep.subr.mxu0 0.0
      %3715 = vmatpush1.msra.mxu0 0.0
      %3716 = vmatprep.subr.mxu0 0.0
      %3717 = vmatpush1.msra.mxu0 0.0
      %3718 = vmatprep.subr.mxu0 0.0
      %3719 = vmatpush1.msra.mxu0 0.0
      %3720 = vmatprep.subr.mxu0 0.0
      %3721 = vmatpush1.msra.mxu0 0.0
      %3722 = vmatprep.subr.mxu0 0.0
      %3723 = vmatpush1.msra.mxu0 0.0
      %3724 = vmatprep.subr.mxu0 0.0
      %3725 = vmatpush1.msra.mxu0 0.0
      %3726 = vmatprep.subr.mxu0 0.0
      %3727 = vmatpush1.msra.mxu0 0.0
      %3728 = vmatprep.subr.mxu0 0.0
      %3729 = vmatpush1.msra.mxu0 0.0
      %3730 = vmatprep.subr.mxu0 0.0
      %3731 = vmatpush1.msra.mxu0 0.0
      %3732 = vmatprep.subr.mxu0 0.0
      %3733 = vmatpush1.msra.mxu0 0.0
      %3734 = vmatprep.subr.mxu0 0.0
      %3735 = vmatpush1.msra.mxu0 0.0
      %3736 = vmatprep.subr.mxu0 0.0
      %3737 = vmatpush1.msra.mxu0 %v3710
      %3738 = vmatprep.subr.mxu0 0.0
      %3739 = vmatpush1.msra.mxu0 %v3692
      %3740 = vmatprep.subr.mxu0 0.0
      %3741 = vmatpush1.msra.mxu0 %v3690
      %3742 = vmatprep.subr.mxu0 0.0
      %3743 = vmatpush1.msra.mxu0 %v3688
      %3744 = vmatprep.subr.mxu0 0.0
      %3745 = vmatpush2.msra.mxu0 0.0
      %3746 = vmatprep.subr.mxu0 0.0
      %3747 = vmatpush2.msra.mxu0 0.0
      %3748 = vmatprep.subr.mxu0 0.0
      %3749 = vmatpush2.msra.mxu0 0.0
      %3750 = vmatprep.subr.mxu0 0.0
      %3751 = vmatpush2.msra.mxu0 0.0
      %3752 = vmatprep.subr.mxu0 0.0
      %3753 = vmatpush2.msra.mxu0 0.0
      %3754 = vmatprep.subr.mxu0 0.0
      %3755 = vmatpush2.msra.mxu0 0.0
      %3756 = vmatprep.subr.mxu0 0.0
      %3757 = vmatpush2.msra.mxu0 0.0
      %3758 = vmatprep.subr.mxu0 0.0
      %3759 = vmatpush2.msra.mxu0 0.0
      %3760 = vmatprep.subr.mxu0 0.0
      %3761 = vmatpush2.msra.mxu0 0.0
      %3762 = vmatprep.subr.mxu0 0.0
      %3763 = vmatpush2.msra.mxu0 0.0
      %3764 = vmatprep.subr.mxu0 0.0
      %3765 = vmatpush2.msra.mxu0 0.0
      %3766 = vmatprep.subr.mxu0 0.0
      %3767 = vmatpush2.msra.mxu0 0.0
      %3768 = vmatprep.subr.mxu0 0.0
      %3769 = vmatpush2.msra.mxu0 0.0
      %3770 = vmatprep.subr.mxu0 0.0
      %3771 = vmatpush2.msra.mxu0 0.0
      %3772 = vmatprep.subr.mxu0 0.0
      %3773 = vmatpush2.msra.mxu0 0.0
      %3774 = vmatprep.subr.mxu0 0.0
      %3775 = vmatpush2.msra.mxu0 0.0
      %3776 = vmatprep.mubr.f32.mxu0 0.0
      %3777 = vmatmul.mubr.f32.gmra.mxu0 %v3699
      %v3778 = vpop.f32.mrf.mxu0
      %v3779 = vadd.f32 0.0, %v3778
      %v3780 = vpop.f32.mrf.mxu0
      %3781 = vmatprep.mubr.f32.mxu0 0.0
      %3782 = vmatmul.mubr.f32.gmra.mxu0 %v3702
      %v3783 = vpop.f32.mrf.mxu0
      %v3784 = vadd.f32 0.0, %v3783
      %v3785 = vpop.f32.mrf.mxu0
      %3786 = vmatprep.mubr.f32.mxu0 0.0
      %3787 = vmatmul.mubr.f32.gmra.mxu0 %v3705
      %v3788 = vpop.f32.mrf.mxu0
      %v3789 = vadd.f32 0.0, %v3788
      %v3790 = vpop.f32.mrf.mxu0
      %3791 = vmatprep.mubr.f32.mxu0 0.0
      %3792 = vmatmul.mubr.f32.gmra.mxu0 %v3708
      %v3793 = vpop.f32.mrf.mxu0
      %v3794 = vadd.f32 0.0, %v3793
      %v3795 = vpop.f32.mrf.mxu0
      %3796 = vdwg.mxu0
      %3797 = vrot.lane.b32.xlu0 %v2911, 48
      %v3798 = vpop.permute.xlu0 %3797
      %3799 = vrot.lane.b32.xlu0 %v2916, 48
      %v3800 = vpop.permute.xlu0 %3799
      %3801 = vrot.lane.b32.xlu0 %v2921, 48
      %v3802 = vpop.permute.xlu0 %3801
      %3803 = vrot.lane.b32.xlu0 %v2926, 48
      %v3804 = vpop.permute.xlu0 %3803
      %v3809 = vsel %vm1640, %v3562, 0
      %v3812 = vsel %vm1640, %v3564, 0
      %v3815 = vsel %vm1640, %v3566, 0
      %v3818 = vsel %vm1640, %v3568, 0
      %v3820 = vsel %vm1841, %v3804, 0
      %3822 = vmatprep.subr.mxu0 0.0
      %3823 = vmatpush1.msra.mxu0 0.0
      %3824 = vmatprep.subr.mxu0 0.0
      %3825 = vmatpush1.msra.mxu0 0.0
      %3826 = vmatprep.subr.mxu0 0.0
      %3827 = vmatpush1.msra.mxu0 0.0
      %3828 = vmatprep.subr.mxu0 0.0
      %3829 = vmatpush1.msra.mxu0 0.0
      %3830 = vmatprep.subr.mxu0 0.0
      %3831 = vmatpush1.msra.mxu0 0.0
      %3832 = vmatprep.subr.mxu0 0.0
      %3833 = vmatpush1.msra.mxu0 0.0
      %3834 = vmatprep.subr.mxu0 0.0
      %3835 = vmatpush1.msra.mxu0 0.0
      %3836 = vmatprep.subr.mxu0 0.0
      %3837 = vmatpush1.msra.mxu0 0.0
      %3838 = vmatprep.subr.mxu0 0.0
      %3839 = vmatpush1.msra.mxu0 0.0
      %3840 = vmatprep.subr.mxu0 0.0
      %3841 = vmatpush1.msra.mxu0 0.0
      %3842 = vmatprep.subr.mxu0 0.0
      %3843 = vmatpush1.msra.mxu0 0.0
      %3844 = vmatprep.subr.mxu0 0.0
      %3845 = vmatpush1.msra.mxu0 0.0
      %3846 = vmatprep.subr.mxu0 0.0
      %3847 = vmatpush1.msra.mxu0 %v3820
      %3848 = vmatprep.subr.mxu0 0.0
      %3849 = vmatpush1.msra.mxu0 %v3802
      %3850 = vmatprep.subr.mxu0 0.0
      %3851 = vmatpush1.msra.mxu0 %v3800
      %3852 = vmatprep.subr.mxu0 0.0
      %3853 = vmatpush1.msra.mxu0 %v3798
      %3854 = vmatprep.subr.mxu0 0.0
      %3855 = vmatpush2.msra.mxu0 0.0
      %3856 = vmatprep.subr.mxu0 0.0
      %3857 = vmatpush2.msra.mxu0 0.0
      %3858 = vmatprep.subr.mxu0 0.0
      %3859 = vmatpush2.msra.mxu0 0.0
      %3860 = vmatprep.subr.mxu0 0.0
      %3861 = vmatpush2.msra.mxu0 0.0
      %3862 = vmatprep.subr.mxu0 0.0
      %3863 = vmatpush2.msra.mxu0 0.0
      %3864 = vmatprep.subr.mxu0 0.0
      %3865 = vmatpush2.msra.mxu0 0.0
      %3866 = vmatprep.subr.mxu0 0.0
      %3867 = vmatpush2.msra.mxu0 0.0
      %3868 = vmatprep.subr.mxu0 0.0
      %3869 = vmatpush2.msra.mxu0 0.0
      %3870 = vmatprep.subr.mxu0 0.0
      %3871 = vmatpush2.msra.mxu0 0.0
      %3872 = vmatprep.subr.mxu0 0.0
      %3873 = vmatpush2.msra.mxu0 0.0
      %3874 = vmatprep.subr.mxu0 0.0
      %3875 = vmatpush2.msra.mxu0 0.0
      %3876 = vmatprep.subr.mxu0 0.0
      %3877 = vmatpush2.msra.mxu0 0.0
      %3878 = vmatprep.subr.mxu0 0.0
      %3879 = vmatpush2.msra.mxu0 0.0
      %3880 = vmatprep.subr.mxu0 0.0
      %3881 = vmatpush2.msra.mxu0 0.0
      %3882 = vmatprep.subr.mxu0 0.0
      %3883 = vmatpush2.msra.mxu0 0.0
      %3884 = vmatprep.subr.mxu0 0.0
      %3885 = vmatpush2.msra.mxu0 0.0
      %3886 = vmatprep.mubr.f32.mxu0 0.0
      %3887 = vmatmul.mubr.f32.gmra.mxu0 %v3809
      %v3888 = vpop.f32.mrf.mxu0
      %v3889 = vadd.f32 0.0, %v3888
      %v3890 = vpop.f32.mrf.mxu0
      %3891 = vmatprep.mubr.f32.mxu0 0.0
      %3892 = vmatmul.mubr.f32.gmra.mxu0 %v3812
      %v3893 = vpop.f32.mrf.mxu0
      %v3894 = vadd.f32 0.0, %v3893
      %v3895 = vpop.f32.mrf.mxu0
      %3896 = vmatprep.mubr.f32.mxu0 0.0
      %3897 = vmatmul.mubr.f32.gmra.mxu0 %v3815
      %v3898 = vpop.f32.mrf.mxu0
      %v3899 = vadd.f32 0.0, %v3898
      %v3900 = vpop.f32.mrf.mxu0
      %3901 = vmatprep.mubr.f32.mxu0 0.0
      %3902 = vmatmul.mubr.f32.gmra.mxu0 %v3818
      %v3903 = vpop.f32.mrf.mxu0
      %v3904 = vadd.f32 0.0, %v3903
      %v3905 = vpop.f32.mrf.mxu0
      %3906 = vdwg.mxu0
      %3907 = vrot.lane.b32.xlu0 %v2911, 40
      %v3908 = vpop.permute.xlu0 %3907
      %3909 = vrot.lane.b32.xlu0 %v2916, 40
      %v3910 = vpop.permute.xlu0 %3909
      %3911 = vrot.lane.b32.xlu0 %v2921, 40
      %v3912 = vpop.permute.xlu0 %3911
      %3913 = vrot.lane.b32.xlu0 %v2926, 40
      %v3914 = vpop.permute.xlu0 %3913
      %v3919 = vsel %vm1640, %v3570, 0
      %v3922 = vsel %vm1640, %v3572, 0
      %v3925 = vsel %vm1640, %v3574, 0
      %v3928 = vsel %vm1640, %v3576, 0
      %v3930 = vsel %vm1841, %v3914, 0
      %3932 = vmatprep.subr.mxu0 0.0
      %3933 = vmatpush1.msra.mxu0 0.0
      %3934 = vmatprep.subr.mxu0 0.0
      %3935 = vmatpush1.msra.mxu0 0.0
      %3936 = vmatprep.subr.mxu0 0.0
      %3937 = vmatpush1.msra.mxu0 0.0
      %3938 = vmatprep.subr.mxu0 0.0
      %3939 = vmatpush1.msra.mxu0 0.0
      %3940 = vmatprep.subr.mxu0 0.0
      %3941 = vmatpush1.msra.mxu0 0.0
      %3942 = vmatprep.subr.mxu0 0.0
      %3943 = vmatpush1.msra.mxu0 0.0
      %3944 = vmatprep.subr.mxu0 0.0
      %3945 = vmatpush1.msra.mxu0 0.0
      %3946 = vmatprep.subr.mxu0 0.0
      %3947 = vmatpush1.msra.mxu0 0.0
      %3948 = vmatprep.subr.mxu0 0.0
      %3949 = vmatpush1.msra.mxu0 0.0
      %3950 = vmatprep.subr.mxu0 0.0
      %3951 = vmatpush1.msra.mxu0 0.0
      %3952 = vmatprep.subr.mxu0 0.0
      %3953 = vmatpush1.msra.mxu0 0.0
      %3954 = vmatprep.subr.mxu0 0.0
      %3955 = vmatpush1.msra.mxu0 0.0
      %3956 = vmatprep.subr.mxu0 0.0
      %3957 = vmatpush1.msra.mxu0 %v3930
      %3958 = vmatprep.subr.mxu0 0.0
      %3959 = vmatpush1.msra.mxu0 %v3912
      %3960 = vmatprep.subr.mxu0 0.0
      %3961 = vmatpush1.msra.mxu0 %v3910
      %3962 = vmatprep.subr.mxu0 0.0
      %3963 = vmatpush1.msra.mxu0 %v3908
      %3964 = vmatprep.subr.mxu0 0.0
      %3965 = vmatpush2.msra.mxu0 0.0
      %3966 = vmatprep.subr.mxu0 0.0
      %3967 = vmatpush2.msra.mxu0 0.0
      %3968 = vmatprep.subr.mxu0 0.0
      %3969 = vmatpush2.msra.mxu0 0.0
      %3970 = vmatprep.subr.mxu0 0.0
      %3971 = vmatpush2.msra.mxu0 0.0
      %3972 = vmatprep.subr.mxu0 0.0
      %3973 = vmatpush2.msra.mxu0 0.0
      %3974 = vmatprep.subr.mxu0 0.0
      %3975 = vmatpush2.msra.mxu0 0.0
      %3976 = vmatprep.subr.mxu0 0.0
      %3977 = vmatpush2.msra.mxu0 0.0
      %3978 = vmatprep.subr.mxu0 0.0
      %3979 = vmatpush2.msra.mxu0 0.0
      %3980 = vmatprep.subr.mxu0 0.0
      %3981 = vmatpush2.msra.mxu0 0.0
      %3982 = vmatprep.subr.mxu0 0.0
      %3983 = vmatpush2.msra.mxu0 0.0
      %3984 = vmatprep.subr.mxu0 0.0
      %3985 = vmatpush2.msra.mxu0 0.0
      %3986 = vmatprep.subr.mxu0 0.0
      %3987 = vmatpush2.msra.mxu0 0.0
      %3988 = vmatprep.subr.mxu0 0.0
      %3989 = vmatpush2.msra.mxu0 0.0
      %3990 = vmatprep.subr.mxu0 0.0
      %3991 = vmatpush2.msra.mxu0 0.0
      %3992 = vmatprep.subr.mxu0 0.0
      %3993 = vmatpush2.msra.mxu0 0.0
      %3994 = vmatprep.subr.mxu0 0.0
      %3995 = vmatpush2.msra.mxu0 0.0
      %3996 = vmatprep.mubr.f32.mxu0 0.0
      %3997 = vmatmul.mubr.f32.gmra.mxu0 %v3919
      %v3998 = vpop.f32.mrf.mxu0
      %v3999 = vadd.f32 0.0, %v3998
      %v4000 = vpop.f32.mrf.mxu0
      %4001 = vmatprep.mubr.f32.mxu0 0.0
      %4002 = vmatmul.mubr.f32.gmra.mxu0 %v3922
      %v4003 = vpop.f32.mrf.mxu0
      %v4004 = vadd.f32 0.0, %v4003
      %v4005 = vpop.f32.mrf.mxu0
      %4006 = vmatprep.mubr.f32.mxu0 0.0
      %4007 = vmatmul.mubr.f32.gmra.mxu0 %v3925
      %v4008 = vpop.f32.mrf.mxu0
      %v4009 = vadd.f32 0.0, %v4008
      %v4010 = vpop.f32.mrf.mxu0
      %4011 = vmatprep.mubr.f32.mxu0 0.0
      %4012 = vmatmul.mubr.f32.gmra.mxu0 %v3928
      %v4013 = vpop.f32.mrf.mxu0
      %v4014 = vadd.f32 0.0, %v4013
      %v4015 = vpop.f32.mrf.mxu0
      %4016 = vdwg.mxu0
      %4021 = vrot.lane.b32.xlu0 %v3779, 8
      %v4022 = vpop.permute.xlu0 %4021
      %4023 = vrot.lane.b32.xlu0 %v3784, 8
      %v4024 = vpop.permute.xlu0 %4023
      %4025 = vrot.lane.b32.xlu0 %v3789, 8
      %v4026 = vpop.permute.xlu0 %4025
      %4027 = vrot.lane.b32.xlu0 %v3794, 8
      %v4028 = vpop.permute.xlu0 %4027
      %4037 = vrot.lane.b32.xlu0 %v3889, 16
      %v4038 = vpop.permute.xlu0 %4037
      %4039 = vrot.lane.b32.xlu0 %v3894, 16
      %v4040 = vpop.permute.xlu0 %4039
      %4041 = vrot.lane.b32.xlu0 %v3899, 16
      %v4042 = vpop.permute.xlu0 %4041
      %4043 = vrot.lane.b32.xlu0 %v3904, 16
      %v4044 = vpop.permute.xlu0 %4043
      %4053 = vrot.lane.b32.xlu0 %v3999, 24
      %v4054 = vpop.permute.xlu0 %4053
      %4055 = vrot.lane.b32.xlu0 %v4004, 24
      %v4056 = vpop.permute.xlu0 %4055
      %4057 = vrot.lane.b32.xlu0 %v4009, 24
      %v4058 = vpop.permute.xlu0 %4057
      %4059 = vrot.lane.b32.xlu0 %v4014, 24
      %v4060 = vpop.permute.xlu0 %4059
      %v4065 = vsel %vm1183, %v3669, %v4022
      %v4066 = vsel %vm1183, %v3674, %v4024
      %v4067 = vsel %vm1183, %v3679, %v4026
      %v4068 = vsel %vm1183, %v3684, %v4028
      %v4069 = vsel %vm199, %v4065, %v4038
      %v4070 = vsel %vm199, %v4066, %v4040
      %v4071 = vsel %vm199, %v4067, %v4042
      %v4072 = vsel %vm199, %v4068, %v4044
      %v4073 = vsel %vm2315, %v4069, %v4054
      %v4074 = vsel %vm2315, %v4070, %v4056
      %v4075 = vsel %vm2315, %v4071, %v4058
      %v4076 = vsel %vm2315, %v4072, %v4060
      %v4077 = vlaneseq
      %v4078 = vshrl.u32 %v4077, 7
      %v4079 = vsub.s32 0, %v4078
      %v4080 = vrot.slane %v182, %v4079
      %4085 = vrot.lane.b32.xlu0 %v178, 32
      %v4086 = vpop.permute.xlu0 %4085
      %4087 = vrot.lane.b32.xlu0 %v179, 32
      %v4088 = vpop.permute.xlu0 %4087
      %4089 = vrot.lane.b32.xlu0 %v180, 32
      %v4090 = vpop.permute.xlu0 %4089
      %4091 = vrot.lane.b32.xlu0 %v181, 32
      %v4092 = vpop.permute.xlu0 %4091
      %v4098 = vsel %vm285, %v4073, 0
      %v4101 = vsel %vm285, %v4074, 0
      %v4104 = vsel %vm285, %v4075, 0
      %v4107 = vsel %vm285, %v4076, 0
      %4109 = vmatprep.subr.mxu0 0.0
      %4110 = vmatpush1.msra.mxu0 0.0
      %4111 = vmatprep.subr.mxu0 0.0
      %4112 = vmatpush1.msra.mxu0 0.0
      %4113 = vmatprep.subr.mxu0 0.0
      %4114 = vmatpush1.msra.mxu0 0.0
      %4115 = vmatprep.subr.mxu0 0.0
      %4116 = vmatpush1.msra.mxu0 0.0
      %4117 = vmatprep.subr.mxu0 0.0
      %4118 = vmatpush1.msra.mxu0 0.0
      %4119 = vmatprep.subr.mxu0 0.0
      %4120 = vmatpush1.msra.mxu0 0.0
      %4121 = vmatprep.subr.mxu0 0.0
      %4122 = vmatpush1.msra.mxu0 0.0
      %4123 = vmatprep.subr.mxu0 0.0
      %4124 = vmatpush1.msra.mxu0 0.0
      %4125 = vmatprep.subr.mxu0 0.0
      %4126 = vmatpush1.msra.mxu0 0.0
      %4127 = vmatprep.subr.mxu0 0.0
      %4128 = vmatpush1.msra.mxu0 0.0
      %4129 = vmatprep.subr.mxu0 0.0
      %4130 = vmatpush1.msra.mxu0 0.0
      %4131 = vmatprep.subr.mxu0 0.0
      %4132 = vmatpush1.msra.mxu0 0.0
      %4133 = vmatprep.subr.mxu0 0.0
      %4134 = vmatpush1.msra.mxu0 %v4092
      %4135 = vmatprep.subr.mxu0 0.0
      %4136 = vmatpush1.msra.mxu0 %v4090
      %4137 = vmatprep.subr.mxu0 0.0
      %4138 = vmatpush1.msra.mxu0 %v4088
      %4139 = vmatprep.subr.mxu0 0.0
      %4140 = vmatpush1.msra.mxu0 %v4086
      %4141 = vmatprep.subr.mxu0 0.0
      %4142 = vmatpush2.msra.mxu0 0.0
      %4143 = vmatprep.subr.mxu0 0.0
      %4144 = vmatpush2.msra.mxu0 0.0
      %4145 = vmatprep.subr.mxu0 0.0
      %4146 = vmatpush2.msra.mxu0 0.0
      %4147 = vmatprep.subr.mxu0 0.0
      %4148 = vmatpush2.msra.mxu0 0.0
      %4149 = vmatprep.subr.mxu0 0.0
      %4150 = vmatpush2.msra.mxu0 0.0
      %4151 = vmatprep.subr.mxu0 0.0
      %4152 = vmatpush2.msra.mxu0 0.0
      %4153 = vmatprep.subr.mxu0 0.0
      %4154 = vmatpush2.msra.mxu0 0.0
      %4155 = vmatprep.subr.mxu0 0.0
      %4156 = vmatpush2.msra.mxu0 0.0
      %4157 = vmatprep.subr.mxu0 0.0
      %4158 = vmatpush2.msra.mxu0 0.0
      %4159 = vmatprep.subr.mxu0 0.0
      %4160 = vmatpush2.msra.mxu0 0.0
      %4161 = vmatprep.subr.mxu0 0.0
      %4162 = vmatpush2.msra.mxu0 0.0
      %4163 = vmatprep.subr.mxu0 0.0
      %4164 = vmatpush2.msra.mxu0 0.0
      %4165 = vmatprep.subr.mxu0 0.0
      %4166 = vmatpush2.msra.mxu0 0.0
      %4167 = vmatprep.subr.mxu0 0.0
      %4168 = vmatpush2.msra.mxu0 0.0
      %4169 = vmatprep.subr.mxu0 0.0
      %4170 = vmatpush2.msra.mxu0 0.0
      %4171 = vmatprep.subr.mxu0 0.0
      %4172 = vmatpush2.msra.mxu0 0.0
      %4173 = vmatprep.mubr.f32.mxu0 0.0
      %4174 = vmatmul.mubr.f32.gmra.mxu0 %v4098
      %v4175 = vpop.f32.mrf.mxu0
      %v4176 = vadd.f32 %v4080, %v4175
      %v4177 = vpop.f32.mrf.mxu0
      %4178 = vmatprep.mubr.f32.mxu0 0.0
      %4179 = vmatmul.mubr.f32.gmra.mxu0 %v4101
      %v4180 = vpop.f32.mrf.mxu0
      %v4181 = vadd.f32 %v4080, %v4180
      %v4182 = vpop.f32.mrf.mxu0
      %4183 = vmatprep.mubr.f32.mxu0 0.0
      %4184 = vmatmul.mubr.f32.gmra.mxu0 %v4104
      %v4185 = vpop.f32.mrf.mxu0
      %v4186 = vadd.f32 %v4080, %v4185
      %v4187 = vpop.f32.mrf.mxu0
      %4188 = vmatprep.mubr.f32.mxu0 0.0
      %4189 = vmatmul.mubr.f32.gmra.mxu0 %v4107
      %v4190 = vpop.f32.mrf.mxu0
      %v4191 = vadd.f32 %v4080, %v4190
      %v4192 = vpop.f32.mrf.mxu0
      %4193 = vdwg.mxu0
      %v4194 = vadd.f32 %v4176, %v2828
      %v4195 = vadd.f32 %v4181, %v2829
      %v4196 = vadd.f32 %v4186, %v2830
      %v4197 = vadd.f32 %v4191, %v2831
      %v4198 = vsel %vm285, %v4194, 0.0
      %4199 = vadd.xlane.f32.xlu0 %v4198
      %v4200 = vpop.xlane.xlu0 %4199
      %v4201 = vsel %vm285, %v4195, 0.0
      %4202 = vadd.xlane.f32.xlu0 %v4201
      %v4203 = vpop.xlane.xlu0 %4202
      %v4204 = vsel %vm285, %v4196, 0.0
      %4205 = vadd.xlane.f32.xlu0 %v4204
      %v4206 = vpop.xlane.xlu0 %4205
      %v4207 = vsel %vm1036, %v4197, 0.0
      %4208 = vadd.xlane.f32.xlu0 %v4207
      %v4209 = vpop.xlane.xlu0 %4208
      %v4210 = vmul.f32 %v4200, %v998
      %v4211 = vmul.f32 %v4203, %v998
      %v4212 = vmul.f32 %v4206, %v998
      %v4213 = vmul.f32 %v4209, %v998
      %v4214 = vsub.f32 %v4194, %v4210
      %v4215 = vsub.f32 %v4195, %v4211
      %v4216 = vsub.f32 %v4196, %v4212
      %v4217 = vsub.f32 %v4197, %v4213
      %v4218 = vmul.f32 %v4214, %v4214
      %v4219 = vmul.f32 %v4215, %v4215
      %v4220 = vmul.f32 %v4216, %v4216
      %v4221 = vmul.f32 %v4217, %v4217
      %v4222 = vsel %vm285, %v4218, 0.0
      %4223 = vadd.xlane.f32.xlu0 %v4222
      %v4224 = vpop.xlane.xlu0 %4223
      %v4225 = vsel %vm285, %v4219, 0.0
      %4226 = vadd.xlane.f32.xlu0 %v4225
      %v4227 = vpop.xlane.xlu0 %4226
      %v4228 = vsel %vm285, %v4220, 0.0
      %4229 = vadd.xlane.f32.xlu0 %v4228
      %v4230 = vpop.xlane.xlu0 %4229
      %v4231 = vsel %vm1036, %v4221, 0.0
      %4232 = vadd.xlane.f32.xlu0 %v4231
      %v4233 = vpop.xlane.xlu0 %4232
      %v4234 = vmul.f32 %v4224, %v998
      %v4235 = vmul.f32 %v4227, %v998
      %v4236 = vmul.f32 %v4230, %v998
      %v4237 = vmul.f32 %v4233, %v998
      %v4238 = vadd.f32 %v4234, 1e-06
      %v4239 = vadd.f32 %v4235, 1e-06
      %v4240 = vadd.f32 %v4236, 1e-06
      %v4241 = vadd.f32 %v4237, 1e-06
      %v4242 = vrsqrt.pop %v4238
      %v4243 = vrsqrt.pop %v4239
      %v4244 = vrsqrt.pop %v4240
      %v4245 = vrsqrt.pop %v4241
      %v4246 = vmul.f32 %v4214, %v4242
      %v4247 = vmul.f32 %v4215, %v4243
      %v4248 = vmul.f32 %v4216, %v4244
      %v4249 = vmul.f32 %v4217, %v4245
      %v4250 = vlaneseq
      %v4251 = vshrl.u32 %v4250, 7
      %v4252 = vsub.s32 0, %v4251
      %v4253 = vrot.slane %v183, %v4252
      %v4254 = vmul.f32 %v4246, %v4253
      %v4255 = vmul.f32 %v4247, %v4253
      %v4256 = vmul.f32 %v4248, %v4253
      %v4257 = vmul.f32 %v4249, %v4253
      %v4258 = vlaneseq
      %v4259 = vshrl.u32 %v4258, 7
      %v4260 = vsub.s32 0, %v4259
      %v4261 = vrot.slane %v184, %v4260
      %v4262 = vadd.f32 %v4254, %v4261
      %v4263 = vadd.f32 %v4255, %v4261
      %v4264 = vadd.f32 %v4256, %v4261
      %v4265 = vadd.f32 %v4257, %v4261
      %v4266 = vlaneseq
      %v4267 = vshrl.u32 %v4266, 7
      %v4268 = vsub.s32 0, %v4267
      %v4269 = vrot.slane %v185, %v4268
      %4274 = vrot.lane.b32.xlu0 %v163, 64
      %v4275 = vpop.permute.xlu0 %4274
      %4276 = vrot.lane.b32.xlu0 %v164, 64
      %v4277 = vpop.permute.xlu0 %4276
      %4278 = vrot.lane.b32.xlu0 %v165, 64
      %v4279 = vpop.permute.xlu0 %4278
      %4280 = vrot.lane.b32.xlu0 %v166, 64
      %v4281 = vpop.permute.xlu0 %4280
      %v4287 = vsel %vm285, %v4262, 0
      %v4290 = vsel %vm285, %v4263, 0
      %v4293 = vsel %vm285, %v4264, 0
      %v4296 = vsel %vm285, %v4265, 0
      %4298 = vmatprep.subr.mxu0 0.0
      %4299 = vmatpush1.msra.mxu0 0.0
      %4300 = vmatprep.subr.mxu0 0.0
      %4301 = vmatpush1.msra.mxu0 0.0
      %4302 = vmatprep.subr.mxu0 0.0
      %4303 = vmatpush1.msra.mxu0 0.0
      %4304 = vmatprep.subr.mxu0 0.0
      %4305 = vmatpush1.msra.mxu0 0.0
      %4306 = vmatprep.subr.mxu0 0.0
      %4307 = vmatpush1.msra.mxu0 0.0
      %4308 = vmatprep.subr.mxu0 0.0
      %4309 = vmatpush1.msra.mxu0 0.0
      %4310 = vmatprep.subr.mxu0 0.0
      %4311 = vmatpush1.msra.mxu0 0.0
      %4312 = vmatprep.subr.mxu0 0.0
      %4313 = vmatpush1.msra.mxu0 0.0
      %4314 = vmatprep.subr.mxu0 0.0
      %4315 = vmatpush1.msra.mxu0 0.0
      %4316 = vmatprep.subr.mxu0 0.0
      %4317 = vmatpush1.msra.mxu0 0.0
      %4318 = vmatprep.subr.mxu0 0.0
      %4319 = vmatpush1.msra.mxu0 0.0
      %4320 = vmatprep.subr.mxu0 0.0
      %4321 = vmatpush1.msra.mxu0 0.0
      %4322 = vmatprep.subr.mxu0 0.0
      %4323 = vmatpush1.msra.mxu0 %v4281
      %4324 = vmatprep.subr.mxu0 0.0
      %4325 = vmatpush1.msra.mxu0 %v4279
      %4326 = vmatprep.subr.mxu0 0.0
      %4327 = vmatpush1.msra.mxu0 %v4277
      %4328 = vmatprep.subr.mxu0 0.0
      %4329 = vmatpush1.msra.mxu0 %v4275
      %4330 = vmatprep.subr.mxu0 0.0
      %4331 = vmatpush2.msra.mxu0 0.0
      %4332 = vmatprep.subr.mxu0 0.0
      %4333 = vmatpush2.msra.mxu0 0.0
      %4334 = vmatprep.subr.mxu0 0.0
      %4335 = vmatpush2.msra.mxu0 0.0
      %4336 = vmatprep.subr.mxu0 0.0
      %4337 = vmatpush2.msra.mxu0 0.0
      %4338 = vmatprep.subr.mxu0 0.0
      %4339 = vmatpush2.msra.mxu0 0.0
      %4340 = vmatprep.subr.mxu0 0.0
      %4341 = vmatpush2.msra.mxu0 0.0
      %4342 = vmatprep.subr.mxu0 0.0
      %4343 = vmatpush2.msra.mxu0 0.0
      %4344 = vmatprep.subr.mxu0 0.0
      %4345 = vmatpush2.msra.mxu0 0.0
      %4346 = vmatprep.subr.mxu0 0.0
      %4347 = vmatpush2.msra.mxu0 0.0
      %4348 = vmatprep.subr.mxu0 0.0
      %4349 = vmatpush2.msra.mxu0 0.0
      %4350 = vmatprep.subr.mxu0 0.0
      %4351 = vmatpush2.msra.mxu0 0.0
      %4352 = vmatprep.subr.mxu0 0.0
      %4353 = vmatpush2.msra.mxu0 0.0
      %4354 = vmatprep.subr.mxu0 0.0
      %4355 = vmatpush2.msra.mxu0 0.0
      %4356 = vmatprep.subr.mxu0 0.0
      %4357 = vmatpush2.msra.mxu0 0.0
      %4358 = vmatprep.subr.mxu0 0.0
      %4359 = vmatpush2.msra.mxu0 0.0
      %4360 = vmatprep.subr.mxu0 0.0
      %4361 = vmatpush2.msra.mxu0 0.0
      %4362 = vmatprep.mubr.f32.mxu0 0.0
      %4363 = vmatmul.mubr.f32.gmra.mxu0 %v4287
      %v4364 = vpop.f32.mrf.mxu0
      %v4365 = vadd.f32 %v4269, %v4364
      %v4366 = vpop.f32.mrf.mxu0
      %4367 = vmatprep.mubr.f32.mxu0 0.0
      %4368 = vmatmul.mubr.f32.gmra.mxu0 %v4290
      %v4369 = vpop.f32.mrf.mxu0
      %v4370 = vadd.f32 %v4269, %v4369
      %v4371 = vpop.f32.mrf.mxu0
      %4372 = vmatprep.mubr.f32.mxu0 0.0
      %4373 = vmatmul.mubr.f32.gmra.mxu0 %v4293
      %v4374 = vpop.f32.mrf.mxu0
      %v4375 = vadd.f32 %v4269, %v4374
      %v4376 = vpop.f32.mrf.mxu0
      %4377 = vmatprep.mubr.f32.mxu0 0.0
      %4378 = vmatmul.mubr.f32.gmra.mxu0 %v4296
      %v4379 = vpop.f32.mrf.mxu0
      %v4380 = vadd.f32 %v4269, %v4379
      %v4381 = vpop.f32.mrf.mxu0
      %4382 = vdwg.mxu0
      %v4383 = vmul.f32 %v4365, 0.5
      %v4384 = vmul.f32 %v4370, 0.5
      %v4385 = vmul.f32 %v4375, 0.5
      %v4386 = vmul.f32 %v4380, 0.5
      %v4387 = vmul.f32 %v4365, 0.044715
      %v4388 = vmul.f32 %v4370, 0.044715
      %v4389 = vmul.f32 %v4375, 0.044715
      %v4390 = vmul.f32 %v4380, 0.044715
      %v4391 = vmul.f32 %v4387, %v4365
      %v4392 = vmul.f32 %v4388, %v4370
      %v4393 = vmul.f32 %v4389, %v4375
      %v4394 = vmul.f32 %v4390, %v4380
      %v4395 = vmul.f32 %v4391, %v4365
      %v4396 = vmul.f32 %v4392, %v4370
      %v4397 = vmul.f32 %v4393, %v4375
      %v4398 = vmul.f32 %v4394, %v4380
      %v4399 = vadd.f32 %v4365, %v4395
      %v4400 = vadd.f32 %v4370, %v4396
      %v4401 = vadd.f32 %v4375, %v4397
      %v4402 = vadd.f32 %v4380, %v4398
      %v4403 = vmul.f32 %v4399, 0.7978846
      %v4404 = vmul.f32 %v4400, 0.7978846
      %v4405 = vmul.f32 %v4401, 0.7978846
      %v4406 = vmul.f32 %v4402, 0.7978846
      %v4407 = vtanh.pop %v4403
      %v4408 = vtanh.pop %v4404
      %v4409 = vtanh.pop %v4405
      %v4410 = vtanh.pop %v4406
      %v4411 = vadd.f32 %v4407, 1.0
      %v4412 = vadd.f32 %v4408, 1.0
      %v4413 = vadd.f32 %v4409, 1.0
      %v4414 = vadd.f32 %v4410, 1.0
      %v4415 = vmul.f32 %v4383, %v4411
      %v4416 = vmul.f32 %v4384, %v4412
      %v4417 = vmul.f32 %v4385, %v4413
      %v4418 = vmul.f32 %v4386, %v4414
      %v4419 = vlaneseq
      %v4420 = vshrl.u32 %v4419, 7
      %v4421 = vsub.s32 0, %v4420
      %v4422 = vrot.slane %v186, %v4421
      %4423 = vrot.lane.b32.xlu0 %v167, 64
      %v4424 = vpop.permute.xlu0 %4423
      %4425 = vrot.lane.b32.xlu0 %v168, 64
      %v4426 = vpop.permute.xlu0 %4425
      %4427 = vrot.lane.b32.xlu0 %v169, 64
      %v4428 = vpop.permute.xlu0 %4427
      %4429 = vrot.lane.b32.xlu0 %v170, 64
      %v4430 = vpop.permute.xlu0 %4429
      %v4432 = vsel %vm2650, %v4415, 0
      %v4435 = vsel %vm2650, %v4416, 0
      %v4438 = vsel %vm2650, %v4417, 0
      %v4441 = vsel %vm2650, %v4418, 0
      %v4443 = vsel %vm2650, %v4424, 0
      %v4445 = vsel %vm2650, %v4426, 0
      %v4447 = vsel %vm2650, %v4428, 0
      %v4449 = vsel %vm2650, %v4430, 0
      %4451 = vmatprep.subr.mxu0 0.0
      %4452 = vmatpush1.xpose.msra.mxu0 0.0
      %4453 = vmatprep.subr.mxu0 0.0
      %4454 = vmatpush1.xpose.msra.mxu0 0.0
      %4455 = vmatprep.subr.mxu0 0.0
      %4456 = vmatpush1.xpose.msra.mxu0 0.0
      %4457 = vmatprep.subr.mxu0 0.0
      %4458 = vmatpush1.xpose.msra.mxu0 0.0
      %4459 = vmatprep.subr.mxu0 0.0
      %4460 = vmatpush1.xpose.msra.mxu0 0.0
      %4461 = vmatprep.subr.mxu0 0.0
      %4462 = vmatpush1.xpose.msra.mxu0 0.0
      %4463 = vmatprep.subr.mxu0 0.0
      %4464 = vmatpush1.xpose.msra.mxu0 0.0
      %4465 = vmatprep.subr.mxu0 0.0
      %4466 = vmatpush1.xpose.msra.mxu0 0.0
      %4467 = vmatprep.subr.mxu0 0.0
      %4468 = vmatpush1.xpose.msra.mxu0 0.0
      %4469 = vmatprep.subr.mxu0 0.0
      %4470 = vmatpush1.xpose.msra.mxu0 0.0
      %4471 = vmatprep.subr.mxu0 0.0
      %4472 = vmatpush1.xpose.msra.mxu0 0.0
      %4473 = vmatprep.subr.mxu0 0.0
      %4474 = vmatpush1.xpose.msra.mxu0 0.0
      %4475 = vmatprep.subr.mxu0 0.0
      %4476 = vmatpush1.xpose.msra.mxu0 %v4449
      %4477 = vmatprep.subr.mxu0 0.0
      %4478 = vmatpush1.xpose.msra.mxu0 %v4447
      %4479 = vmatprep.subr.mxu0 0.0
      %4480 = vmatpush1.xpose.msra.mxu0 %v4445
      %4481 = vmatprep.subr.mxu0 0.0
      %4482 = vmatpush1.xpose.msra.mxu0 %v4443
      %4483 = vmatprep.subr.mxu0 0.0
      %4484 = vmatpush2.xpose.msra.mxu0 0.0
      %4485 = vmatprep.subr.mxu0 0.0
      %4486 = vmatpush2.xpose.msra.mxu0 0.0
      %4487 = vmatprep.subr.mxu0 0.0
      %4488 = vmatpush2.xpose.msra.mxu0 0.0
      %4489 = vmatprep.subr.mxu0 0.0
      %4490 = vmatpush2.xpose.msra.mxu0 0.0
      %4491 = vmatprep.subr.mxu0 0.0
      %4492 = vmatpush2.xpose.msra.mxu0 0.0
      %4493 = vmatprep.subr.mxu0 0.0
      %4494 = vmatpush2.xpose.msra.mxu0 0.0
      %4495 = vmatprep.subr.mxu0 0.0
      %4496 = vmatpush2.xpose.msra.mxu0 0.0
      %4497 = vmatprep.subr.mxu0 0.0
      %4498 = vmatpush2.xpose.msra.mxu0 0.0
      %4499 = vmatprep.subr.mxu0 0.0
      %4500 = vmatpush2.xpose.msra.mxu0 0.0
      %4501 = vmatprep.subr.mxu0 0.0
      %4502 = vmatpush2.xpose.msra.mxu0 0.0
      %4503 = vmatprep.subr.mxu0 0.0
      %4504 = vmatpush2.xpose.msra.mxu0 0.0
      %4505 = vmatprep.subr.mxu0 0.0
      %4506 = vmatpush2.xpose.msra.mxu0 0.0
      %4507 = vmatprep.subr.mxu0 0.0
      %4508 = vmatpush2.xpose.msra.mxu0 0.0
      %4509 = vmatprep.subr.mxu0 0.0
      %4510 = vmatpush2.xpose.msra.mxu0 0.0
      %4511 = vmatprep.subr.mxu0 0.0
      %4512 = vmatpush2.xpose.msra.mxu0 0.0
      %4513 = vmatprep.subr.mxu0 0.0
      %4514 = vmatpush2.xpose.msra.mxu0 0.0
      %4515 = vmatprep.mubr.f32.mxu0 0.0
      %4516 = vmatmul.mubr.f32.gmra.mxu0 %v4432
      %v4517 = vpop.f32.mrf.mxu0
      %v4518 = vpop.f32.mrf.mxu0
      %4519 = vmatprep.mubr.f32.mxu0 0.0
      %4520 = vmatmul.mubr.f32.gmra.mxu0 %v4435
      %v4521 = vpop.f32.mrf.mxu0
      %v4522 = vadd.f32 %v4422, %v4521
      %v4523 = vpop.f32.mrf.mxu0
      %4524 = vmatprep.mubr.f32.mxu0 0.0
      %4525 = vmatmul.mubr.f32.gmra.mxu0 %v4438
      %v4526 = vpop.f32.mrf.mxu0
      %v4527 = vadd.f32 %v4422, %v4526
      %v4528 = vpop.f32.mrf.mxu0
      %4529 = vmatprep.mubr.f32.mxu0 0.0
      %4530 = vmatmul.mubr.f32.gmra.mxu0 %v4441
      %v4531 = vpop.f32.mrf.mxu0
      %v4532 = vadd.f32 %v4422, %v4531
      %v4533 = vpop.f32.mrf.mxu0
      %4534 = vdwg.mxu0
      %v4535 = vadd.f32 %v4522, %v4263
      %v4536 = vadd.f32 %v4527, %v4264
      %v4537 = vadd.f32 %v4532, %v4265
      %v4538 = vsel %vm285, %v4535, 0.0
      %4539 = vadd.xlane.f32.xlu0 %v4538
      %v4540 = vpop.xlane.xlu0 %4539
      %v4541 = vsel %vm285, %v4536, 0.0
      %4542 = vadd.xlane.f32.xlu0 %v4541
      %v4543 = vpop.xlane.xlu0 %4542
      %v4544 = vsel %vm1036, %v4537, 0.0
      %4545 = vadd.xlane.f32.xlu0 %v4544
      %v4546 = vpop.xlane.xlu0 %4545
      %v4547 = vmul.f32 %v4540, %v998
      %v4548 = vmul.f32 %v4543, %v998
      %v4549 = vmul.f32 %v4546, %v998
      %v4550 = vsub.f32 %v4535, %v4547
      %v4551 = vsub.f32 %v4536, %v4548
      %v4552 = vsub.f32 %v4537, %v4549
      %v4553 = vmul.f32 %v4550, %v4550
      %v4554 = vmul.f32 %v4551, %v4551
      %v4555 = vmul.f32 %v4552, %v4552
      %v4556 = vsel %vm285, %v4553, 0.0
      %4557 = vadd.xlane.f32.xlu0 %v4556
      %v4558 = vpop.xlane.xlu0 %4557
      %v4559 = vsel %vm285, %v4554, 0.0
      %4560 = vadd.xlane.f32.xlu0 %v4559
      %v4561 = vpop.xlane.xlu0 %4560
      %v4562 = vsel %vm1036, %v4555, 0.0
      %4563 = vadd.xlane.f32.xlu0 %v4562
      %v4564 = vpop.xlane.xlu0 %4563
      %v4565 = vmul.f32 %v4558, %v998
      %v4566 = vmul.f32 %v4561, %v998
      %v4567 = vmul.f32 %v4564, %v998
      %v4568 = vadd.f32 %v4565, 1e-06
      %v4569 = vadd.f32 %v4566, 1e-06
      %v4570 = vadd.f32 %v4567, 1e-06
      %v4571 = vrsqrt.pop %v4568
      %v4572 = vrsqrt.pop %v4569
      %v4573 = vrsqrt.pop %v4570
      %v4574 = vmul.f32 %v4550, %v4571
      %v4575 = vmul.f32 %v4551, %v4572
      %v4576 = vmul.f32 %v4552, %v4573
      %v4577 = vlaneseq
      %v4578 = vshrl.u32 %v4577, 7
      %v4579 = vsub.s32 0, %v4578
      %v4580 = vrot.slane %v187, %v4579
      %v4581 = vmul.f32 %v4574, %v4580
      %v4582 = vmul.f32 %v4575, %v4580
      %v4583 = vmul.f32 %v4576, %v4580
      %v4584 = vlaneseq
      %v4585 = vshrl.u32 %v4584, 7
      %v4586 = vsub.s32 0, %v4585
      %v4587 = vrot.slane %v188, %v4586
      %v4588 = vadd.f32 %v4581, %v4587
      %v4589 = vadd.f32 %v4582, %v4587
      %v4590 = vadd.f32 %v4583, %v4587
      %4592 = vrot.lane.b32.xlu0 %v4589, 32
      %v4593 = vpop.permute.xlu0 %4592
      %v4596 = vrot.slane %v4590, 4
      %4597 = vrot.lane.b32.xlu0 %v4596, 64
      %v4598 = vpop.permute.xlu0 %4597
      %v4600 = vrot.slane %v4590, 6
      %4601 = vrot.lane.b32.xlu0 %v4600, 96
      %v4602 = vpop.permute.xlu0 %4601
      %v4604 = vsel %vm285, %v4588, %v4593
      %v4605 = vsel %vm2650, %v4604, %v4598
      %vm4606 = vcmask 785408
      %v4607 = vsel %vm4606, %v4605, %v4602
      %v4609 = vrot.slane %v4607, 7
      %4611 = vmatprep.subr.mxu0 0.0
      %4612 = vmatpush1.xpose.msra.mxu0 0.0
      %4613 = vmatprep.subr.mxu0 0.0
      %4614 = vmatpush1.xpose.msra.mxu0 0.0
      %4615 = vmatprep.subr.mxu0 0.0
      %4616 = vmatpush1.xpose.msra.mxu0 0.0
      %4617 = vmatprep.subr.mxu0 0.0
      %4618 = vmatpush1.xpose.msra.mxu0 0.0
      %4619 = vmatprep.subr.mxu0 0.0
      %4620 = vmatpush1.xpose.msra.mxu0 0.0
      %4621 = vmatprep.subr.mxu0 0.0
      %4622 = vmatpush1.xpose.msra.mxu0 0.0
      %4623 = vmatprep.subr.mxu0 0.0
      %4624 = vmatpush1.xpose.msra.mxu0 0.0
      %4625 = vmatprep.subr.mxu0 0.0
      %4626 = vmatpush1.xpose.msra.mxu0 0.0
      %4627 = vmatprep.subr.mxu0 0.0
      %4628 = vmatpush1.xpose.msra.mxu0 0.0
      %4629 = vmatprep.subr.mxu0 0.0
      %4630 = vmatpush1.xpose.msra.mxu0 0.0
      %4631 = vmatprep.subr.mxu0 0.0
      %4632 = vmatpush1.xpose.msra.mxu0 0.0
      %4633 = vmatprep.subr.mxu0 0.0
      %4634 = vmatpush1.xpose.msra.mxu0 0.0
      %4635 = vmatprep.subr.mxu0 0.0
      %4636 = vmatpush1.xpose.msra.mxu0 0.0
      %4637 = vmatprep.subr.mxu0 0.0
      %4638 = vmatpush1.xpose.msra.mxu0 0.0
      %4639 = vmatprep.subr.mxu0 0.0
      %4640 = vmatpush1.xpose.msra.mxu0 %v158
      %4641 = vmatprep.subr.mxu0 0.0
      %4642 = vmatpush1.xpose.msra.mxu0 %v157
      %4643 = vmatprep.subr.mxu0 0.0
      %4644 = vmatpush2.xpose.msra.mxu0 0.0
      %4645 = vmatprep.subr.mxu0 0.0
      %4646 = vmatpush2.xpose.msra.mxu0 0.0
      %4647 = vmatprep.subr.mxu0 0.0
      %4648 = vmatpush2.xpose.msra.mxu0 0.0
      %4649 = vmatprep.subr.mxu0 0.0
      %4650 = vmatpush2.xpose.msra.mxu0 0.0
      %4651 = vmatprep.subr.mxu0 0.0
      %4652 = vmatpush2.xpose.msra.mxu0 0.0
      %4653 = vmatprep.subr.mxu0 0.0
      %4654 = vmatpush2.xpose.msra.mxu0 0.0
      %4655 = vmatprep.subr.mxu0 0.0
      %4656 = vmatpush2.xpose.msra.mxu0 0.0
      %4657 = vmatprep.subr.mxu0 0.0
      %4658 = vmatpush2.xpose.msra.mxu0 0.0
      %4659 = vmatprep.subr.mxu0 0.0
      %4660 = vmatpush2.xpose.msra.mxu0 0.0
      %4661 = vmatprep.subr.mxu0 0.0
      %4662 = vmatpush2.xpose.msra.mxu0 0.0
      %4663 = vmatprep.subr.mxu0 0.0
      %4664 = vmatpush2.xpose.msra.mxu0 0.0
      %4665 = vmatprep.subr.mxu0 0.0
      %4666 = vmatpush2.xpose.msra.mxu0 0.0
      %4667 = vmatprep.subr.mxu0 0.0
      %4668 = vmatpush2.xpose.msra.mxu0 0.0
      %4669 = vmatprep.subr.mxu0 0.0
      %4670 = vmatpush2.xpose.msra.mxu0 0.0
      %4671 = vmatprep.subr.mxu0 0.0
      %4672 = vmatpush2.xpose.msra.mxu0 0.0
      %4673 = vmatprep.subr.mxu0 0.0
      %4674 = vmatpush2.xpose.msra.mxu0 0.0
      %4675 = vmatprep.mubr.f32.mxu0 0.0
      %4676 = vmatmul.mubr.f32.gmra.mxu0 %v4609
      %v4677 = vpop.f32.mrf.mxu0
      %v4678 = vadd.f32 0.0, %v4677
      %v4679 = vpop.f32.mrf.mxu0
      %4680 = vdwg.mxu0
      %vm4681 = vcmask 122880
      %4682 = vst.msk [vmem:[%s139] sm:$0x1] %vm4681, %v4678
      %p4683 = scmp.lt.s32.totalorder %s13, 1
      %s4684 = scalar_select %p4683, %s13, 1
      %s4685 = scalar_lea.vmem %s2, %s4684
      // Predicated region
      $region29: #{pyraformer_fc_forward.1} parent=27 // pred_check
        %p4686 = pneg %p78
      $region30: #{pyraformer_fc_forward.1} parent=27 // pred_check_branch
        %4688 = sbr.rel (%p4686) target = $region32
      $region31: #{pyraformer_fc_forward.1} parent=27 // pred_region
        _
      $region32: #{pyraformer_fc_forward.1} parent=27 // pred_fallthru
        _
    $region28: #{pyraformer_fc_forward.1} parent=5 // pred_fallthru
      _
    %p4689 = scmp.le.s32.totalorder 2, %s8
    // Predicated region
    $region33: #{pyraformer_fc_forward.1} parent=5 // pred_check
      %p4690 = pneg %p4689
    $region34: #{pyraformer_fc_forward.1} parent=5 // pred_check_branch
      %4692 = sbr.rel (%p4690) target = $region36
    $region35: #{pyraformer_fc_forward.1} parent=5 // pred_region
      %s4693 = ssub.s32 %s8, 2
      // Predicated region
      $region37: #{pyraformer_fc_forward.1} parent=35 // pred_check
        %p4694 = pneg %p84
      $region38: #{pyraformer_fc_forward.1} parent=35 // pred_check_branch
        %4696 = sbr.rel (%p4694) target = $region40
      $region39: #{pyraformer_fc_forward.1} parent=35 // pred_region
        %p4697 = scmp.lt.s32.totalorder %s14, 1
        %s4698 = scalar_select %p4697, %s14, 1
        %s4699 = scalar_lea.vmem %s2, %s4698
      $region40: #{pyraformer_fc_forward.1} parent=35 // pred_fallthru
        _
    $region36: #{pyraformer_fc_forward.1} parent=5 // pred_fallthru
      _
  $region6: #{pyraformer_fc_forward.1} parent=0 // loop_footer
    %s12 = sadd.s32 1, %s8
  $region7: #{pyraformer_fc_forward.1} parent=0 // loop_footer_branch
    %7 = sbr.rel target = $region3
  $region8: #{pyraformer_fc_forward.1} parent=0 // loop_exit
    _

</llo_original>
